<compile_context>
chip_gen: v7x
topology: tpu7x:2x2x1
jax: 0.10.0
libtpu: 0.0.40
codegen_flags: <defaults>
</compile_context>

<pallas_src>
import math

import jax
import jax.numpy as jnp
import numpy as np
from jax.experimental import pallas as pl
from jax.experimental.pallas import tpu as pltpu

# ---------------- configuration (small, consistent with the module defaults) ----------------
B            = 2                       # batch
NUM_FEATURES = 3                       # numeric columns
CAT_SIZES    = (5, 7)                  # categorical vocab sizes
CAT_EMB_DIMS = (4, 6)                  # per-column embedding dims
NUM_CAT      = len(CAT_SIZES)
D_MODEL      = 32
NHEAD        = 4
NUM_LAYERS   = 2
D_FF         = 4 * D_MODEL
T            = NUM_FEATURES + NUM_CAT  # tokens per row
HD           = D_MODEL // NHEAD        # head dim
EMAX         = max(CAT_EMB_DIMS)       # padded embedding width
VMAX         = max(CAT_SIZES)          # padded vocab size
LN_EPS       = 1e-5
F32          = jnp.float32


def _layer_norm(x, w, b):
    mu  = jnp.mean(x, axis=-1, keepdims=True)
    xc  = x - mu
    var = jnp.mean(xc * xc, axis=-1, keepdims=True)
    return xc * jax.lax.rsqrt(var + LN_EPS) * w + b


# =====================================================================================
# Fused kernel: gather + embed + transformer encoder + mean pool + both output heads
# =====================================================================================
def fused_kernel(xcat_ref,                                        # SMEM (B, C) int32 (scalar prefetch)
                 xnum_ref, wnum_ref, bnum_ref,                    # numeric embedding
                 cattab_ref, wcat_ref, bcat_ref,                  # categorical embedding (padded)
                 colemb_ref,
                 wqkv_ref, bqkv_ref, wo_ref, bo_ref,
                 ln1w_ref, ln1b_ref, w1_ref, b1_ref, w2_ref, b2_ref,
                 ln2w_ref, ln2b_ref,
                 wh_ref, bh_ref,
                 out_ref):
    xnum   = xnum_ref[...]                                        # (B, F)
    wnum   = wnum_ref[...]                                        # (F, D)
    bnum   = bnum_ref[...]                                        # (F, D)
    wcat   = wcat_ref[...]                                        # (C, EMAX, D)
    bcat   = bcat_ref[...]                                        # (C, D)
    colemb = colemb_ref[...]                                      # (T, D)

    # ---- embedding: assemble the full (B*T, D) token slab in registers (no VMEM stores) ----
    num_tok = xnum[:, :, None] * wnum[None, :, :] + bnum[None, :, :]       # (B, F, D)
    batch_rows = []
    for b in range(B):
        rows = [num_tok[b]]                                                # (F, D)
        for c in range(NUM_CAT):
            idx  = xcat_ref[b, c]                                          # scalar index from SMEM
            erow = cattab_ref[idx][c:c + 1, :]                             # (1, EMAX) in-kernel gather
            tok  = jnp.dot(erow, wcat[c], preferred_element_type=F32) + bcat[c:c + 1, :]
            rows.append(tok)                                               # (1, D)
        batch_rows.append(jnp.concatenate(rows, axis=0) + colemb)          # (T, D)
    x = jnp.concatenate(batch_rows, axis=0)                                # (B*T, D)

    # ---- encoder layers (post-LN, relu FFN) ----
    for l in range(NUM_LAYERS):
        # fused QKV projection; 1/sqrt(HD) scale is pre-folded into the Q weights/bias
        qkv = jnp.dot(x, wqkv_ref[l], preferred_element_type=F32) + bqkv_ref[l]   # (B*T, 3D)
        q = qkv[:, 0:D_MODEL]
        k = qkv[:, D_MODEL:2 * D_MODEL]
        v = qkv[:, 2 * D_MODEL:3 * D_MODEL]

        scores, vheads = [], []
        for b in range(B):
            qb = q[b * T:(b + 1) * T, :]
            kb = k[b * T:(b + 1) * T, :]
            vb = v[b * T:(b + 1) * T, :]
            for h in range(NHEAD):
                qh = qb[:, h * HD:(h + 1) * HD]
                kh = kb[:, h * HD:(h + 1) * HD]
                scores.append(jax.lax.dot_general(
                    qh, kh, (((1,), (1,)), ((), ())),
                    preferred_element_type=F32))                           # (T, T)
                vheads.append(vb[:, h * HD:(h + 1) * HD])                  # (T, HD)

        # one batched softmax over all B*NHEAD score tiles (single max/exp/sum/divide)
        s_all = jnp.concatenate(scores, axis=0)                            # (B*H*T, T)
        s_all = s_all - jnp.max(s_all, axis=-1, keepdims=True)
        e_all = jnp.exp(s_all)
        p_all = e_all / jnp.sum(e_all, axis=-1, keepdims=True)

        # per-head PV matmuls, heads concatenated along lanes, batches along sublanes (registers only)
        out_rows = []
        for b in range(B):
            heads = []
            for h in range(NHEAD):
                i = b * NHEAD + h
                p = p_all[i * T:(i + 1) * T, :]                            # (T, T)
                heads.append(jnp.dot(p, vheads[i], preferred_element_type=F32))   # (T, HD)
            out_rows.append(jnp.concatenate(heads, axis=1))                # (T, D)
        attn = jnp.concatenate(out_rows, axis=0)                           # (B*T, D)

        attn = jnp.dot(attn, wo_ref[l], preferred_element_type=F32) + bo_ref[l]
        x = _layer_norm(x + attn, ln1w_ref[l], ln1b_ref[l])

        h1 = jnp.maximum(jnp.dot(x, w1_ref[l], preferred_element_type=F32) + b1_ref[l], 0.0)
        ff = jnp.dot(h1, w2_ref[l], preferred_element_type=F32) + b2_ref[l]
        x = _layer_norm(x + ff, ln2w_ref[l], ln2b_ref[l])

    # ---- mean pooling over tokens (in-kernel reduce) + fused two output heads ----
    pooled = jnp.concatenate(
        [jnp.mean(x[b * T:(b + 1) * T, :], axis=0, keepdims=True) for b in range(B)],
        axis=0)                                                            # (B, D)
    out_ref[...] = (jnp.dot(pooled, wh_ref[...], preferred_element_type=F32)
                    + bh_ref[...])                                         # (B, 2)


# =====================================================================================
# Wrapper: single pallas_call, x_cat goes through scalar prefetch into SMEM
# =====================================================================================
def _full_spec(shape):
    nd = len(shape)
    # index_map receives (grid_idx, xcat_prefetch_ref); whole array is one block
    return pl.BlockSpec(shape, lambda i, xc, _nd=nd: (0,) * _nd)


def table_transformer_forward(x_cat, x_num, kp):
    tensor_ins = (
        x_num, kp["w_num"], kp["b_num"],
        kp["cat_tab"], kp["w_cat"], kp["b_cat"],
        kp["col_emb"],
        kp["w_qkv"], kp["b_qkv"], kp["wo"], kp["bo"],
        kp["ln1w"], kp["ln1b"], kp["w1"], kp["b1"], kp["w2"], kp["b2"],
        kp["ln2w"], kp["ln2b"],
        kp["w_heads"], kp["b_heads"],
    )
    out = pl.pallas_call(
        fused_kernel,
        out_shape=jax.ShapeDtypeStruct((B, 2), F32),
        grid_spec=pltpu.PrefetchScalarGridSpec(
            num_scalar_prefetch=1,
            grid=(1,),
            in_specs=[_full_spec(a.shape) for a in tensor_ins],
            out_specs=_full_spec((B, 2)),
        ),
        compiler_params=pltpu.CompilerParams(dimension_semantics=("arbitrary",)),
    )(x_cat.astype(jnp.int32), *tensor_ins)
    return out[:, 0:1], out[:, 1:2]


# =====================================================================================
# Parameter init (logical, PyTorch-like) and packing into kernel layout
# =====================================================================================
def init_params(key):
    ks = iter(jax.random.split(key, 64))
    n = lambda shape, s=0.1: (s * jax.random.normal(next(ks), shape)).astype(F32)

    p = {}
    p["w_num"] = n((NUM_FEATURES, D_MODEL))                 # Linear(1, D) weight rows
    p["b_num"] = n((NUM_FEATURES, D_MODEL))
    p["cat_tables"] = [n((CAT_SIZES[c], CAT_EMB_DIMS[c]), 1.0) for c in range(NUM_CAT)]
    p["w_cat_list"] = [n((CAT_EMB_DIMS[c], D_MODEL)) for c in range(NUM_CAT)]
    p["b_cat"]   = n((NUM_CAT, D_MODEL))
    p["col_emb"] = n((T, D_MODEL), 1.0)

    p["wq"] = n((NUM_LAYERS, D_MODEL, D_MODEL)); p["bq"] = n((NUM_LAYERS, D_MODEL))
    p["wk"] = n((NUM_LAYERS, D_MODEL, D_MODEL)); p["bk"] = n((NUM_LAYERS, D_MODEL))
    p["wv"] = n((NUM_LAYERS, D_MODEL, D_MODEL)); p["bv"] = n((NUM_LAYERS, D_MODEL))
    p["wo"] = n((NUM_LAYERS, D_MODEL, D_MODEL)); p["bo"] = n((NUM_LAYERS, D_MODEL))
    p["w1"] = n((NUM_LAYERS, D_MODEL, D_FF));    p["b1"] = n((NUM_LAYERS, D_FF))
    p["w2"] = n((NUM_LAYERS, D_FF, D_MODEL));    p["b2"] = n((NUM_LAYERS, D_MODEL))
    p["ln1w"] = 1.0 + n((NUM_LAYERS, D_MODEL), 0.05); p["ln1b"] = n((NUM_LAYERS, D_MODEL), 0.05)
    p["ln2w"] = 1.0 + n((NUM_LAYERS, D_MODEL), 0.05); p["ln2b"] = n((NUM_LAYERS, D_MODEL), 0.05)

    p["w_heads"] = n((D_MODEL, 2))                          # both heads fused into one (D, 2)
    p["b_heads"] = n((2,))
    return p


def pack_params(p):
    scale = 1.0 / math.sqrt(HD)
    kp = {"w_num": p["w_num"], "b_num": p["b_num"]}

    # zero-padded categorical tables / projections so the kernel can gather + matmul uniformly
    cat_tab = np.zeros((VMAX, NUM_CAT, EMAX), np.float32)
    w_cat   = np.zeros((NUM_CAT, EMAX, D_MODEL), np.float32)
    for c in range(NUM_CAT):
        cat_tab[:CAT_SIZES[c], c, :CAT_EMB_DIMS[c]] = np.asarray(p["cat_tables"][c])
        w_cat[c, :CAT_EMB_DIMS[c], :] = np.asarray(p["w_cat_list"][c])
    kp["cat_tab"] = jnp.asarray(cat_tab)
    kp["w_cat"]   = jnp.asarray(w_cat)
    kp["b_cat"]   = p["b_cat"]
    kp["col_emb"] = p["col_emb"]

    # fused QKV weights with the 1/sqrt(HD) attention scale folded into the Q projection
    kp["w_qkv"] = jnp.concatenate([p["wq"] * scale, p["wk"], p["wv"]], axis=-1)          # (L, D, 3D)
    kp["b_qkv"] = jnp.concatenate([p["bq"] * scale, p["bk"], p["bv"]], axis=-1)[:, None, :]

    kp["wo"] = p["wo"];  kp["bo"] = p["bo"][:, None, :]
    kp["ln1w"] = p["ln1w"][:, None, :]; kp["ln1b"] = p["ln1b"][:, None, :]
    kp["w1"] = p["w1"]; kp["b1"] = p["b1"][:, None, :]
    kp["w2"] = p["w2"]; kp["b2"] = p["b2"][:, None, :]
    kp["ln2w"] = p["ln2w"][:, None, :]; kp["ln2b"] = p["ln2b"][:, None, :]
    kp["w_heads"] = p["w_heads"]; kp["b_heads"] = p["b_heads"].reshape(1, 2)
    return kp


# =====================================================================================
# Pure-JAX reference (mirrors PyTorch semantics, eval mode)
# =====================================================================================
def reference_forward(x_cat, x_num, p):
    num_tok = x_num[:, :, None] * p["w_num"][None] + p["b_num"][None]
    cat_toks = []
    for c in range(NUM_CAT):
        emb = jnp.take(p["cat_tables"][c], x_cat[:, c], axis=0)
        cat_toks.append(emb @ p["w_cat_list"][c] + p["b_cat"][c])
    cat_tok = jnp.stack(cat_toks, axis=1)
    x = jnp.concatenate([num_tok, cat_tok], axis=1) + p["col_emb"][None]

    for l in range(NUM_LAYERS):
        q = x @ p["wq"][l] + p["bq"][l]
        k = x @ p["wk"][l] + p["bk"][l]
        v = x @ p["wv"][l] + p["bv"][l]
        split = lambda t: t.reshape(B, T, NHEAD, HD).transpose(0, 2, 1, 3)
        qh, kh, vh = split(q), split(k), split(v)
        s = jnp.einsum("bhtd,bhsd->bhts", qh, kh) / math.sqrt(HD)
        pr = jax.nn.softmax(s, axis=-1)
        o = jnp.einsum("bhts,bhsd->bhtd", pr, vh).transpose(0, 2, 1, 3).reshape(B, T, D_MODEL)
        attn = o @ p["wo"][l] + p["bo"][l]
        x = _layer_norm(x + attn, p["ln1w"][l], p["ln1b"][l])
        ff = jnp.maximum(x @ p["w1"][l] + p["b1"][l], 0.0) @ p["w2"][l] + p["b2"][l]
        x = _layer_norm(x + ff, p["ln2w"][l], p["ln2b"][l])

    pooled = x.mean(axis=1)
    out = pooled @ p["w_heads"] + p["b_heads"]
    return out[:, 0:1], out[:, 1:2]


if __name__ == "__main__":
    key = jax.random.PRNGKey(0)
    k_params, k_num, *k_cat = jax.random.split(key, 2 + NUM_CAT)

    params  = init_params(k_params)
    kparams = pack_params(params)

    x_num = jax.random.normal(k_num, (B, NUM_FEATURES), F32)
    x_cat = jnp.stack(
        [jax.random.randint(k_cat[c], (B,), 0, CAT_SIZES[c]) for c in range(NUM_CAT)],
        axis=1).astype(jnp.int32)                                    # (B, NUM_CAT)

    out1, out2 = table_transformer_forward(x_cat, x_num, kparams)
    out1 = jax.block_until_ready(out1)
    out2 = jax.block_until_ready(out2)

    ref1, ref2 = reference_forward(x_cat, x_num, params)
    # tolerance kept loose only because the XLA reference uses default (reduced) f32 matmul
    # precision on TPU; the kernel math is bit-for-bit the same program otherwise.
    np.testing.assert_allclose(np.asarray(out1), np.asarray(ref1), rtol=1e-2, atol=1e-2)
    np.testing.assert_allclose(np.asarray(out2), np.asarray(ref2), rtol=1e-2, atol=1e-2)
    assert out1.shape == (B, 1) and out2.shape == (B, 1)

    print("KERNEL_OK")
</pallas_src>

<mosaic_0001>
module attributes {stable_mosaic.version = 11 : i64} {
  func.func @fused_kernel(%arg0: i32, %arg1: memref<2x2xi32, #tpu.memory_space<smem>>, %arg2: memref<2x3xf32, #tpu.memory_space<vmem>>, %arg3: memref<3x32xf32, #tpu.memory_space<vmem>>, %arg4: memref<3x32xf32, #tpu.memory_space<vmem>>, %arg5: memref<7x2x6xf32, #tpu.memory_space<vmem>>, %arg6: memref<2x6x32xf32, #tpu.memory_space<vmem>>, %arg7: memref<2x32xf32, #tpu.memory_space<vmem>>, %arg8: memref<5x32xf32, #tpu.memory_space<vmem>>, %arg9: memref<2x32x96xf32, #tpu.memory_space<vmem>>, %arg10: memref<2x1x96xf32, #tpu.memory_space<vmem>>, %arg11: memref<2x32x32xf32, #tpu.memory_space<vmem>>, %arg12: memref<2x1x32xf32, #tpu.memory_space<vmem>>, %arg13: memref<2x1x32xf32, #tpu.memory_space<vmem>>, %arg14: memref<2x1x32xf32, #tpu.memory_space<vmem>>, %arg15: memref<2x32x128xf32, #tpu.memory_space<vmem>>, %arg16: memref<2x1x128xf32, #tpu.memory_space<vmem>>, %arg17: memref<2x128x32xf32, #tpu.memory_space<vmem>>, %arg18: memref<2x1x32xf32, #tpu.memory_space<vmem>>, %arg19: memref<2x1x32xf32, #tpu.memory_space<vmem>>, %arg20: memref<2x1x32xf32, #tpu.memory_space<vmem>>, %arg21: memref<32x2xf32, #tpu.memory_space<vmem>>, %arg22: memref<1x2xf32, #tpu.memory_space<vmem>>, %arg23: memref<2x2xf32, #tpu.memory_space<vmem>>) attributes {dimension_semantics = [#tpu.dimension_semantics<arbitrary>], iteration_bounds = array<i64: 1>, scalar_prefetch = 1 : i64, scratch_operands = 0 : i64, tpu.core_type = #tpu.core_type<tc>, window_params = [{pipeline_mode = #tpu.pipeline_mode<synchronous>, transform_indices = @transform_0, window_bounds = array<i64: 2, 3>}, {pipeline_mode = #tpu.pipeline_mode<synchronous>, transform_indices = @transform_1, window_bounds = array<i64: 3, 32>}, {pipeline_mode = #tpu.pipeline_mode<synchronous>, transform_indices = @transform_2, window_bounds = array<i64: 3, 32>}, {pipeline_mode = #tpu.pipeline_mode<synchronous>, transform_indices = @transform_3, window_bounds = array<i64: 7, 2, 6>}, {pipeline_mode = #tpu.pipeline_mode<synchronous>, transform_indices = @transform_4, window_bounds = array<i64: 2, 6, 32>}, {pipeline_mode = #tpu.pipeline_mode<synchronous>, transform_indices = @transform_5, window_bounds = array<i64: 2, 32>}, {pipeline_mode = #tpu.pipeline_mode<synchronous>, transform_indices = @transform_6, window_bounds = array<i64: 5, 32>}, {pipeline_mode = #tpu.pipeline_mode<synchronous>, transform_indices = @transform_7, window_bounds = array<i64: 2, 32, 96>}, {pipeline_mode = #tpu.pipeline_mode<synchronous>, transform_indices = @transform_8, window_bounds = array<i64: 2, 1, 96>}, {pipeline_mode = #tpu.pipeline_mode<synchronous>, transform_indices = @transform_9, window_bounds = array<i64: 2, 32, 32>}, {pipeline_mode = #tpu.pipeline_mode<synchronous>, transform_indices = @transform_10, window_bounds = array<i64: 2, 1, 32>}, {pipeline_mode = #tpu.pipeline_mode<synchronous>, transform_indices = @transform_11, window_bounds = array<i64: 2, 1, 32>}, {pipeline_mode = #tpu.pipeline_mode<synchronous>, transform_indices = @transform_12, window_bounds = array<i64: 2, 1, 32>}, {pipeline_mode = #tpu.pipeline_mode<synchronous>, transform_indices = @transform_13, window_bounds = array<i64: 2, 32, 128>}, {pipeline_mode = #tpu.pipeline_mode<synchronous>, transform_indices = @transform_14, window_bounds = array<i64: 2, 1, 128>}, {pipeline_mode = #tpu.pipeline_mode<synchronous>, transform_indices = @transform_15, window_bounds = array<i64: 2, 128, 32>}, {pipeline_mode = #tpu.pipeline_mode<synchronous>, transform_indices = @transform_16, window_bounds = array<i64: 2, 1, 32>}, {pipeline_mode = #tpu.pipeline_mode<synchronous>, transform_indices = @transform_17, window_bounds = array<i64: 2, 1, 32>}, {pipeline_mode = #tpu.pipeline_mode<synchronous>, transform_indices = @transform_18, window_bounds = array<i64: 2, 1, 32>}, {pipeline_mode = #tpu.pipeline_mode<synchronous>, transform_indices = @transform_19, window_bounds = array<i64: 32, 2>}, {pipeline_mode = #tpu.pipeline_mode<synchronous>, transform_indices = @transform_20, window_bounds = array<i64: 1, 2>}, {pipeline_mode = #tpu.pipeline_mode<synchronous>, transform_indices = @transform_21, window_bounds = array<i64: 2, 2>}]} {
    %c0 = arith.constant 0 : index
    %c0_0 = arith.constant 0 : index
    %0 = vector.load %arg2[%c0, %c0_0] : memref<2x3xf32, #tpu.memory_space<vmem>>, vector<2x3xf32>
    %c0_1 = arith.constant 0 : index
    %c0_2 = arith.constant 0 : index
    %1 = vector.load %arg3[%c0_1, %c0_2] : memref<3x32xf32, #tpu.memory_space<vmem>>, vector<3x32xf32>
    %c0_3 = arith.constant 0 : index
    %c0_4 = arith.constant 0 : index
    %2 = vector.load %arg4[%c0_3, %c0_4] : memref<3x32xf32, #tpu.memory_space<vmem>>, vector<3x32xf32>
    %c0_5 = arith.constant 0 : index
    %c0_6 = arith.constant 0 : index
    %c0_7 = arith.constant 0 : index
    %3 = vector.load %arg6[%c0_5, %c0_6, %c0_7] : memref<2x6x32xf32, #tpu.memory_space<vmem>>, vector<2x6x32xf32>
    %c0_8 = arith.constant 0 : index
    %c0_9 = arith.constant 0 : index
    %4 = vector.load %arg7[%c0_8, %c0_9] : memref<2x32xf32, #tpu.memory_space<vmem>>, vector<2x32xf32>
    %c0_10 = arith.constant 0 : index
    %c0_11 = arith.constant 0 : index
    %5 = vector.load %arg8[%c0_10, %c0_11] : memref<5x32xf32, #tpu.memory_space<vmem>>, vector<5x32xf32>
    %6 = vector.shape_cast %0 : vector<2x3xf32> to vector<2x3x1xf32>
    %7 = vector.shape_cast %1 : vector<3x32xf32> to vector<1x3x32xf32>
    %8 = vector.broadcast %6 : vector<2x3x1xf32> to vector<2x3x32xf32>
    %9 = vector.broadcast %7 : vector<1x3x32xf32> to vector<2x3x32xf32>
    %10 = arith.mulf %8, %9 : vector<2x3x32xf32>
    %11 = vector.shape_cast %2 : vector<3x32xf32> to vector<1x3x32xf32>
    %12 = vector.broadcast %11 : vector<1x3x32xf32> to vector<2x3x32xf32>
    %13 = arith.addf %10, %12 : vector<2x3x32xf32>
    %14 = vector.extract_strided_slice %13 {offsets = [0, 0, 0], sizes = [1, 3, 32], strides = [1, 1, 1]} : vector<2x3x32xf32> to vector<1x3x32xf32>
    %15 = vector.shape_cast %14 : vector<1x3x32xf32> to vector<3x32xf32>
    %c0_12 = arith.constant 0 : index
    %c0_13 = arith.constant 0 : index
    %16 = memref.load %arg1[%c0_12, %c0_13] : memref<2x2xi32, #tpu.memory_space<smem>>
    %17 = arith.index_cast %16 : i32 to index
    %c0_14 = arith.constant 0 : index
    %c0_15 = arith.constant 0 : index
    %18 = vector.load %arg5[%17, %c0_14, %c0_15] : memref<7x2x6xf32, #tpu.memory_space<vmem>>, vector<1x2x6xf32>
    %19 = vector.shape_cast %18 : vector<1x2x6xf32> to vector<2x6xf32>
    %20 = vector.extract_strided_slice %19 {offsets = [0, 0], sizes = [1, 6], strides = [1, 1]} : vector<2x6xf32> to vector<1x6xf32>
    %21 = vector.extract_strided_slice %3 {offsets = [0, 0, 0], sizes = [1, 6, 32], strides = [1, 1, 1]} : vector<2x6x32xf32> to vector<1x6x32xf32>
    %22 = vector.shape_cast %21 : vector<1x6x32xf32> to vector<6x32xf32>
    %cst = arith.constant dense<0.000000e+00> : vector<1x32xf32>
    %23 = tpu.matmul %20, %22, %cst {dimension_numbers = #tpu.dot_dimension_numbers<[1], [0], [0], [1], [0, 0, 1, 1], [], []>} : vector<1x6xf32>, vector<6x32xf32>, vector<1x32xf32> -> vector<1x32xf32>
    %24 = vector.extract_strided_slice %4 {offsets = [0, 0], sizes = [1, 32], strides = [1, 1]} : vector<2x32xf32> to vector<1x32xf32>
    %25 = arith.addf %23, %24 : vector<1x32xf32>
    %c0_16 = arith.constant 0 : index
    %c1 = arith.constant 1 : index
    %26 = memref.load %arg1[%c0_16, %c1] : memref<2x2xi32, #tpu.memory_space<smem>>
    %27 = arith.index_cast %26 : i32 to index
    %c0_17 = arith.constant 0 : index
    %c0_18 = arith.constant 0 : index
    %28 = vector.load %arg5[%27, %c0_17, %c0_18] : memref<7x2x6xf32, #tpu.memory_space<vmem>>, vector<1x2x6xf32>
    %29 = vector.shape_cast %28 : vector<1x2x6xf32> to vector<2x6xf32>
    %30 = vector.extract_strided_slice %29 {offsets = [1, 0], sizes = [1, 6], strides = [1, 1]} : vector<2x6xf32> to vector<1x6xf32>
    %31 = vector.extract_strided_slice %3 {offsets = [1, 0, 0], sizes = [1, 6, 32], strides = [1, 1, 1]} : vector<2x6x32xf32> to vector<1x6x32xf32>
    %32 = vector.shape_cast %31 : vector<1x6x32xf32> to vector<6x32xf32>
    %cst_19 = arith.constant dense<0.000000e+00> : vector<1x32xf32>
    %33 = tpu.matmul %30, %32, %cst_19 {dimension_numbers = #tpu.dot_dimension_numbers<[1], [0], [0], [1], [0, 0, 1, 1], [], []>} : vector<1x6xf32>, vector<6x32xf32>, vector<1x32xf32> -> vector<1x32xf32>
    %34 = vector.extract_strided_slice %4 {offsets = [1, 0], sizes = [1, 32], strides = [1, 1]} : vector<2x32xf32> to vector<1x32xf32>
    %35 = arith.addf %33, %34 : vector<1x32xf32>
    %36 = tpu.concatenate %15, %25, %35 in 0 : vector<3x32xf32>, vector<1x32xf32>, vector<1x32xf32> -> vector<5x32xf32>
    %37 = arith.addf %36, %5 : vector<5x32xf32>
    %38 = vector.extract_strided_slice %13 {offsets = [1, 0, 0], sizes = [1, 3, 32], strides = [1, 1, 1]} : vector<2x3x32xf32> to vector<1x3x32xf32>
    %39 = vector.shape_cast %38 : vector<1x3x32xf32> to vector<3x32xf32>
    %c1_20 = arith.constant 1 : index
    %c0_21 = arith.constant 0 : index
    %40 = memref.load %arg1[%c1_20, %c0_21] : memref<2x2xi32, #tpu.memory_space<smem>>
    %41 = arith.index_cast %40 : i32 to index
    %c0_22 = arith.constant 0 : index
    %c0_23 = arith.constant 0 : index
    %42 = vector.load %arg5[%41, %c0_22, %c0_23] : memref<7x2x6xf32, #tpu.memory_space<vmem>>, vector<1x2x6xf32>
    %43 = vector.shape_cast %42 : vector<1x2x6xf32> to vector<2x6xf32>
    %44 = vector.extract_strided_slice %43 {offsets = [0, 0], sizes = [1, 6], strides = [1, 1]} : vector<2x6xf32> to vector<1x6xf32>
    %45 = vector.extract_strided_slice %3 {offsets = [0, 0, 0], sizes = [1, 6, 32], strides = [1, 1, 1]} : vector<2x6x32xf32> to vector<1x6x32xf32>
    %46 = vector.shape_cast %45 : vector<1x6x32xf32> to vector<6x32xf32>
    %cst_24 = arith.constant dense<0.000000e+00> : vector<1x32xf32>
    %47 = tpu.matmul %44, %46, %cst_24 {dimension_numbers = #tpu.dot_dimension_numbers<[1], [0], [0], [1], [0, 0, 1, 1], [], []>} : vector<1x6xf32>, vector<6x32xf32>, vector<1x32xf32> -> vector<1x32xf32>
    %48 = vector.extract_strided_slice %4 {offsets = [0, 0], sizes = [1, 32], strides = [1, 1]} : vector<2x32xf32> to vector<1x32xf32>
    %49 = arith.addf %47, %48 : vector<1x32xf32>
    %c1_25 = arith.constant 1 : index
    %c1_26 = arith.constant 1 : index
    %50 = memref.load %arg1[%c1_25, %c1_26] : memref<2x2xi32, #tpu.memory_space<smem>>
    %51 = arith.index_cast %50 : i32 to index
    %c0_27 = arith.constant 0 : index
    %c0_28 = arith.constant 0 : index
    %52 = vector.load %arg5[%51, %c0_27, %c0_28] : memref<7x2x6xf32, #tpu.memory_space<vmem>>, vector<1x2x6xf32>
    %53 = vector.shape_cast %52 : vector<1x2x6xf32> to vector<2x6xf32>
    %54 = vector.extract_strided_slice %53 {offsets = [1, 0], sizes = [1, 6], strides = [1, 1]} : vector<2x6xf32> to vector<1x6xf32>
    %55 = vector.extract_strided_slice %3 {offsets = [1, 0, 0], sizes = [1, 6, 32], strides = [1, 1, 1]} : vector<2x6x32xf32> to vector<1x6x32xf32>
    %56 = vector.shape_cast %55 : vector<1x6x32xf32> to vector<6x32xf32>
    %cst_29 = arith.constant dense<0.000000e+00> : vector<1x32xf32>
    %57 = tpu.matmul %54, %56, %cst_29 {dimension_numbers = #tpu.dot_dimension_numbers<[1], [0], [0], [1], [0, 0, 1, 1], [], []>} : vector<1x6xf32>, vector<6x32xf32>, vector<1x32xf32> -> vector<1x32xf32>
    %58 = vector.extract_strided_slice %4 {offsets = [1, 0], sizes = [1, 32], strides = [1, 1]} : vector<2x32xf32> to vector<1x32xf32>
    %59 = arith.addf %57, %58 : vector<1x32xf32>
    %60 = tpu.concatenate %39, %49, %59 in 0 : vector<3x32xf32>, vector<1x32xf32>, vector<1x32xf32> -> vector<5x32xf32>
    %61 = arith.addf %60, %5 : vector<5x32xf32>
    %62 = tpu.concatenate %37, %61 in 0 : vector<5x32xf32>, vector<5x32xf32> -> vector<10x32xf32>
    %c0_30 = arith.constant 0 : index
    %c0_31 = arith.constant 0 : index
    %c0_32 = arith.constant 0 : index
    %63 = vector.load %arg9[%c0_30, %c0_31, %c0_32] : memref<2x32x96xf32, #tpu.memory_space<vmem>>, vector<1x32x96xf32>
    %64 = vector.shape_cast %63 : vector<1x32x96xf32> to vector<32x96xf32>
    %cst_33 = arith.constant dense<0.000000e+00> : vector<10x96xf32>
    %65 = tpu.matmul %62, %64, %cst_33 {dimension_numbers = #tpu.dot_dimension_numbers<[1], [0], [0], [1], [0, 0, 1, 1], [], []>} : vector<10x32xf32>, vector<32x96xf32>, vector<10x96xf32> -> vector<10x96xf32>
    %c0_34 = arith.constant 0 : index
    %c0_35 = arith.constant 0 : index
    %c0_36 = arith.constant 0 : index
    %66 = vector.load %arg10[%c0_34, %c0_35, %c0_36] : memref<2x1x96xf32, #tpu.memory_space<vmem>>, vector<1x1x96xf32>
    %67 = vector.shape_cast %66 : vector<1x1x96xf32> to vector<1x96xf32>
    %68 = vector.broadcast %67 : vector<1x96xf32> to vector<10x96xf32>
    %69 = arith.addf %65, %68 : vector<10x96xf32>
    %70 = vector.extract_strided_slice %69 {offsets = [0, 0], sizes = [10, 32], strides = [1, 1]} : vector<10x96xf32> to vector<10x32xf32>
    %71 = vector.extract_strided_slice %69 {offsets = [0, 32], sizes = [10, 32], strides = [1, 1]} : vector<10x96xf32> to vector<10x32xf32>
    %72 = vector.extract_strided_slice %69 {offsets = [0, 64], sizes = [10, 32], strides = [1, 1]} : vector<10x96xf32> to vector<10x32xf32>
    %73 = vector.extract_strided_slice %70 {offsets = [0, 0], sizes = [5, 32], strides = [1, 1]} : vector<10x32xf32> to vector<5x32xf32>
    %74 = vector.extract_strided_slice %71 {offsets = [0, 0], sizes = [5, 32], strides = [1, 1]} : vector<10x32xf32> to vector<5x32xf32>
    %75 = vector.extract_strided_slice %72 {offsets = [0, 0], sizes = [5, 32], strides = [1, 1]} : vector<10x32xf32> to vector<5x32xf32>
    %76 = vector.extract_strided_slice %73 {offsets = [0, 0], sizes = [5, 8], strides = [1, 1]} : vector<5x32xf32> to vector<5x8xf32>
    %77 = vector.extract_strided_slice %74 {offsets = [0, 0], sizes = [5, 8], strides = [1, 1]} : vector<5x32xf32> to vector<5x8xf32>
    %cst_37 = arith.constant dense<0.000000e+00> : vector<5x5xf32>
    %78 = tpu.matmul %76, %77, %cst_37 {dimension_numbers = #tpu.dot_dimension_numbers<[1], [1], [0], [0], [0, 0, 1, 0], [], []>} : vector<5x8xf32>, vector<5x8xf32>, vector<5x5xf32> -> vector<5x5xf32>
    %79 = vector.extract_strided_slice %75 {offsets = [0, 0], sizes = [5, 8], strides = [1, 1]} : vector<5x32xf32> to vector<5x8xf32>
    %80 = vector.extract_strided_slice %73 {offsets = [0, 8], sizes = [5, 8], strides = [1, 1]} : vector<5x32xf32> to vector<5x8xf32>
    %81 = vector.extract_strided_slice %74 {offsets = [0, 8], sizes = [5, 8], strides = [1, 1]} : vector<5x32xf32> to vector<5x8xf32>
    %cst_38 = arith.constant dense<0.000000e+00> : vector<5x5xf32>
    %82 = tpu.matmul %80, %81, %cst_38 {dimension_numbers = #tpu.dot_dimension_numbers<[1], [1], [0], [0], [0, 0, 1, 0], [], []>} : vector<5x8xf32>, vector<5x8xf32>, vector<5x5xf32> -> vector<5x5xf32>
    %83 = vector.extract_strided_slice %75 {offsets = [0, 8], sizes = [5, 8], strides = [1, 1]} : vector<5x32xf32> to vector<5x8xf32>
    %84 = vector.extract_strided_slice %73 {offsets = [0, 16], sizes = [5, 8], strides = [1, 1]} : vector<5x32xf32> to vector<5x8xf32>
    %85 = vector.extract_strided_slice %74 {offsets = [0, 16], sizes = [5, 8], strides = [1, 1]} : vector<5x32xf32> to vector<5x8xf32>
    %cst_39 = arith.constant dense<0.000000e+00> : vector<5x5xf32>
    %86 = tpu.matmul %84, %85, %cst_39 {dimension_numbers = #tpu.dot_dimension_numbers<[1], [1], [0], [0], [0, 0, 1, 0], [], []>} : vector<5x8xf32>, vector<5x8xf32>, vector<5x5xf32> -> vector<5x5xf32>
    %87 = vector.extract_strided_slice %75 {offsets = [0, 16], sizes = [5, 8], strides = [1, 1]} : vector<5x32xf32> to vector<5x8xf32>
    %88 = vector.extract_strided_slice %73 {offsets = [0, 24], sizes = [5, 8], strides = [1, 1]} : vector<5x32xf32> to vector<5x8xf32>
    %89 = vector.extract_strided_slice %74 {offsets = [0, 24], sizes = [5, 8], strides = [1, 1]} : vector<5x32xf32> to vector<5x8xf32>
    %cst_40 = arith.constant dense<0.000000e+00> : vector<5x5xf32>
    %90 = tpu.matmul %88, %89, %cst_40 {dimension_numbers = #tpu.dot_dimension_numbers<[1], [1], [0], [0], [0, 0, 1, 0], [], []>} : vector<5x8xf32>, vector<5x8xf32>, vector<5x5xf32> -> vector<5x5xf32>
    %91 = vector.extract_strided_slice %75 {offsets = [0, 24], sizes = [5, 8], strides = [1, 1]} : vector<5x32xf32> to vector<5x8xf32>
    %92 = vector.extract_strided_slice %70 {offsets = [5, 0], sizes = [5, 32], strides = [1, 1]} : vector<10x32xf32> to vector<5x32xf32>
    %93 = vector.extract_strided_slice %71 {offsets = [5, 0], sizes = [5, 32], strides = [1, 1]} : vector<10x32xf32> to vector<5x32xf32>
    %94 = vector.extract_strided_slice %72 {offsets = [5, 0], sizes = [5, 32], strides = [1, 1]} : vector<10x32xf32> to vector<5x32xf32>
    %95 = vector.extract_strided_slice %92 {offsets = [0, 0], sizes = [5, 8], strides = [1, 1]} : vector<5x32xf32> to vector<5x8xf32>
    %96 = vector.extract_strided_slice %93 {offsets = [0, 0], sizes = [5, 8], strides = [1, 1]} : vector<5x32xf32> to vector<5x8xf32>
    %cst_41 = arith.constant dense<0.000000e+00> : vector<5x5xf32>
    %97 = tpu.matmul %95, %96, %cst_41 {dimension_numbers = #tpu.dot_dimension_numbers<[1], [1], [0], [0], [0, 0, 1, 0], [], []>} : vector<5x8xf32>, vector<5x8xf32>, vector<5x5xf32> -> vector<5x5xf32>
    %98 = vector.extract_strided_slice %94 {offsets = [0, 0], sizes = [5, 8], strides = [1, 1]} : vector<5x32xf32> to vector<5x8xf32>
    %99 = vector.extract_strided_slice %92 {offsets = [0, 8], sizes = [5, 8], strides = [1, 1]} : vector<5x32xf32> to vector<5x8xf32>
    %100 = vector.extract_strided_slice %93 {offsets = [0, 8], sizes = [5, 8], strides = [1, 1]} : vector<5x32xf32> to vector<5x8xf32>
    %cst_42 = arith.constant dense<0.000000e+00> : vector<5x5xf32>
    %101 = tpu.matmul %99, %100, %cst_42 {dimension_numbers = #tpu.dot_dimension_numbers<[1], [1], [0], [0], [0, 0, 1, 0], [], []>} : vector<5x8xf32>, vector<5x8xf32>, vector<5x5xf32> -> vector<5x5xf32>
    %102 = vector.extract_strided_slice %94 {offsets = [0, 8], sizes = [5, 8], strides = [1, 1]} : vector<5x32xf32> to vector<5x8xf32>
    %103 = vector.extract_strided_slice %92 {offsets = [0, 16], sizes = [5, 8], strides = [1, 1]} : vector<5x32xf32> to vector<5x8xf32>
    %104 = vector.extract_strided_slice %93 {offsets = [0, 16], sizes = [5, 8], strides = [1, 1]} : vector<5x32xf32> to vector<5x8xf32>
    %cst_43 = arith.constant dense<0.000000e+00> : vector<5x5xf32>
    %105 = tpu.matmul %103, %104, %cst_43 {dimension_numbers = #tpu.dot_dimension_numbers<[1], [1], [0], [0], [0, 0, 1, 0], [], []>} : vector<5x8xf32>, vector<5x8xf32>, vector<5x5xf32> -> vector<5x5xf32>
    %106 = vector.extract_strided_slice %94 {offsets = [0, 16], sizes = [5, 8], strides = [1, 1]} : vector<5x32xf32> to vector<5x8xf32>
    %107 = vector.extract_strided_slice %92 {offsets = [0, 24], sizes = [5, 8], strides = [1, 1]} : vector<5x32xf32> to vector<5x8xf32>
    %108 = vector.extract_strided_slice %93 {offsets = [0, 24], sizes = [5, 8], strides = [1, 1]} : vector<5x32xf32> to vector<5x8xf32>
    %cst_44 = arith.constant dense<0.000000e+00> : vector<5x5xf32>
    %109 = tpu.matmul %107, %108, %cst_44 {dimension_numbers = #tpu.dot_dimension_numbers<[1], [1], [0], [0], [0, 0, 1, 0], [], []>} : vector<5x8xf32>, vector<5x8xf32>, vector<5x5xf32> -> vector<5x5xf32>
    %110 = vector.extract_strided_slice %94 {offsets = [0, 24], sizes = [5, 8], strides = [1, 1]} : vector<5x32xf32> to vector<5x8xf32>
    %111 = tpu.concatenate %78, %82, %86, %90, %97, %101, %105, %109 in 0 : vector<5x5xf32>, vector<5x5xf32>, vector<5x5xf32>, vector<5x5xf32>, vector<5x5xf32>, vector<5x5xf32>, vector<5x5xf32>, vector<5x5xf32> -> vector<40x5xf32>
    %cst_45 = arith.constant dense<0xFF800000> : vector<40xf32>
    %112 = vector.multi_reduction <maximumf>, %111, %cst_45 [1] : vector<40x5xf32> to vector<40xf32>
    %113 = vector.shape_cast %112 : vector<40xf32> to vector<40x1xf32>
    %114 = vector.broadcast %113 : vector<40x1xf32> to vector<40x5xf32>
    %115 = arith.subf %111, %114 : vector<40x5xf32>
    %116 = math.exp %115 : vector<40x5xf32>
    %cst_46 = arith.constant dense<0.000000e+00> : vector<40xf32>
    %117 = vector.multi_reduction <add>, %116, %cst_46 [1] : vector<40x5xf32> to vector<40xf32>
    %118 = vector.shape_cast %117 : vector<40xf32> to vector<40x1xf32>
    %119 = vector.broadcast %118 : vector<40x1xf32> to vector<40x5xf32>
    %120 = arith.divf %116, %119 : vector<40x5xf32>
    %121 = vector.extract_strided_slice %120 {offsets = [0, 0], sizes = [5, 5], strides = [1, 1]} : vector<40x5xf32> to vector<5x5xf32>
    %cst_47 = arith.constant dense<0.000000e+00> : vector<5x8xf32>
    %122 = tpu.matmul %121, %79, %cst_47 {dimension_numbers = #tpu.dot_dimension_numbers<[1], [0], [0], [1], [0, 0, 1, 1], [], []>} : vector<5x5xf32>, vector<5x8xf32>, vector<5x8xf32> -> vector<5x8xf32>
    %123 = vector.extract_strided_slice %120 {offsets = [5, 0], sizes = [5, 5], strides = [1, 1]} : vector<40x5xf32> to vector<5x5xf32>
    %cst_48 = arith.constant dense<0.000000e+00> : vector<5x8xf32>
    %124 = tpu.matmul %123, %83, %cst_48 {dimension_numbers = #tpu.dot_dimension_numbers<[1], [0], [0], [1], [0, 0, 1, 1], [], []>} : vector<5x5xf32>, vector<5x8xf32>, vector<5x8xf32> -> vector<5x8xf32>
    %125 = vector.extract_strided_slice %120 {offsets = [10, 0], sizes = [5, 5], strides = [1, 1]} : vector<40x5xf32> to vector<5x5xf32>
    %cst_49 = arith.constant dense<0.000000e+00> : vector<5x8xf32>
    %126 = tpu.matmul %125, %87, %cst_49 {dimension_numbers = #tpu.dot_dimension_numbers<[1], [0], [0], [1], [0, 0, 1, 1], [], []>} : vector<5x5xf32>, vector<5x8xf32>, vector<5x8xf32> -> vector<5x8xf32>
    %127 = vector.extract_strided_slice %120 {offsets = [15, 0], sizes = [5, 5], strides = [1, 1]} : vector<40x5xf32> to vector<5x5xf32>
    %cst_50 = arith.constant dense<0.000000e+00> : vector<5x8xf32>
    %128 = tpu.matmul %127, %91, %cst_50 {dimension_numbers = #tpu.dot_dimension_numbers<[1], [0], [0], [1], [0, 0, 1, 1], [], []>} : vector<5x5xf32>, vector<5x8xf32>, vector<5x8xf32> -> vector<5x8xf32>
    %129 = tpu.concatenate %122, %124, %126, %128 in 1 : vector<5x8xf32>, vector<5x8xf32>, vector<5x8xf32>, vector<5x8xf32> -> vector<5x32xf32>
    %130 = vector.extract_strided_slice %120 {offsets = [20, 0], sizes = [5, 5], strides = [1, 1]} : vector<40x5xf32> to vector<5x5xf32>
    %cst_51 = arith.constant dense<0.000000e+00> : vector<5x8xf32>
    %131 = tpu.matmul %130, %98, %cst_51 {dimension_numbers = #tpu.dot_dimension_numbers<[1], [0], [0], [1], [0, 0, 1, 1], [], []>} : vector<5x5xf32>, vector<5x8xf32>, vector<5x8xf32> -> vector<5x8xf32>
    %132 = vector.extract_strided_slice %120 {offsets = [25, 0], sizes = [5, 5], strides = [1, 1]} : vector<40x5xf32> to vector<5x5xf32>
    %cst_52 = arith.constant dense<0.000000e+00> : vector<5x8xf32>
    %133 = tpu.matmul %132, %102, %cst_52 {dimension_numbers = #tpu.dot_dimension_numbers<[1], [0], [0], [1], [0, 0, 1, 1], [], []>} : vector<5x5xf32>, vector<5x8xf32>, vector<5x8xf32> -> vector<5x8xf32>
    %134 = vector.extract_strided_slice %120 {offsets = [30, 0], sizes = [5, 5], strides = [1, 1]} : vector<40x5xf32> to vector<5x5xf32>
    %cst_53 = arith.constant dense<0.000000e+00> : vector<5x8xf32>
    %135 = tpu.matmul %134, %106, %cst_53 {dimension_numbers = #tpu.dot_dimension_numbers<[1], [0], [0], [1], [0, 0, 1, 1], [], []>} : vector<5x5xf32>, vector<5x8xf32>, vector<5x8xf32> -> vector<5x8xf32>
    %136 = vector.extract_strided_slice %120 {offsets = [35, 0], sizes = [5, 5], strides = [1, 1]} : vector<40x5xf32> to vector<5x5xf32>
    %cst_54 = arith.constant dense<0.000000e+00> : vector<5x8xf32>
    %137 = tpu.matmul %136, %110, %cst_54 {dimension_numbers = #tpu.dot_dimension_numbers<[1], [0], [0], [1], [0, 0, 1, 1], [], []>} : vector<5x5xf32>, vector<5x8xf32>, vector<5x8xf32> -> vector<5x8xf32>
    %138 = tpu.concatenate %131, %133, %135, %137 in 1 : vector<5x8xf32>, vector<5x8xf32>, vector<5x8xf32>, vector<5x8xf32> -> vector<5x32xf32>
    %139 = tpu.concatenate %129, %138 in 0 : vector<5x32xf32>, vector<5x32xf32> -> vector<10x32xf32>
    %c0_55 = arith.constant 0 : index
    %c0_56 = arith.constant 0 : index
    %c0_57 = arith.constant 0 : index
    %140 = vector.load %arg11[%c0_55, %c0_56, %c0_57] : memref<2x32x32xf32, #tpu.memory_space<vmem>>, vector<1x32x32xf32>
    %141 = vector.shape_cast %140 : vector<1x32x32xf32> to vector<32x32xf32>
    %cst_58 = arith.constant dense<0.000000e+00> : vector<10x32xf32>
    %142 = tpu.matmul %139, %141, %cst_58 {dimension_numbers = #tpu.dot_dimension_numbers<[1], [0], [0], [1], [0, 0, 1, 1], [], []>} : vector<10x32xf32>, vector<32x32xf32>, vector<10x32xf32> -> vector<10x32xf32>
    %c0_59 = arith.constant 0 : index
    %c0_60 = arith.constant 0 : index
    %c0_61 = arith.constant 0 : index
    %143 = vector.load %arg12[%c0_59, %c0_60, %c0_61] : memref<2x1x32xf32, #tpu.memory_space<vmem>>, vector<1x1x32xf32>
    %144 = vector.shape_cast %143 : vector<1x1x32xf32> to vector<1x32xf32>
    %145 = vector.broadcast %144 : vector<1x32xf32> to vector<10x32xf32>
    %146 = arith.addf %142, %145 : vector<10x32xf32>
    %147 = arith.addf %62, %146 : vector<10x32xf32>
    %c0_62 = arith.constant 0 : index
    %c0_63 = arith.constant 0 : index
    %c0_64 = arith.constant 0 : index
    %148 = vector.load %arg13[%c0_62, %c0_63, %c0_64] : memref<2x1x32xf32, #tpu.memory_space<vmem>>, vector<1x1x32xf32>
    %149 = vector.shape_cast %148 : vector<1x1x32xf32> to vector<1x32xf32>
    %c0_65 = arith.constant 0 : index
    %c0_66 = arith.constant 0 : index
    %c0_67 = arith.constant 0 : index
    %150 = vector.load %arg14[%c0_65, %c0_66, %c0_67] : memref<2x1x32xf32, #tpu.memory_space<vmem>>, vector<1x1x32xf32>
    %151 = vector.shape_cast %150 : vector<1x1x32xf32> to vector<1x32xf32>
    %cst_68 = arith.constant dense<0.000000e+00> : vector<10xf32>
    %152 = vector.multi_reduction <add>, %147, %cst_68 [1] : vector<10x32xf32> to vector<10xf32>
    %153 = vector.shape_cast %152 : vector<10xf32> to vector<10x1xf32>
    %cst_69 = arith.constant 3.200000e+01 : f32
    %154 = vector.broadcast %cst_69 : f32 to vector<10x1xf32>
    %155 = arith.divf %153, %154 : vector<10x1xf32>
    %156 = vector.broadcast %155 : vector<10x1xf32> to vector<10x32xf32>
    %157 = arith.subf %147, %156 : vector<10x32xf32>
    %158 = arith.mulf %157, %157 : vector<10x32xf32>
    %cst_70 = arith.constant dense<0.000000e+00> : vector<10xf32>
    %159 = vector.multi_reduction <add>, %158, %cst_70 [1] : vector<10x32xf32> to vector<10xf32>
    %160 = vector.shape_cast %159 : vector<10xf32> to vector<10x1xf32>
    %cst_71 = arith.constant 3.200000e+01 : f32
    %161 = vector.broadcast %cst_71 : f32 to vector<10x1xf32>
    %162 = arith.divf %160, %161 : vector<10x1xf32>
    %cst_72 = arith.constant 9.99999974E-6 : f32
    %163 = vector.broadcast %cst_72 : f32 to vector<10x1xf32>
    %164 = arith.addf %162, %163 : vector<10x1xf32>
    %165 = math.rsqrt %164 : vector<10x1xf32>
    %166 = vector.broadcast %165 : vector<10x1xf32> to vector<10x32xf32>
    %167 = arith.mulf %157, %166 : vector<10x32xf32>
    %168 = vector.broadcast %149 : vector<1x32xf32> to vector<10x32xf32>
    %169 = arith.mulf %167, %168 : vector<10x32xf32>
    %170 = vector.broadcast %151 : vector<1x32xf32> to vector<10x32xf32>
    %171 = arith.addf %169, %170 : vector<10x32xf32>
    %c0_73 = arith.constant 0 : index
    %c0_74 = arith.constant 0 : index
    %c0_75 = arith.constant 0 : index
    %172 = vector.load %arg15[%c0_73, %c0_74, %c0_75] : memref<2x32x128xf32, #tpu.memory_space<vmem>>, vector<1x32x128xf32>
    %173 = vector.shape_cast %172 : vector<1x32x128xf32> to vector<32x128xf32>
    %cst_76 = arith.constant dense<0.000000e+00> : vector<10x128xf32>
    %174 = tpu.matmul %171, %173, %cst_76 {dimension_numbers = #tpu.dot_dimension_numbers<[1], [0], [0], [1], [0, 0, 1, 1], [], []>} : vector<10x32xf32>, vector<32x128xf32>, vector<10x128xf32> -> vector<10x128xf32>
    %c0_77 = arith.constant 0 : index
    %c0_78 = arith.constant 0 : index
    %c0_79 = arith.constant 0 : index
    %175 = vector.load %arg16[%c0_77, %c0_78, %c0_79] : memref<2x1x128xf32, #tpu.memory_space<vmem>>, vector<1x1x128xf32>
    %176 = vector.shape_cast %175 : vector<1x1x128xf32> to vector<1x128xf32>
    %177 = vector.broadcast %176 : vector<1x128xf32> to vector<10x128xf32>
    %178 = arith.addf %174, %177 : vector<10x128xf32>
    %cst_80 = arith.constant 0.000000e+00 : f32
    %179 = vector.broadcast %cst_80 : f32 to vector<10x128xf32>
    %180 = arith.maximumf %178, %179 : vector<10x128xf32>
    %c0_81 = arith.constant 0 : index
    %c0_82 = arith.constant 0 : index
    %c0_83 = arith.constant 0 : index
    %181 = vector.load %arg17[%c0_81, %c0_82, %c0_83] : memref<2x128x32xf32, #tpu.memory_space<vmem>>, vector<1x128x32xf32>
    %182 = vector.shape_cast %181 : vector<1x128x32xf32> to vector<128x32xf32>
    %cst_84 = arith.constant dense<0.000000e+00> : vector<10x32xf32>
    %183 = tpu.matmul %180, %182, %cst_84 {dimension_numbers = #tpu.dot_dimension_numbers<[1], [0], [0], [1], [0, 0, 1, 1], [], []>} : vector<10x128xf32>, vector<128x32xf32>, vector<10x32xf32> -> vector<10x32xf32>
    %c0_85 = arith.constant 0 : index
    %c0_86 = arith.constant 0 : index
    %c0_87 = arith.constant 0 : index
    %184 = vector.load %arg18[%c0_85, %c0_86, %c0_87] : memref<2x1x32xf32, #tpu.memory_space<vmem>>, vector<1x1x32xf32>
    %185 = vector.shape_cast %184 : vector<1x1x32xf32> to vector<1x32xf32>
    %186 = vector.broadcast %185 : vector<1x32xf32> to vector<10x32xf32>
    %187 = arith.addf %183, %186 : vector<10x32xf32>
    %188 = arith.addf %171, %187 : vector<10x32xf32>
    %c0_88 = arith.constant 0 : index
    %c0_89 = arith.constant 0 : index
    %c0_90 = arith.constant 0 : index
    %189 = vector.load %arg19[%c0_88, %c0_89, %c0_90] : memref<2x1x32xf32, #tpu.memory_space<vmem>>, vector<1x1x32xf32>
    %190 = vector.shape_cast %189 : vector<1x1x32xf32> to vector<1x32xf32>
    %c0_91 = arith.constant 0 : index
    %c0_92 = arith.constant 0 : index
    %c0_93 = arith.constant 0 : index
    %191 = vector.load %arg20[%c0_91, %c0_92, %c0_93] : memref<2x1x32xf32, #tpu.memory_space<vmem>>, vector<1x1x32xf32>
    %192 = vector.shape_cast %191 : vector<1x1x32xf32> to vector<1x32xf32>
    %cst_94 = arith.constant dense<0.000000e+00> : vector<10xf32>
    %193 = vector.multi_reduction <add>, %188, %cst_94 [1] : vector<10x32xf32> to vector<10xf32>
    %194 = vector.shape_cast %193 : vector<10xf32> to vector<10x1xf32>
    %cst_95 = arith.constant 3.200000e+01 : f32
    %195 = vector.broadcast %cst_95 : f32 to vector<10x1xf32>
    %196 = arith.divf %194, %195 : vector<10x1xf32>
    %197 = vector.broadcast %196 : vector<10x1xf32> to vector<10x32xf32>
    %198 = arith.subf %188, %197 : vector<10x32xf32>
    %199 = arith.mulf %198, %198 : vector<10x32xf32>
    %cst_96 = arith.constant dense<0.000000e+00> : vector<10xf32>
    %200 = vector.multi_reduction <add>, %199, %cst_96 [1] : vector<10x32xf32> to vector<10xf32>
    %201 = vector.shape_cast %200 : vector<10xf32> to vector<10x1xf32>
    %cst_97 = arith.constant 3.200000e+01 : f32
    %202 = vector.broadcast %cst_97 : f32 to vector<10x1xf32>
    %203 = arith.divf %201, %202 : vector<10x1xf32>
    %cst_98 = arith.constant 9.99999974E-6 : f32
    %204 = vector.broadcast %cst_98 : f32 to vector<10x1xf32>
    %205 = arith.addf %203, %204 : vector<10x1xf32>
    %206 = math.rsqrt %205 : vector<10x1xf32>
    %207 = vector.broadcast %206 : vector<10x1xf32> to vector<10x32xf32>
    %208 = arith.mulf %198, %207 : vector<10x32xf32>
    %209 = vector.broadcast %190 : vector<1x32xf32> to vector<10x32xf32>
    %210 = arith.mulf %208, %209 : vector<10x32xf32>
    %211 = vector.broadcast %192 : vector<1x32xf32> to vector<10x32xf32>
    %212 = arith.addf %210, %211 : vector<10x32xf32>
    %c1_99 = arith.constant 1 : index
    %c0_100 = arith.constant 0 : index
    %c0_101 = arith.constant 0 : index
    %213 = vector.load %arg9[%c1_99, %c0_100, %c0_101] : memref<2x32x96xf32, #tpu.memory_space<vmem>>, vector<1x32x96xf32>
    %214 = vector.shape_cast %213 : vector<1x32x96xf32> to vector<32x96xf32>
    %cst_102 = arith.constant dense<0.000000e+00> : vector<10x96xf32>
    %215 = tpu.matmul %212, %214, %cst_102 {dimension_numbers = #tpu.dot_dimension_numbers<[1], [0], [0], [1], [0, 0, 1, 1], [], []>} : vector<10x32xf32>, vector<32x96xf32>, vector<10x96xf32> -> vector<10x96xf32>
    %c1_103 = arith.constant 1 : index
    %c0_104 = arith.constant 0 : index
    %c0_105 = arith.constant 0 : index
    %216 = vector.load %arg10[%c1_103, %c0_104, %c0_105] : memref<2x1x96xf32, #tpu.memory_space<vmem>>, vector<1x1x96xf32>
    %217 = vector.shape_cast %216 : vector<1x1x96xf32> to vector<1x96xf32>
    %218 = vector.broadcast %217 : vector<1x96xf32> to vector<10x96xf32>
    %219 = arith.addf %215, %218 : vector<10x96xf32>
    %220 = vector.extract_strided_slice %219 {offsets = [0, 0], sizes = [10, 32], strides = [1, 1]} : vector<10x96xf32> to vector<10x32xf32>
    %221 = vector.extract_strided_slice %219 {offsets = [0, 32], sizes = [10, 32], strides = [1, 1]} : vector<10x96xf32> to vector<10x32xf32>
    %222 = vector.extract_strided_slice %219 {offsets = [0, 64], sizes = [10, 32], strides = [1, 1]} : vector<10x96xf32> to vector<10x32xf32>
    %223 = vector.extract_strided_slice %220 {offsets = [0, 0], sizes = [5, 32], strides = [1, 1]} : vector<10x32xf32> to vector<5x32xf32>
    %224 = vector.extract_strided_slice %221 {offsets = [0, 0], sizes = [5, 32], strides = [1, 1]} : vector<10x32xf32> to vector<5x32xf32>
    %225 = vector.extract_strided_slice %222 {offsets = [0, 0], sizes = [5, 32], strides = [1, 1]} : vector<10x32xf32> to vector<5x32xf32>
    %226 = vector.extract_strided_slice %223 {offsets = [0, 0], sizes = [5, 8], strides = [1, 1]} : vector<5x32xf32> to vector<5x8xf32>
    %227 = vector.extract_strided_slice %224 {offsets = [0, 0], sizes = [5, 8], strides = [1, 1]} : vector<5x32xf32> to vector<5x8xf32>
    %cst_106 = arith.constant dense<0.000000e+00> : vector<5x5xf32>
    %228 = tpu.matmul %226, %227, %cst_106 {dimension_numbers = #tpu.dot_dimension_numbers<[1], [1], [0], [0], [0, 0, 1, 0], [], []>} : vector<5x8xf32>, vector<5x8xf32>, vector<5x5xf32> -> vector<5x5xf32>
    %229 = vector.extract_strided_slice %225 {offsets = [0, 0], sizes = [5, 8], strides = [1, 1]} : vector<5x32xf32> to vector<5x8xf32>
    %230 = vector.extract_strided_slice %223 {offsets = [0, 8], sizes = [5, 8], strides = [1, 1]} : vector<5x32xf32> to vector<5x8xf32>
    %231 = vector.extract_strided_slice %224 {offsets = [0, 8], sizes = [5, 8], strides = [1, 1]} : vector<5x32xf32> to vector<5x8xf32>
    %cst_107 = arith.constant dense<0.000000e+00> : vector<5x5xf32>
    %232 = tpu.matmul %230, %231, %cst_107 {dimension_numbers = #tpu.dot_dimension_numbers<[1], [1], [0], [0], [0, 0, 1, 0], [], []>} : vector<5x8xf32>, vector<5x8xf32>, vector<5x5xf32> -> vector<5x5xf32>
    %233 = vector.extract_strided_slice %225 {offsets = [0, 8], sizes = [5, 8], strides = [1, 1]} : vector<5x32xf32> to vector<5x8xf32>
    %234 = vector.extract_strided_slice %223 {offsets = [0, 16], sizes = [5, 8], strides = [1, 1]} : vector<5x32xf32> to vector<5x8xf32>
    %235 = vector.extract_strided_slice %224 {offsets = [0, 16], sizes = [5, 8], strides = [1, 1]} : vector<5x32xf32> to vector<5x8xf32>
    %cst_108 = arith.constant dense<0.000000e+00> : vector<5x5xf32>
    %236 = tpu.matmul %234, %235, %cst_108 {dimension_numbers = #tpu.dot_dimension_numbers<[1], [1], [0], [0], [0, 0, 1, 0], [], []>} : vector<5x8xf32>, vector<5x8xf32>, vector<5x5xf32> -> vector<5x5xf32>
    %237 = vector.extract_strided_slice %225 {offsets = [0, 16], sizes = [5, 8], strides = [1, 1]} : vector<5x32xf32> to vector<5x8xf32>
    %238 = vector.extract_strided_slice %223 {offsets = [0, 24], sizes = [5, 8], strides = [1, 1]} : vector<5x32xf32> to vector<5x8xf32>
    %239 = vector.extract_strided_slice %224 {offsets = [0, 24], sizes = [5, 8], strides = [1, 1]} : vector<5x32xf32> to vector<5x8xf32>
    %cst_109 = arith.constant dense<0.000000e+00> : vector<5x5xf32>
    %240 = tpu.matmul %238, %239, %cst_109 {dimension_numbers = #tpu.dot_dimension_numbers<[1], [1], [0], [0], [0, 0, 1, 0], [], []>} : vector<5x8xf32>, vector<5x8xf32>, vector<5x5xf32> -> vector<5x5xf32>
    %241 = vector.extract_strided_slice %225 {offsets = [0, 24], sizes = [5, 8], strides = [1, 1]} : vector<5x32xf32> to vector<5x8xf32>
    %242 = vector.extract_strided_slice %220 {offsets = [5, 0], sizes = [5, 32], strides = [1, 1]} : vector<10x32xf32> to vector<5x32xf32>
    %243 = vector.extract_strided_slice %221 {offsets = [5, 0], sizes = [5, 32], strides = [1, 1]} : vector<10x32xf32> to vector<5x32xf32>
    %244 = vector.extract_strided_slice %222 {offsets = [5, 0], sizes = [5, 32], strides = [1, 1]} : vector<10x32xf32> to vector<5x32xf32>
    %245 = vector.extract_strided_slice %242 {offsets = [0, 0], sizes = [5, 8], strides = [1, 1]} : vector<5x32xf32> to vector<5x8xf32>
    %246 = vector.extract_strided_slice %243 {offsets = [0, 0], sizes = [5, 8], strides = [1, 1]} : vector<5x32xf32> to vector<5x8xf32>
    %cst_110 = arith.constant dense<0.000000e+00> : vector<5x5xf32>
    %247 = tpu.matmul %245, %246, %cst_110 {dimension_numbers = #tpu.dot_dimension_numbers<[1], [1], [0], [0], [0, 0, 1, 0], [], []>} : vector<5x8xf32>, vector<5x8xf32>, vector<5x5xf32> -> vector<5x5xf32>
    %248 = vector.extract_strided_slice %244 {offsets = [0, 0], sizes = [5, 8], strides = [1, 1]} : vector<5x32xf32> to vector<5x8xf32>
    %249 = vector.extract_strided_slice %242 {offsets = [0, 8], sizes = [5, 8], strides = [1, 1]} : vector<5x32xf32> to vector<5x8xf32>
    %250 = vector.extract_strided_slice %243 {offsets = [0, 8], sizes = [5, 8], strides = [1, 1]} : vector<5x32xf32> to vector<5x8xf32>
    %cst_111 = arith.constant dense<0.000000e+00> : vector<5x5xf32>
    %251 = tpu.matmul %249, %250, %cst_111 {dimension_numbers = #tpu.dot_dimension_numbers<[1], [1], [0], [0], [0, 0, 1, 0], [], []>} : vector<5x8xf32>, vector<5x8xf32>, vector<5x5xf32> -> vector<5x5xf32>
    %252 = vector.extract_strided_slice %244 {offsets = [0, 8], sizes = [5, 8], strides = [1, 1]} : vector<5x32xf32> to vector<5x8xf32>
    %253 = vector.extract_strided_slice %242 {offsets = [0, 16], sizes = [5, 8], strides = [1, 1]} : vector<5x32xf32> to vector<5x8xf32>
    %254 = vector.extract_strided_slice %243 {offsets = [0, 16], sizes = [5, 8], strides = [1, 1]} : vector<5x32xf32> to vector<5x8xf32>
    %cst_112 = arith.constant dense<0.000000e+00> : vector<5x5xf32>
    %255 = tpu.matmul %253, %254, %cst_112 {dimension_numbers = #tpu.dot_dimension_numbers<[1], [1], [0], [0], [0, 0, 1, 0], [], []>} : vector<5x8xf32>, vector<5x8xf32>, vector<5x5xf32> -> vector<5x5xf32>
    %256 = vector.extract_strided_slice %244 {offsets = [0, 16], sizes = [5, 8], strides = [1, 1]} : vector<5x32xf32> to vector<5x8xf32>
    %257 = vector.extract_strided_slice %242 {offsets = [0, 24], sizes = [5, 8], strides = [1, 1]} : vector<5x32xf32> to vector<5x8xf32>
    %258 = vector.extract_strided_slice %243 {offsets = [0, 24], sizes = [5, 8], strides = [1, 1]} : vector<5x32xf32> to vector<5x8xf32>
    %cst_113 = arith.constant dense<0.000000e+00> : vector<5x5xf32>
    %259 = tpu.matmul %257, %258, %cst_113 {dimension_numbers = #tpu.dot_dimension_numbers<[1], [1], [0], [0], [0, 0, 1, 0], [], []>} : vector<5x8xf32>, vector<5x8xf32>, vector<5x5xf32> -> vector<5x5xf32>
    %260 = vector.extract_strided_slice %244 {offsets = [0, 24], sizes = [5, 8], strides = [1, 1]} : vector<5x32xf32> to vector<5x8xf32>
    %261 = tpu.concatenate %228, %232, %236, %240, %247, %251, %255, %259 in 0 : vector<5x5xf32>, vector<5x5xf32>, vector<5x5xf32>, vector<5x5xf32>, vector<5x5xf32>, vector<5x5xf32>, vector<5x5xf32>, vector<5x5xf32> -> vector<40x5xf32>
    %cst_114 = arith.constant dense<0xFF800000> : vector<40xf32>
    %262 = vector.multi_reduction <maximumf>, %261, %cst_114 [1] : vector<40x5xf32> to vector<40xf32>
    %263 = vector.shape_cast %262 : vector<40xf32> to vector<40x1xf32>
    %264 = vector.broadcast %263 : vector<40x1xf32> to vector<40x5xf32>
    %265 = arith.subf %261, %264 : vector<40x5xf32>
    %266 = math.exp %265 : vector<40x5xf32>
    %cst_115 = arith.constant dense<0.000000e+00> : vector<40xf32>
    %267 = vector.multi_reduction <add>, %266, %cst_115 [1] : vector<40x5xf32> to vector<40xf32>
    %268 = vector.shape_cast %267 : vector<40xf32> to vector<40x1xf32>
    %269 = vector.broadcast %268 : vector<40x1xf32> to vector<40x5xf32>
    %270 = arith.divf %266, %269 : vector<40x5xf32>
    %271 = vector.extract_strided_slice %270 {offsets = [0, 0], sizes = [5, 5], strides = [1, 1]} : vector<40x5xf32> to vector<5x5xf32>
    %cst_116 = arith.constant dense<0.000000e+00> : vector<5x8xf32>
    %272 = tpu.matmul %271, %229, %cst_116 {dimension_numbers = #tpu.dot_dimension_numbers<[1], [0], [0], [1], [0, 0, 1, 1], [], []>} : vector<5x5xf32>, vector<5x8xf32>, vector<5x8xf32> -> vector<5x8xf32>
    %273 = vector.extract_strided_slice %270 {offsets = [5, 0], sizes = [5, 5], strides = [1, 1]} : vector<40x5xf32> to vector<5x5xf32>
    %cst_117 = arith.constant dense<0.000000e+00> : vector<5x8xf32>
    %274 = tpu.matmul %273, %233, %cst_117 {dimension_numbers = #tpu.dot_dimension_numbers<[1], [0], [0], [1], [0, 0, 1, 1], [], []>} : vector<5x5xf32>, vector<5x8xf32>, vector<5x8xf32> -> vector<5x8xf32>
    %275 = vector.extract_strided_slice %270 {offsets = [10, 0], sizes = [5, 5], strides = [1, 1]} : vector<40x5xf32> to vector<5x5xf32>
    %cst_118 = arith.constant dense<0.000000e+00> : vector<5x8xf32>
    %276 = tpu.matmul %275, %237, %cst_118 {dimension_numbers = #tpu.dot_dimension_numbers<[1], [0], [0], [1], [0, 0, 1, 1], [], []>} : vector<5x5xf32>, vector<5x8xf32>, vector<5x8xf32> -> vector<5x8xf32>
    %277 = vector.extract_strided_slice %270 {offsets = [15, 0], sizes = [5, 5], strides = [1, 1]} : vector<40x5xf32> to vector<5x5xf32>
    %cst_119 = arith.constant dense<0.000000e+00> : vector<5x8xf32>
    %278 = tpu.matmul %277, %241, %cst_119 {dimension_numbers = #tpu.dot_dimension_numbers<[1], [0], [0], [1], [0, 0, 1, 1], [], []>} : vector<5x5xf32>, vector<5x8xf32>, vector<5x8xf32> -> vector<5x8xf32>
    %279 = tpu.concatenate %272, %274, %276, %278 in 1 : vector<5x8xf32>, vector<5x8xf32>, vector<5x8xf32>, vector<5x8xf32> -> vector<5x32xf32>
    %280 = vector.extract_strided_slice %270 {offsets = [20, 0], sizes = [5, 5], strides = [1, 1]} : vector<40x5xf32> to vector<5x5xf32>
    %cst_120 = arith.constant dense<0.000000e+00> : vector<5x8xf32>
    %281 = tpu.matmul %280, %248, %cst_120 {dimension_numbers = #tpu.dot_dimension_numbers<[1], [0], [0], [1], [0, 0, 1, 1], [], []>} : vector<5x5xf32>, vector<5x8xf32>, vector<5x8xf32> -> vector<5x8xf32>
    %282 = vector.extract_strided_slice %270 {offsets = [25, 0], sizes = [5, 5], strides = [1, 1]} : vector<40x5xf32> to vector<5x5xf32>
    %cst_121 = arith.constant dense<0.000000e+00> : vector<5x8xf32>
    %283 = tpu.matmul %282, %252, %cst_121 {dimension_numbers = #tpu.dot_dimension_numbers<[1], [0], [0], [1], [0, 0, 1, 1], [], []>} : vector<5x5xf32>, vector<5x8xf32>, vector<5x8xf32> -> vector<5x8xf32>
    %284 = vector.extract_strided_slice %270 {offsets = [30, 0], sizes = [5, 5], strides = [1, 1]} : vector<40x5xf32> to vector<5x5xf32>
    %cst_122 = arith.constant dense<0.000000e+00> : vector<5x8xf32>
    %285 = tpu.matmul %284, %256, %cst_122 {dimension_numbers = #tpu.dot_dimension_numbers<[1], [0], [0], [1], [0, 0, 1, 1], [], []>} : vector<5x5xf32>, vector<5x8xf32>, vector<5x8xf32> -> vector<5x8xf32>
    %286 = vector.extract_strided_slice %270 {offsets = [35, 0], sizes = [5, 5], strides = [1, 1]} : vector<40x5xf32> to vector<5x5xf32>
    %cst_123 = arith.constant dense<0.000000e+00> : vector<5x8xf32>
    %287 = tpu.matmul %286, %260, %cst_123 {dimension_numbers = #tpu.dot_dimension_numbers<[1], [0], [0], [1], [0, 0, 1, 1], [], []>} : vector<5x5xf32>, vector<5x8xf32>, vector<5x8xf32> -> vector<5x8xf32>
    %288 = tpu.concatenate %281, %283, %285, %287 in 1 : vector<5x8xf32>, vector<5x8xf32>, vector<5x8xf32>, vector<5x8xf32> -> vector<5x32xf32>
    %289 = tpu.concatenate %279, %288 in 0 : vector<5x32xf32>, vector<5x32xf32> -> vector<10x32xf32>
    %c1_124 = arith.constant 1 : index
    %c0_125 = arith.constant 0 : index
    %c0_126 = arith.constant 0 : index
    %290 = vector.load %arg11[%c1_124, %c0_125, %c0_126] : memref<2x32x32xf32, #tpu.memory_space<vmem>>, vector<1x32x32xf32>
    %291 = vector.shape_cast %290 : vector<1x32x32xf32> to vector<32x32xf32>
    %cst_127 = arith.constant dense<0.000000e+00> : vector<10x32xf32>
    %292 = tpu.matmul %289, %291, %cst_127 {dimension_numbers = #tpu.dot_dimension_numbers<[1], [0], [0], [1], [0, 0, 1, 1], [], []>} : vector<10x32xf32>, vector<32x32xf32>, vector<10x32xf32> -> vector<10x32xf32>
    %c1_128 = arith.constant 1 : index
    %c0_129 = arith.constant 0 : index
    %c0_130 = arith.constant 0 : index
    %293 = vector.load %arg12[%c1_128, %c0_129, %c0_130] : memref<2x1x32xf32, #tpu.memory_space<vmem>>, vector<1x1x32xf32>
    %294 = vector.shape_cast %293 : vector<1x1x32xf32> to vector<1x32xf32>
    %295 = vector.broadcast %294 : vector<1x32xf32> to vector<10x32xf32>
    %296 = arith.addf %292, %295 : vector<10x32xf32>
    %297 = arith.addf %212, %296 : vector<10x32xf32>
    %c1_131 = arith.constant 1 : index
    %c0_132 = arith.constant 0 : index
    %c0_133 = arith.constant 0 : index
    %298 = vector.load %arg13[%c1_131, %c0_132, %c0_133] : memref<2x1x32xf32, #tpu.memory_space<vmem>>, vector<1x1x32xf32>
    %299 = vector.shape_cast %298 : vector<1x1x32xf32> to vector<1x32xf32>
    %c1_134 = arith.constant 1 : index
    %c0_135 = arith.constant 0 : index
    %c0_136 = arith.constant 0 : index
    %300 = vector.load %arg14[%c1_134, %c0_135, %c0_136] : memref<2x1x32xf32, #tpu.memory_space<vmem>>, vector<1x1x32xf32>
    %301 = vector.shape_cast %300 : vector<1x1x32xf32> to vector<1x32xf32>
    %cst_137 = arith.constant dense<0.000000e+00> : vector<10xf32>
    %302 = vector.multi_reduction <add>, %297, %cst_137 [1] : vector<10x32xf32> to vector<10xf32>
    %303 = vector.shape_cast %302 : vector<10xf32> to vector<10x1xf32>
    %cst_138 = arith.constant 3.200000e+01 : f32
    %304 = vector.broadcast %cst_138 : f32 to vector<10x1xf32>
    %305 = arith.divf %303, %304 : vector<10x1xf32>
    %306 = vector.broadcast %305 : vector<10x1xf32> to vector<10x32xf32>
    %307 = arith.subf %297, %306 : vector<10x32xf32>
    %308 = arith.mulf %307, %307 : vector<10x32xf32>
    %cst_139 = arith.constant dense<0.000000e+00> : vector<10xf32>
    %309 = vector.multi_reduction <add>, %308, %cst_139 [1] : vector<10x32xf32> to vector<10xf32>
    %310 = vector.shape_cast %309 : vector<10xf32> to vector<10x1xf32>
    %cst_140 = arith.constant 3.200000e+01 : f32
    %311 = vector.broadcast %cst_140 : f32 to vector<10x1xf32>
    %312 = arith.divf %310, %311 : vector<10x1xf32>
    %cst_141 = arith.constant 9.99999974E-6 : f32
    %313 = vector.broadcast %cst_141 : f32 to vector<10x1xf32>
    %314 = arith.addf %312, %313 : vector<10x1xf32>
    %315 = math.rsqrt %314 : vector<10x1xf32>
    %316 = vector.broadcast %315 : vector<10x1xf32> to vector<10x32xf32>
    %317 = arith.mulf %307, %316 : vector<10x32xf32>
    %318 = vector.broadcast %299 : vector<1x32xf32> to vector<10x32xf32>
    %319 = arith.mulf %317, %318 : vector<10x32xf32>
    %320 = vector.broadcast %301 : vector<1x32xf32> to vector<10x32xf32>
    %321 = arith.addf %319, %320 : vector<10x32xf32>
    %c1_142 = arith.constant 1 : index
    %c0_143 = arith.constant 0 : index
    %c0_144 = arith.constant 0 : index
    %322 = vector.load %arg15[%c1_142, %c0_143, %c0_144] : memref<2x32x128xf32, #tpu.memory_space<vmem>>, vector<1x32x128xf32>
    %323 = vector.shape_cast %322 : vector<1x32x128xf32> to vector<32x128xf32>
    %cst_145 = arith.constant dense<0.000000e+00> : vector<10x128xf32>
    %324 = tpu.matmul %321, %323, %cst_145 {dimension_numbers = #tpu.dot_dimension_numbers<[1], [0], [0], [1], [0, 0, 1, 1], [], []>} : vector<10x32xf32>, vector<32x128xf32>, vector<10x128xf32> -> vector<10x128xf32>
    %c1_146 = arith.constant 1 : index
    %c0_147 = arith.constant 0 : index
    %c0_148 = arith.constant 0 : index
    %325 = vector.load %arg16[%c1_146, %c0_147, %c0_148] : memref<2x1x128xf32, #tpu.memory_space<vmem>>, vector<1x1x128xf32>
    %326 = vector.shape_cast %325 : vector<1x1x128xf32> to vector<1x128xf32>
    %327 = vector.broadcast %326 : vector<1x128xf32> to vector<10x128xf32>
    %328 = arith.addf %324, %327 : vector<10x128xf32>
    %cst_149 = arith.constant 0.000000e+00 : f32
    %329 = vector.broadcast %cst_149 : f32 to vector<10x128xf32>
    %330 = arith.maximumf %328, %329 : vector<10x128xf32>
    %c1_150 = arith.constant 1 : index
    %c0_151 = arith.constant 0 : index
    %c0_152 = arith.constant 0 : index
    %331 = vector.load %arg17[%c1_150, %c0_151, %c0_152] : memref<2x128x32xf32, #tpu.memory_space<vmem>>, vector<1x128x32xf32>
    %332 = vector.shape_cast %331 : vector<1x128x32xf32> to vector<128x32xf32>
    %cst_153 = arith.constant dense<0.000000e+00> : vector<10x32xf32>
    %333 = tpu.matmul %330, %332, %cst_153 {dimension_numbers = #tpu.dot_dimension_numbers<[1], [0], [0], [1], [0, 0, 1, 1], [], []>} : vector<10x128xf32>, vector<128x32xf32>, vector<10x32xf32> -> vector<10x32xf32>
    %c1_154 = arith.constant 1 : index
    %c0_155 = arith.constant 0 : index
    %c0_156 = arith.constant 0 : index
    %334 = vector.load %arg18[%c1_154, %c0_155, %c0_156] : memref<2x1x32xf32, #tpu.memory_space<vmem>>, vector<1x1x32xf32>
    %335 = vector.shape_cast %334 : vector<1x1x32xf32> to vector<1x32xf32>
    %336 = vector.broadcast %335 : vector<1x32xf32> to vector<10x32xf32>
    %337 = arith.addf %333, %336 : vector<10x32xf32>
    %338 = arith.addf %321, %337 : vector<10x32xf32>
    %c1_157 = arith.constant 1 : index
    %c0_158 = arith.constant 0 : index
    %c0_159 = arith.constant 0 : index
    %339 = vector.load %arg19[%c1_157, %c0_158, %c0_159] : memref<2x1x32xf32, #tpu.memory_space<vmem>>, vector<1x1x32xf32>
    %340 = vector.shape_cast %339 : vector<1x1x32xf32> to vector<1x32xf32>
    %c1_160 = arith.constant 1 : index
    %c0_161 = arith.constant 0 : index
    %c0_162 = arith.constant 0 : index
    %341 = vector.load %arg20[%c1_160, %c0_161, %c0_162] : memref<2x1x32xf32, #tpu.memory_space<vmem>>, vector<1x1x32xf32>
    %342 = vector.shape_cast %341 : vector<1x1x32xf32> to vector<1x32xf32>
    %cst_163 = arith.constant dense<0.000000e+00> : vector<10xf32>
    %343 = vector.multi_reduction <add>, %338, %cst_163 [1] : vector<10x32xf32> to vector<10xf32>
    %344 = vector.shape_cast %343 : vector<10xf32> to vector<10x1xf32>
    %cst_164 = arith.constant 3.200000e+01 : f32
    %345 = vector.broadcast %cst_164 : f32 to vector<10x1xf32>
    %346 = arith.divf %344, %345 : vector<10x1xf32>
    %347 = vector.broadcast %346 : vector<10x1xf32> to vector<10x32xf32>
    %348 = arith.subf %338, %347 : vector<10x32xf32>
    %349 = arith.mulf %348, %348 : vector<10x32xf32>
    %cst_165 = arith.constant dense<0.000000e+00> : vector<10xf32>
    %350 = vector.multi_reduction <add>, %349, %cst_165 [1] : vector<10x32xf32> to vector<10xf32>
    %351 = vector.shape_cast %350 : vector<10xf32> to vector<10x1xf32>
    %cst_166 = arith.constant 3.200000e+01 : f32
    %352 = vector.broadcast %cst_166 : f32 to vector<10x1xf32>
    %353 = arith.divf %351, %352 : vector<10x1xf32>
    %cst_167 = arith.constant 9.99999974E-6 : f32
    %354 = vector.broadcast %cst_167 : f32 to vector<10x1xf32>
    %355 = arith.addf %353, %354 : vector<10x1xf32>
    %356 = math.rsqrt %355 : vector<10x1xf32>
    %357 = vector.broadcast %356 : vector<10x1xf32> to vector<10x32xf32>
    %358 = arith.mulf %348, %357 : vector<10x32xf32>
    %359 = vector.broadcast %340 : vector<1x32xf32> to vector<10x32xf32>
    %360 = arith.mulf %358, %359 : vector<10x32xf32>
    %361 = vector.broadcast %342 : vector<1x32xf32> to vector<10x32xf32>
    %362 = arith.addf %360, %361 : vector<10x32xf32>
    %363 = vector.extract_strided_slice %362 {offsets = [0, 0], sizes = [5, 32], strides = [1, 1]} : vector<10x32xf32> to vector<5x32xf32>
    %cst_168 = arith.constant dense<0.000000e+00> : vector<32xf32>
    %364 = vector.multi_reduction <add>, %363, %cst_168 [0] : vector<5x32xf32> to vector<32xf32>
    %365 = vector.shape_cast %364 : vector<32xf32> to vector<1x32xf32>
    %cst_169 = arith.constant 5.000000e+00 : f32
    %366 = vector.broadcast %cst_169 : f32 to vector<1x32xf32>
    %367 = arith.divf %365, %366 : vector<1x32xf32>
    %368 = vector.extract_strided_slice %362 {offsets = [5, 0], sizes = [5, 32], strides = [1, 1]} : vector<10x32xf32> to vector<5x32xf32>
    %cst_170 = arith.constant dense<0.000000e+00> : vector<32xf32>
    %369 = vector.multi_reduction <add>, %368, %cst_170 [0] : vector<5x32xf32> to vector<32xf32>
    %370 = vector.shape_cast %369 : vector<32xf32> to vector<1x32xf32>
    %cst_171 = arith.constant 5.000000e+00 : f32
    %371 = vector.broadcast %cst_171 : f32 to vector<1x32xf32>
    %372 = arith.divf %370, %371 : vector<1x32xf32>
    %373 = tpu.concatenate %367, %372 in 0 : vector<1x32xf32>, vector<1x32xf32> -> vector<2x32xf32>
    %c0_172 = arith.constant 0 : index
    %c0_173 = arith.constant 0 : index
    %374 = vector.load %arg21[%c0_172, %c0_173] : memref<32x2xf32, #tpu.memory_space<vmem>>, vector<32x2xf32>
    %cst_174 = arith.constant dense<0.000000e+00> : vector<2x2xf32>
    %375 = tpu.matmul %373, %374, %cst_174 {dimension_numbers = #tpu.dot_dimension_numbers<[1], [0], [0], [1], [0, 0, 1, 1], [], []>} : vector<2x32xf32>, vector<32x2xf32>, vector<2x2xf32> -> vector<2x2xf32>
    %c0_175 = arith.constant 0 : index
    %c0_176 = arith.constant 0 : index
    %376 = vector.load %arg22[%c0_175, %c0_176] : memref<1x2xf32, #tpu.memory_space<vmem>>, vector<1x2xf32>
    %377 = vector.broadcast %376 : vector<1x2xf32> to vector<2x2xf32>
    %378 = arith.addf %375, %377 : vector<2x2xf32>
    %c0_177 = arith.constant 0 : index
    %c0_178 = arith.constant 0 : index
    %379 = vector.load %arg23[%c0_177, %c0_178] : memref<2x2xf32, #tpu.memory_space<vmem>>, vector<2x2xf32>
    tpu.vector_store %arg23[%c0_177, %c0_178], %378 {strides = array<i32>} : memref<2x2xf32, #tpu.memory_space<vmem>>, vector<2x2xf32>,
    return
  }
  func.func @transform_0(%arg0: i32, %arg1: memref<2x2xi32, #tpu.memory_space<smem>>) -> (i32, i32) {
    %c0_i32 = arith.constant 0 : i32
    %c0_i32_0 = arith.constant 0 : i32
    %c0_i32_1 = arith.constant 0 : i32
    return %c0_i32, %c0_i32_0 : i32, i32
  }
  func.func @transform_1(%arg0: i32, %arg1: memref<2x2xi32, #tpu.memory_space<smem>>) -> (i32, i32) {
    %c0_i32 = arith.constant 0 : i32
    %c0_i32_0 = arith.constant 0 : i32
    %c0_i32_1 = arith.constant 0 : i32
    return %c0_i32, %c0_i32_0 : i32, i32
  }
  func.func @transform_2(%arg0: i32, %arg1: memref<2x2xi32, #tpu.memory_space<smem>>) -> (i32, i32) {
    %c0_i32 = arith.constant 0 : i32
    %c0_i32_0 = arith.constant 0 : i32
    %c0_i32_1 = arith.constant 0 : i32
    return %c0_i32, %c0_i32_0 : i32, i32
  }
  func.func @transform_3(%arg0: i32, %arg1: memref<2x2xi32, #tpu.memory_space<smem>>) -> (i32, i32, i32) {
    %c0_i32 = arith.constant 0 : i32
    %c0_i32_0 = arith.constant 0 : i32
    %c0_i32_1 = arith.constant 0 : i32
    %c0_i32_2 = arith.constant 0 : i32
    return %c0_i32, %c0_i32_0, %c0_i32_1 : i32, i32, i32
  }
  func.func @transform_4(%arg0: i32, %arg1: memref<2x2xi32, #tpu.memory_space<smem>>) -> (i32, i32, i32) {
    %c0_i32 = arith.constant 0 : i32
    %c0_i32_0 = arith.constant 0 : i32
    %c0_i32_1 = arith.constant 0 : i32
    %c0_i32_2 = arith.constant 0 : i32
    return %c0_i32, %c0_i32_0, %c0_i32_1 : i32, i32, i32
  }
  func.func @transform_5(%arg0: i32, %arg1: memref<2x2xi32, #tpu.memory_space<smem>>) -> (i32, i32) {
    %c0_i32 = arith.constant 0 : i32
    %c0_i32_0 = arith.constant 0 : i32
    %c0_i32_1 = arith.constant 0 : i32
    return %c0_i32, %c0_i32_0 : i32, i32
  }
  func.func @transform_6(%arg0: i32, %arg1: memref<2x2xi32, #tpu.memory_space<smem>>) -> (i32, i32) {
    %c0_i32 = arith.constant 0 : i32
    %c0_i32_0 = arith.constant 0 : i32
    %c0_i32_1 = arith.constant 0 : i32
    return %c0_i32, %c0_i32_0 : i32, i32
  }
  func.func @transform_7(%arg0: i32, %arg1: memref<2x2xi32, #tpu.memory_space<smem>>) -> (i32, i32, i32) {
    %c0_i32 = arith.constant 0 : i32
    %c0_i32_0 = arith.constant 0 : i32
    %c0_i32_1 = arith.constant 0 : i32
    %c0_i32_2 = arith.constant 0 : i32
    return %c0_i32, %c0_i32_0, %c0_i32_1 : i32, i32, i32
  }
  func.func @transform_8(%arg0: i32, %arg1: memref<2x2xi32, #tpu.memory_space<smem>>) -> (i32, i32, i32) {
    %c0_i32 = arith.constant 0 : i32
    %c0_i32_0 = arith.constant 0 : i32
    %c0_i32_1 = arith.constant 0 : i32
    %c0_i32_2 = arith.constant 0 : i32
    return %c0_i32, %c0_i32_0, %c0_i32_1 : i32, i32, i32
  }
  func.func @transform_9(%arg0: i32, %arg1: memref<2x2xi32, #tpu.memory_space<smem>>) -> (i32, i32, i32) {
    %c0_i32 = arith.constant 0 : i32
    %c0_i32_0 = arith.constant 0 : i32
    %c0_i32_1 = arith.constant 0 : i32
    %c0_i32_2 = arith.constant 0 : i32
    return %c0_i32, %c0_i32_0, %c0_i32_1 : i32, i32, i32
  }
  func.func @transform_10(%arg0: i32, %arg1: memref<2x2xi32, #tpu.memory_space<smem>>) -> (i32, i32, i32) {
    %c0_i32 = arith.constant 0 : i32
    %c0_i32_0 = arith.constant 0 : i32
    %c0_i32_1 = arith.constant 0 : i32
    %c0_i32_2 = arith.constant 0 : i32
    return %c0_i32, %c0_i32_0, %c0_i32_1 : i32, i32, i32
  }
  func.func @transform_11(%arg0: i32, %arg1: memref<2x2xi32, #tpu.memory_space<smem>>) -> (i32, i32, i32) {
    %c0_i32 = arith.constant 0 : i32
    %c0_i32_0 = arith.constant 0 : i32
    %c0_i32_1 = arith.constant 0 : i32
    %c0_i32_2 = arith.constant 0 : i32
    return %c0_i32, %c0_i32_0, %c0_i32_1 : i32, i32, i32
  }
  func.func @transform_12(%arg0: i32, %arg1: memref<2x2xi32, #tpu.memory_space<smem>>) -> (i32, i32, i32) {
    %c0_i32 = arith.constant 0 : i32
    %c0_i32_0 = arith.constant 0 : i32
    %c0_i32_1 = arith.constant 0 : i32
    %c0_i32_2 = arith.constant 0 : i32
    return %c0_i32, %c0_i32_0, %c0_i32_1 : i32, i32, i32
  }
  func.func @transform_13(%arg0: i32, %arg1: memref<2x2xi32, #tpu.memory_space<smem>>) -> (i32, i32, i32) {
    %c0_i32 = arith.constant 0 : i32
    %c0_i32_0 = arith.constant 0 : i32
    %c0_i32_1 = arith.constant 0 : i32
    %c0_i32_2 = arith.constant 0 : i32
    return %c0_i32, %c0_i32_0, %c0_i32_1 : i32, i32, i32
  }
  func.func @transform_14(%arg0: i32, %arg1: memref<2x2xi32, #tpu.memory_space<smem>>) -> (i32, i32, i32) {
    %c0_i32 = arith.constant 0 : i32
    %c0_i32_0 = arith.constant 0 : i32
    %c0_i32_1 = arith.constant 0 : i32
    %c0_i32_2 = arith.constant 0 : i32
    return %c0_i32, %c0_i32_0, %c0_i32_1 : i32, i32, i32
  }
  func.func @transform_15(%arg0: i32, %arg1: memref<2x2xi32, #tpu.memory_space<smem>>) -> (i32, i32, i32) {
    %c0_i32 = arith.constant 0 : i32
    %c0_i32_0 = arith.constant 0 : i32
    %c0_i32_1 = arith.constant 0 : i32
    %c0_i32_2 = arith.constant 0 : i32
    return %c0_i32, %c0_i32_0, %c0_i32_1 : i32, i32, i32
  }
  func.func @transform_16(%arg0: i32, %arg1: memref<2x2xi32, #tpu.memory_space<smem>>) -> (i32, i32, i32) {
    %c0_i32 = arith.constant 0 : i32
    %c0_i32_0 = arith.constant 0 : i32
    %c0_i32_1 = arith.constant 0 : i32
    %c0_i32_2 = arith.constant 0 : i32
    return %c0_i32, %c0_i32_0, %c0_i32_1 : i32, i32, i32
  }
  func.func @transform_17(%arg0: i32, %arg1: memref<2x2xi32, #tpu.memory_space<smem>>) -> (i32, i32, i32) {
    %c0_i32 = arith.constant 0 : i32
    %c0_i32_0 = arith.constant 0 : i32
    %c0_i32_1 = arith.constant 0 : i32
    %c0_i32_2 = arith.constant 0 : i32
    return %c0_i32, %c0_i32_0, %c0_i32_1 : i32, i32, i32
  }
  func.func @transform_18(%arg0: i32, %arg1: memref<2x2xi32, #tpu.memory_space<smem>>) -> (i32, i32, i32) {
    %c0_i32 = arith.constant 0 : i32
    %c0_i32_0 = arith.constant 0 : i32
    %c0_i32_1 = arith.constant 0 : i32
    %c0_i32_2 = arith.constant 0 : i32
    return %c0_i32, %c0_i32_0, %c0_i32_1 : i32, i32, i32
  }
  func.func @transform_19(%arg0: i32, %arg1: memref<2x2xi32, #tpu.memory_space<smem>>) -> (i32, i32) {
    %c0_i32 = arith.constant 0 : i32
    %c0_i32_0 = arith.constant 0 : i32
    %c0_i32_1 = arith.constant 0 : i32
    return %c0_i32, %c0_i32_0 : i32, i32
  }
  func.func @transform_20(%arg0: i32, %arg1: memref<2x2xi32, #tpu.memory_space<smem>>) -> (i32, i32) {
    %c0_i32 = arith.constant 0 : i32
    %c0_i32_0 = arith.constant 0 : i32
    %c0_i32_1 = arith.constant 0 : i32
    return %c0_i32, %c0_i32_0 : i32, i32
  }
  func.func @transform_21(%arg0: i32, %arg1: memref<2x2xi32, #tpu.memory_space<smem>>) -> (i32, i32) {
    %c0_i32 = arith.constant 0 : i32
    %c0_i32_0 = arith.constant 0 : i32
    %c0_i32_1 = arith.constant 0 : i32
    return %c0_i32, %c0_i32_0 : i32, i32
  }
}

</mosaic_0001>

<llo_original>
// kernel: tpu_custom_call.1
$region0: #{tpu_custom_call.1}
  #allocation0 [shape = 'u32[]', space=smem, size = 0x4, offset = 0x4, fixed_abs, tag = 'smem constant byte address 0x4 - core index']
  #allocation1 [shape = 'u32[144,128]{1,0:T(1,128)}', space=vmem, size = 0x12000, scoped, tag = 'internal scratch']
  #allocation2 [shape = 's32[1]{0}', space=sflag, size = 0x4, scoped, tag = 'scoped memory for tpu_custom_call.1']
  #allocation3 [shape = 'u8[1024]{0}', space=smem, size = 0x400, scoped, tag = 'prefetched SMEM operand 0']
  %s0 = inlined_call_operand.vmem [shape: s32[2,2], index: 0, kind: input, shape index: {}]
  %s1 = inlined_call_operand.vmem [shape: f32[2,3], index: 1, kind: input, shape index: {}]
  %s2 = inlined_call_operand.vmem [shape: f32[3,32], index: 2, kind: input, shape index: {}]
  %s3 = inlined_call_operand.vmem [shape: f32[3,32], index: 3, kind: input, shape index: {}]
  %s4 = inlined_call_operand.vmem [shape: f32[7,2,6], index: 4, kind: input, shape index: {}]
  %s5 = inlined_call_operand.vmem [shape: f32[2,6,32], index: 5, kind: input, shape index: {}]
  %s6 = inlined_call_operand.vmem [shape: f32[2,32], index: 6, kind: input, shape index: {}]
  %s7 = inlined_call_operand.vmem [shape: f32[5,32], index: 7, kind: input, shape index: {}]
  %s8 = inlined_call_operand.vmem [shape: f32[2,32,96], index: 8, kind: input, shape index: {}]
  %s9 = inlined_call_operand.vmem [shape: f32[2,1,96], index: 9, kind: input, shape index: {}]
  %s10 = inlined_call_operand.vmem [shape: f32[2,32,32], index: 10, kind: input, shape index: {}]
  %s11 = inlined_call_operand.vmem [shape: f32[2,1,32], index: 11, kind: input, shape index: {}]
  %s12 = inlined_call_operand.vmem [shape: f32[2,1,32], index: 12, kind: input, shape index: {}]
  %s13 = inlined_call_operand.vmem [shape: f32[2,1,32], index: 13, kind: input, shape index: {}]
  %s14 = inlined_call_operand.vmem [shape: f32[2,32,128], index: 14, kind: input, shape index: {}]
  %s15 = inlined_call_operand.vmem [shape: f32[2,1,128], index: 15, kind: input, shape index: {}]
  %s16 = inlined_call_operand.vmem [shape: f32[2,128,32], index: 16, kind: input, shape index: {}]
  %s17 = inlined_call_operand.vmem [shape: f32[2,1,32], index: 17, kind: input, shape index: {}]
  %s18 = inlined_call_operand.vmem [shape: f32[2,1,32], index: 18, kind: input, shape index: {}]
  %s19 = inlined_call_operand.vmem [shape: f32[2,1,32], index: 19, kind: input, shape index: {}]
  %s20 = inlined_call_operand.vmem [shape: f32[32,2], index: 20, kind: input, shape index: {}]
  %s21 = inlined_call_operand.vmem [shape: f32[1,2], index: 21, kind: input, shape index: {}]
  %s22 = inlined_call_operand.hbm [shape: f32[2,2], index: 22, kind: output, shape index: {}]
  %s23 = sld [smem:[#allocation0]]
  $region94: #{tpu_custom_call.1} parent=0
    _
  %s25 = ssub.s32 1, %s23
  %s26 = scalar_select 0, %s25, %s23
  %s27 = sshll.u32 %s0, 4
  %s28 = int_to_ptr.vmem [resolvable:$true] %s27
  %30 = dma.vmem_to_smem %s28, 32, [#allocation3], [#allocation2]
  %31 = dma.done [#allocation2], 32
  %32 = sfence
  $region1: #{tpu_custom_call.1} parent=0
    #allocation4 [shape = 'u8[1024]{0}', space=vmem, size = 0x400, scoped, tag = 'output window, operand 0, single buffered']
    #allocation5 [shape = 's32[1]{0}', space=sflag, size = 0x4, scoped, tag = 'scoped memory for tpu_custom_call.1']
    %33 = vsyncpa [#allocation5], 0
    // Predicated region
    $region2: #{tpu_custom_call.1} parent=1 // pred_check
      _
    $region3: #{tpu_custom_call.1} parent=1 // pred_check_branch
      %35 = sbr.rel (0) target = $region5
    $region4: #{tpu_custom_call.1} parent=1 // pred_region
      _
    $region5: #{tpu_custom_call.1} parent=1 // pred_fallthru
      _
    // Predicated region
    $region6: #{tpu_custom_call.1} parent=1 // pred_check
      _
    $region7: #{tpu_custom_call.1} parent=1 // pred_check_branch
      %37 = sbr.rel (0) target = $region9
    $region8: #{tpu_custom_call.1} parent=1 // pred_region
      _
    $region9: #{tpu_custom_call.1} parent=1 // pred_fallthru
      _
    // Predicated region
    $region10: #{tpu_custom_call.1} parent=1 // pred_check
      _
    $region11: #{tpu_custom_call.1} parent=1 // pred_check_branch
      %39 = sbr.rel (0) target = $region13
    $region12: #{tpu_custom_call.1} parent=1 // pred_region
      _
    $region13: #{tpu_custom_call.1} parent=1 // pred_fallthru
      _
    // Predicated region
    $region14: #{tpu_custom_call.1} parent=1 // pred_check
      _
    $region15: #{tpu_custom_call.1} parent=1 // pred_check_branch
      %41 = sbr.rel (0) target = $region17
    $region16: #{tpu_custom_call.1} parent=1 // pred_region
      _
    $region17: #{tpu_custom_call.1} parent=1 // pred_fallthru
      _
    // Predicated region
    $region18: #{tpu_custom_call.1} parent=1 // pred_check
      _
    $region19: #{tpu_custom_call.1} parent=1 // pred_check_branch
      %43 = sbr.rel (0) target = $region21
    $region20: #{tpu_custom_call.1} parent=1 // pred_region
      _
    $region21: #{tpu_custom_call.1} parent=1 // pred_fallthru
      _
    // Predicated region
    $region22: #{tpu_custom_call.1} parent=1 // pred_check
      _
    $region23: #{tpu_custom_call.1} parent=1 // pred_check_branch
      %45 = sbr.rel (0) target = $region25
    $region24: #{tpu_custom_call.1} parent=1 // pred_region
      _
    $region25: #{tpu_custom_call.1} parent=1 // pred_fallthru
      _
    // Predicated region
    $region26: #{tpu_custom_call.1} parent=1 // pred_check
      _
    $region27: #{tpu_custom_call.1} parent=1 // pred_check_branch
      %47 = sbr.rel (0) target = $region29
    $region28: #{tpu_custom_call.1} parent=1 // pred_region
      _
    $region29: #{tpu_custom_call.1} parent=1 // pred_fallthru
      _
    // Predicated region
    $region30: #{tpu_custom_call.1} parent=1 // pred_check
      _
    $region31: #{tpu_custom_call.1} parent=1 // pred_check_branch
      %49 = sbr.rel (0) target = $region33
    $region32: #{tpu_custom_call.1} parent=1 // pred_region
      _
    $region33: #{tpu_custom_call.1} parent=1 // pred_fallthru
      _
    // Predicated region
    $region34: #{tpu_custom_call.1} parent=1 // pred_check
      _
    $region35: #{tpu_custom_call.1} parent=1 // pred_check_branch
      %51 = sbr.rel (0) target = $region37
    $region36: #{tpu_custom_call.1} parent=1 // pred_region
      _
    $region37: #{tpu_custom_call.1} parent=1 // pred_fallthru
      _
    // Predicated region
    $region38: #{tpu_custom_call.1} parent=1 // pred_check
      _
    $region39: #{tpu_custom_call.1} parent=1 // pred_check_branch
      %53 = sbr.rel (0) target = $region41
    $region40: #{tpu_custom_call.1} parent=1 // pred_region
      _
    $region41: #{tpu_custom_call.1} parent=1 // pred_fallthru
      _
    // Predicated region
    $region42: #{tpu_custom_call.1} parent=1 // pred_check
      _
    $region43: #{tpu_custom_call.1} parent=1 // pred_check_branch
      %55 = sbr.rel (0) target = $region45
    $region44: #{tpu_custom_call.1} parent=1 // pred_region
      _
    $region45: #{tpu_custom_call.1} parent=1 // pred_fallthru
      _
    // Predicated region
    $region46: #{tpu_custom_call.1} parent=1 // pred_check
      _
    $region47: #{tpu_custom_call.1} parent=1 // pred_check_branch
      %57 = sbr.rel (0) target = $region49
    $region48: #{tpu_custom_call.1} parent=1 // pred_region
      _
    $region49: #{tpu_custom_call.1} parent=1 // pred_fallthru
      _
    // Predicated region
    $region50: #{tpu_custom_call.1} parent=1 // pred_check
      _
    $region51: #{tpu_custom_call.1} parent=1 // pred_check_branch
      %59 = sbr.rel (0) target = $region53
    $region52: #{tpu_custom_call.1} parent=1 // pred_region
      _
    $region53: #{tpu_custom_call.1} parent=1 // pred_fallthru
      _
    // Predicated region
    $region54: #{tpu_custom_call.1} parent=1 // pred_check
      _
    $region55: #{tpu_custom_call.1} parent=1 // pred_check_branch
      %61 = sbr.rel (0) target = $region57
    $region56: #{tpu_custom_call.1} parent=1 // pred_region
      _
    $region57: #{tpu_custom_call.1} parent=1 // pred_fallthru
      _
    // Predicated region
    $region58: #{tpu_custom_call.1} parent=1 // pred_check
      _
    $region59: #{tpu_custom_call.1} parent=1 // pred_check_branch
      %63 = sbr.rel (0) target = $region61
    $region60: #{tpu_custom_call.1} parent=1 // pred_region
      _
    $region61: #{tpu_custom_call.1} parent=1 // pred_fallthru
      _
    // Predicated region
    $region62: #{tpu_custom_call.1} parent=1 // pred_check
      _
    $region63: #{tpu_custom_call.1} parent=1 // pred_check_branch
      %65 = sbr.rel (0) target = $region65
    $region64: #{tpu_custom_call.1} parent=1 // pred_region
      _
    $region65: #{tpu_custom_call.1} parent=1 // pred_fallthru
      _
    // Predicated region
    $region66: #{tpu_custom_call.1} parent=1 // pred_check
      _
    $region67: #{tpu_custom_call.1} parent=1 // pred_check_branch
      %67 = sbr.rel (0) target = $region69
    $region68: #{tpu_custom_call.1} parent=1 // pred_region
      _
    $region69: #{tpu_custom_call.1} parent=1 // pred_fallthru
      _
    // Predicated region
    $region70: #{tpu_custom_call.1} parent=1 // pred_check
      _
    $region71: #{tpu_custom_call.1} parent=1 // pred_check_branch
      %69 = sbr.rel (0) target = $region73
    $region72: #{tpu_custom_call.1} parent=1 // pred_region
      _
    $region73: #{tpu_custom_call.1} parent=1 // pred_fallthru
      _
    // Predicated region
    $region74: #{tpu_custom_call.1} parent=1 // pred_check
      _
    $region75: #{tpu_custom_call.1} parent=1 // pred_check_branch
      %71 = sbr.rel (0) target = $region77
    $region76: #{tpu_custom_call.1} parent=1 // pred_region
      _
    $region77: #{tpu_custom_call.1} parent=1 // pred_fallthru
      _
    // Predicated region
    $region78: #{tpu_custom_call.1} parent=1 // pred_check
      _
    $region79: #{tpu_custom_call.1} parent=1 // pred_check_branch
      %73 = sbr.rel (0) target = $region81
    $region80: #{tpu_custom_call.1} parent=1 // pred_region
      _
    $region81: #{tpu_custom_call.1} parent=1 // pred_fallthru
      _
    // Predicated region
    $region82: #{tpu_custom_call.1} parent=1 // pred_check
      _
    $region83: #{tpu_custom_call.1} parent=1 // pred_check_branch
      %75 = sbr.rel (0) target = $region85
    $region84: #{tpu_custom_call.1} parent=1 // pred_region
      _
    $region85: #{tpu_custom_call.1} parent=1 // pred_fallthru
      _
    %v76 = vld [vmem:[%s1] sm:$0x3]
    %v77 = vld [vmem:[%s2] sm:$0x7]
    %v78 = vld [vmem:[%s3] sm:$0x7]
    %v79 = vld [vmem:[%s5] sm:$0x3f]
    %v80 = vld [vmem:[%s5 + $0x8] sm:$0x3f]
    %v81 = vld [vmem:[%s6] sm:$0x3]
    %v82 = vld [vmem:[%s7] sm:$0x1f]
    %v83 = vlaneseq
    %v84 = vshrl.u32 %v83, 7
    %v85 = vsub.s32 0, %v84
    %v86 = vrot.slane %v76, %v85
    %88 = vbcast.lane.b32.xlu0 %v86, 256
    %v89 = vpop.permute.xlu0 %88
    %v90 = vlaneseq
    %v91 = vshrl.u32 %v90, 7
    %v92 = vsub.s32 1, %v91
    %v93 = vrot.slane %v76, %v92
    %95 = vbcast.lane.b32.xlu0 %v93, 256
    %v96 = vpop.permute.xlu0 %95
    %v97 = vmul.f32 %v89, %v77
    %v98 = vmul.f32 %v96, %v77
    %v99 = vadd.f32 %v97, %v78
    %v100 = vadd.f32 %v98, %v78
    %s101 = sld [smem:[#allocation3]]
    %s102 = smul.u32 %s101, 2
    %s103 = scalar_lea.vmem %s4, %s102
    %v104 = vld [vmem:[%s103] sm:$0x3]
    %vm105 = vcmask 48128
    %v107 = vsel %vm105, %v104, 0
    %vm109 = vcmask 1045504
    %v111 = vsel %vm109, %v79, 0
    %113 = vmatprep.subr.mxu0 0.0
    %114 = vmatpush1.msra.mxu0 %v111
    %115 = vmatprep.subr.mxu0 0.0
    %116 = vmatpush1.msra.mxu0 0.0
    %117 = vmatprep.subr.mxu0 0.0
    %118 = vmatpush1.msra.mxu0 0.0
    %119 = vmatprep.subr.mxu0 0.0
    %120 = vmatpush1.msra.mxu0 0.0
    %121 = vmatprep.subr.mxu0 0.0
    %122 = vmatpush1.msra.mxu0 0.0
    %123 = vmatprep.subr.mxu0 0.0
    %124 = vmatpush1.msra.mxu0 0.0
    %125 = vmatprep.subr.mxu0 0.0
    %126 = vmatpush1.msra.mxu0 0.0
    %127 = vmatprep.subr.mxu0 0.0
    %128 = vmatpush1.msra.mxu0 0.0
    %129 = vmatprep.subr.mxu0 0.0
    %130 = vmatpush1.msra.mxu0 0.0
    %131 = vmatprep.subr.mxu0 0.0
    %132 = vmatpush1.msra.mxu0 0.0
    %133 = vmatprep.subr.mxu0 0.0
    %134 = vmatpush1.msra.mxu0 0.0
    %135 = vmatprep.subr.mxu0 0.0
    %136 = vmatpush1.msra.mxu0 0.0
    %137 = vmatprep.subr.mxu0 0.0
    %138 = vmatpush1.msra.mxu0 0.0
    %139 = vmatprep.subr.mxu0 0.0
    %140 = vmatpush1.msra.mxu0 0.0
    %141 = vmatprep.subr.mxu0 0.0
    %142 = vmatpush1.msra.mxu0 0.0
    %143 = vmatprep.subr.mxu0 0.0
    %144 = vmatpush1.msra.mxu0 0.0
    %145 = vmatprep.subr.mxu0 0.0
    %146 = vmatpush1.msra.mxu0 0.0
    %147 = vmatprep.subr.mxu0 0.0
    %148 = vmatpush1.msra.mxu0 0.0
    %149 = vmatprep.subr.mxu0 0.0
    %150 = vmatpush1.msra.mxu0 0.0
    %151 = vmatprep.subr.mxu0 0.0
    %152 = vmatpush1.msra.mxu0 0.0
    %153 = vmatprep.subr.mxu0 0.0
    %154 = vmatpush1.msra.mxu0 0.0
    %155 = vmatprep.subr.mxu0 0.0
    %156 = vmatpush1.msra.mxu0 0.0
    %157 = vmatprep.subr.mxu0 0.0
    %158 = vmatpush1.msra.mxu0 0.0
    %159 = vmatprep.subr.mxu0 0.0
    %160 = vmatpush1.msra.mxu0 0.0
    %161 = vmatprep.subr.mxu0 0.0
    %162 = vmatpush1.msra.mxu0 0.0
    %163 = vmatprep.subr.mxu0 0.0
    %164 = vmatpush1.msra.mxu0 0.0
    %165 = vmatprep.subr.mxu0 0.0
    %166 = vmatpush1.msra.mxu0 0.0
    %167 = vmatprep.subr.mxu0 0.0
    %168 = vmatpush1.msra.mxu0 0.0
    %169 = vmatprep.subr.mxu0 0.0
    %170 = vmatpush1.msra.mxu0 0.0
    %171 = vmatprep.subr.mxu0 0.0
    %172 = vmatpush1.msra.mxu0 0.0
    %173 = vmatprep.subr.mxu0 0.0
    %174 = vmatpush1.msra.mxu0 0.0
    %175 = vmatprep.subr.mxu0 0.0
    %176 = vmatpush1.msra.mxu0 0.0
    %177 = vmatprep.mubr.f32.mxu0 0.0
    %178 = vmatmul.mubr.f32.gmra.mrb[0].mxu0 %v107
    %v179 = vpop.f32.mrb[0].mxu0
    %v180 = vadd.f32 %v81, %v179
    %v181 = vpop.f32.mrb[0].mxu0
    %182 = vdwg.mxu0
    %s183 = sld [smem:[#allocation3 + $0x1]]
    %s184 = smul.u32 %s183, 2
    %s185 = scalar_lea.vmem %s4, %s184
    %v186 = vld [vmem:[%s185] sm:$0x3]
    %v188 = vrot.slane %v186, 1
    %v190 = vrot.slane %v81, 1
    %v192 = vsel %vm105, %v188, 0
    %v195 = vsel %vm109, %v80, 0
    %197 = vmatprep.subr.mxu0 0.0
    %198 = vmatpush1.msra.mxu0 %v195
    %199 = vmatprep.subr.mxu0 0.0
    %200 = vmatpush1.msra.mxu0 0.0
    %201 = vmatprep.subr.mxu0 0.0
    %202 = vmatpush1.msra.mxu0 0.0
    %203 = vmatprep.subr.mxu0 0.0
    %204 = vmatpush1.msra.mxu0 0.0
    %205 = vmatprep.subr.mxu0 0.0
    %206 = vmatpush1.msra.mxu0 0.0
    %207 = vmatprep.subr.mxu0 0.0
    %208 = vmatpush1.msra.mxu0 0.0
    %209 = vmatprep.subr.mxu0 0.0
    %210 = vmatpush1.msra.mxu0 0.0
    %211 = vmatprep.subr.mxu0 0.0
    %212 = vmatpush1.msra.mxu0 0.0
    %213 = vmatprep.subr.mxu0 0.0
    %214 = vmatpush1.msra.mxu0 0.0
    %215 = vmatprep.subr.mxu0 0.0
    %216 = vmatpush1.msra.mxu0 0.0
    %217 = vmatprep.subr.mxu0 0.0
    %218 = vmatpush1.msra.mxu0 0.0
    %219 = vmatprep.subr.mxu0 0.0
    %220 = vmatpush1.msra.mxu0 0.0
    %221 = vmatprep.subr.mxu0 0.0
    %222 = vmatpush1.msra.mxu0 0.0
    %223 = vmatprep.subr.mxu0 0.0
    %224 = vmatpush1.msra.mxu0 0.0
    %225 = vmatprep.subr.mxu0 0.0
    %226 = vmatpush1.msra.mxu0 0.0
    %227 = vmatprep.subr.mxu0 0.0
    %228 = vmatpush1.msra.mxu0 0.0
    %229 = vmatprep.subr.mxu0 0.0
    %230 = vmatpush1.msra.mxu0 0.0
    %231 = vmatprep.subr.mxu0 0.0
    %232 = vmatpush1.msra.mxu0 0.0
    %233 = vmatprep.subr.mxu0 0.0
    %234 = vmatpush1.msra.mxu0 0.0
    %235 = vmatprep.subr.mxu0 0.0
    %236 = vmatpush1.msra.mxu0 0.0
    %237 = vmatprep.subr.mxu0 0.0
    %238 = vmatpush1.msra.mxu0 0.0
    %239 = vmatprep.subr.mxu0 0.0
    %240 = vmatpush1.msra.mxu0 0.0
    %241 = vmatprep.subr.mxu0 0.0
    %242 = vmatpush1.msra.mxu0 0.0
    %243 = vmatprep.subr.mxu0 0.0
    %244 = vmatpush1.msra.mxu0 0.0
    %245 = vmatprep.subr.mxu0 0.0
    %246 = vmatpush1.msra.mxu0 0.0
    %247 = vmatprep.subr.mxu0 0.0
    %248 = vmatpush1.msra.mxu0 0.0
    %249 = vmatprep.subr.mxu0 0.0
    %250 = vmatpush1.msra.mxu0 0.0
    %251 = vmatprep.subr.mxu0 0.0
    %252 = vmatpush1.msra.mxu0 0.0
    %253 = vmatprep.subr.mxu0 0.0
    %254 = vmatpush1.msra.mxu0 0.0
    %255 = vmatprep.subr.mxu0 0.0
    %256 = vmatpush1.msra.mxu0 0.0
    %257 = vmatprep.subr.mxu0 0.0
    %258 = vmatpush1.msra.mxu0 0.0
    %259 = vmatprep.subr.mxu0 0.0
    %260 = vmatpush1.msra.mxu0 0.0
    %261 = vmatprep.mubr.f32.mxu0 0.0
    %262 = vmatmul.mubr.f32.gmra.mrb[0].mxu0 %v192
    %v263 = vpop.f32.mrb[0].mxu0
    %v264 = vadd.f32 %v190, %v263
    %v265 = vpop.f32.mrb[0].mxu0
    %266 = vdwg.mxu0
    %v268 = vrot.slane %v180, 5
    %v271 = vrot.slane %v264, 4
    %vm273 = vcmask 1042432
    %v274 = vsel %vm273, %v99, %v268
    %vm275 = vcmask 1043456
    %v276 = vsel %vm275, %v274, %v271
    %v277 = vadd.f32 %v276, %v82
    %s278 = sld [smem:[#allocation3 + $0x80]]
    %s279 = smul.u32 %s278, 2
    %s280 = scalar_lea.vmem %s4, %s279
    %v281 = vld [vmem:[%s280] sm:$0x3]
    %v283 = vsel %vm105, %v281, 0
    %285 = vmatprep.subr.mxu0 0.0
    %286 = vmatpush1.msra.mxu0 %v111
    %287 = vmatprep.subr.mxu0 0.0
    %288 = vmatpush1.msra.mxu0 0.0
    %289 = vmatprep.subr.mxu0 0.0
    %290 = vmatpush1.msra.mxu0 0.0
    %291 = vmatprep.subr.mxu0 0.0
    %292 = vmatpush1.msra.mxu0 0.0
    %293 = vmatprep.subr.mxu0 0.0
    %294 = vmatpush1.msra.mxu0 0.0
    %295 = vmatprep.subr.mxu0 0.0
    %296 = vmatpush1.msra.mxu0 0.0
    %297 = vmatprep.subr.mxu0 0.0
    %298 = vmatpush1.msra.mxu0 0.0
    %299 = vmatprep.subr.mxu0 0.0
    %300 = vmatpush1.msra.mxu0 0.0
    %301 = vmatprep.subr.mxu0 0.0
    %302 = vmatpush1.msra.mxu0 0.0
    %303 = vmatprep.subr.mxu0 0.0
    %304 = vmatpush1.msra.mxu0 0.0
    %305 = vmatprep.subr.mxu0 0.0
    %306 = vmatpush1.msra.mxu0 0.0
    %307 = vmatprep.subr.mxu0 0.0
    %308 = vmatpush1.msra.mxu0 0.0
    %309 = vmatprep.subr.mxu0 0.0
    %310 = vmatpush1.msra.mxu0 0.0
    %311 = vmatprep.subr.mxu0 0.0
    %312 = vmatpush1.msra.mxu0 0.0
    %313 = vmatprep.subr.mxu0 0.0
    %314 = vmatpush1.msra.mxu0 0.0
    %315 = vmatprep.subr.mxu0 0.0
    %316 = vmatpush1.msra.mxu0 0.0
    %317 = vmatprep.subr.mxu0 0.0
    %318 = vmatpush1.msra.mxu0 0.0
    %319 = vmatprep.subr.mxu0 0.0
    %320 = vmatpush1.msra.mxu0 0.0
    %321 = vmatprep.subr.mxu0 0.0
    %322 = vmatpush1.msra.mxu0 0.0
    %323 = vmatprep.subr.mxu0 0.0
    %324 = vmatpush1.msra.mxu0 0.0
    %325 = vmatprep.subr.mxu0 0.0
    %326 = vmatpush1.msra.mxu0 0.0
    %327 = vmatprep.subr.mxu0 0.0
    %328 = vmatpush1.msra.mxu0 0.0
    %329 = vmatprep.subr.mxu0 0.0
    %330 = vmatpush1.msra.mxu0 0.0
    %331 = vmatprep.subr.mxu0 0.0
    %332 = vmatpush1.msra.mxu0 0.0
    %333 = vmatprep.subr.mxu0 0.0
    %334 = vmatpush1.msra.mxu0 0.0
    %335 = vmatprep.subr.mxu0 0.0
    %336 = vmatpush1.msra.mxu0 0.0
    %337 = vmatprep.subr.mxu0 0.0
    %338 = vmatpush1.msra.mxu0 0.0
    %339 = vmatprep.subr.mxu0 0.0
    %340 = vmatpush1.msra.mxu0 0.0
    %341 = vmatprep.subr.mxu0 0.0
    %342 = vmatpush1.msra.mxu0 0.0
    %343 = vmatprep.subr.mxu0 0.0
    %344 = vmatpush1.msra.mxu0 0.0
    %345 = vmatprep.subr.mxu0 0.0
    %346 = vmatpush1.msra.mxu0 0.0
    %347 = vmatprep.subr.mxu0 0.0
    %348 = vmatpush1.msra.mxu0 0.0
    %349 = vmatprep.mubr.f32.mxu0 0.0
    %350 = vmatmul.mubr.f32.gmra.mrb[0].mxu0 %v283
    %v351 = vpop.f32.mrb[0].mxu0
    %v352 = vadd.f32 %v81, %v351
    %v353 = vpop.f32.mrb[0].mxu0
    %354 = vdwg.mxu0
    %s355 = sld [smem:[#allocation3 + $0x81]]
    %s356 = smul.u32 %s355, 2
    %s357 = scalar_lea.vmem %s4, %s356
    %v358 = vld [vmem:[%s357] sm:$0x3]
    %v360 = vrot.slane %v358, 1
    %v361 = vsel %vm105, %v360, 0
    %363 = vmatprep.subr.mxu0 0.0
    %364 = vmatpush1.msra.mxu0 %v195
    %365 = vmatprep.subr.mxu0 0.0
    %366 = vmatpush1.msra.mxu0 0.0
    %367 = vmatprep.subr.mxu0 0.0
    %368 = vmatpush1.msra.mxu0 0.0
    %369 = vmatprep.subr.mxu0 0.0
    %370 = vmatpush1.msra.mxu0 0.0
    %371 = vmatprep.subr.mxu0 0.0
    %372 = vmatpush1.msra.mxu0 0.0
    %373 = vmatprep.subr.mxu0 0.0
    %374 = vmatpush1.msra.mxu0 0.0
    %375 = vmatprep.subr.mxu0 0.0
    %376 = vmatpush1.msra.mxu0 0.0
    %377 = vmatprep.subr.mxu0 0.0
    %378 = vmatpush1.msra.mxu0 0.0
    %379 = vmatprep.subr.mxu0 0.0
    %380 = vmatpush1.msra.mxu0 0.0
    %381 = vmatprep.subr.mxu0 0.0
    %382 = vmatpush1.msra.mxu0 0.0
    %383 = vmatprep.subr.mxu0 0.0
    %384 = vmatpush1.msra.mxu0 0.0
    %385 = vmatprep.subr.mxu0 0.0
    %386 = vmatpush1.msra.mxu0 0.0
    %387 = vmatprep.subr.mxu0 0.0
    %388 = vmatpush1.msra.mxu0 0.0
    %389 = vmatprep.subr.mxu0 0.0
    %390 = vmatpush1.msra.mxu0 0.0
    %391 = vmatprep.subr.mxu0 0.0
    %392 = vmatpush1.msra.mxu0 0.0
    %393 = vmatprep.subr.mxu0 0.0
    %394 = vmatpush1.msra.mxu0 0.0
    %395 = vmatprep.subr.mxu0 0.0
    %396 = vmatpush1.msra.mxu0 0.0
    %397 = vmatprep.subr.mxu0 0.0
    %398 = vmatpush1.msra.mxu0 0.0
    %399 = vmatprep.subr.mxu0 0.0
    %400 = vmatpush1.msra.mxu0 0.0
    %401 = vmatprep.subr.mxu0 0.0
    %402 = vmatpush1.msra.mxu0 0.0
    %403 = vmatprep.subr.mxu0 0.0
    %404 = vmatpush1.msra.mxu0 0.0
    %405 = vmatprep.subr.mxu0 0.0
    %406 = vmatpush1.msra.mxu0 0.0
    %407 = vmatprep.subr.mxu0 0.0
    %408 = vmatpush1.msra.mxu0 0.0
    %409 = vmatprep.subr.mxu0 0.0
    %410 = vmatpush1.msra.mxu0 0.0
    %411 = vmatprep.subr.mxu0 0.0
    %412 = vmatpush1.msra.mxu0 0.0
    %413 = vmatprep.subr.mxu0 0.0
    %414 = vmatpush1.msra.mxu0 0.0
    %415 = vmatprep.subr.mxu0 0.0
    %416 = vmatpush1.msra.mxu0 0.0
    %417 = vmatprep.subr.mxu0 0.0
    %418 = vmatpush1.msra.mxu0 0.0
    %419 = vmatprep.subr.mxu0 0.0
    %420 = vmatpush1.msra.mxu0 0.0
    %421 = vmatprep.subr.mxu0 0.0
    %422 = vmatpush1.msra.mxu0 0.0
    %423 = vmatprep.subr.mxu0 0.0
    %424 = vmatpush1.msra.mxu0 0.0
    %425 = vmatprep.subr.mxu0 0.0
    %426 = vmatpush1.msra.mxu0 0.0
    %427 = vmatprep.mubr.f32.mxu0 0.0
    %428 = vmatmul.mubr.f32.gmra.mrb[0].mxu0 %v361
    %v429 = vpop.f32.mrb[0].mxu0
    %v430 = vadd.f32 %v190, %v429
    %v431 = vpop.f32.mrb[0].mxu0
    %432 = vdwg.mxu0
    %v434 = vrot.slane %v352, 5
    %v437 = vrot.slane %v430, 4
    %v439 = vsel %vm273, %v100, %v434
    %v440 = vsel %vm275, %v439, %v437
    %v441 = vadd.f32 %v440, %v82
    %v443 = vrot.slane %v441, 3
    %vm445 = vcmask 1044480
    %v446 = vsel %vm445, %v277, %v443
    %v447 = vld [vmem:[%s8] sm:$0xff]
    %v448 = vld [vmem:[%s8 + $0x8] sm:$0xff]
    %v449 = vld [vmem:[%s8 + $0x10] sm:$0xff]
    %v450 = vld [vmem:[%s8 + $0x18] sm:$0xff]
    %v451 = vld [vmem:[%s9] sm:$0x1]
    %v453 = vlaneseq
    %v454 = vshrl.u32 %v453, 7
    %v455 = vsub.s32 0, %v454
    %v456 = vrot.slane %v451, %v455
    %vm458 = vcmask 261120
    %v460 = vsel %vm458, %v446, 0
    %v462 = vsel %vm458, %v443, 0
    %464 = vmatprep.subr.mxu0 0.0
    %465 = vmatpush1.msra.mxu0 %v447
    %466 = vmatprep.subr.mxu0 0.0
    %467 = vmatpush1.msra.mxu0 %v448
    %468 = vmatprep.subr.mxu0 0.0
    %469 = vmatpush1.msra.mxu0 %v449
    %470 = vmatprep.subr.mxu0 0.0
    %471 = vmatpush1.msra.mxu0 %v450
    %472 = vmatprep.subr.mxu0 0.0
    %473 = vmatpush1.msra.mxu0 0.0
    %474 = vmatprep.subr.mxu0 0.0
    %475 = vmatpush1.msra.mxu0 0.0
    %476 = vmatprep.subr.mxu0 0.0
    %477 = vmatpush1.msra.mxu0 0.0
    %478 = vmatprep.subr.mxu0 0.0
    %479 = vmatpush1.msra.mxu0 0.0
    %480 = vmatprep.subr.mxu0 0.0
    %481 = vmatpush1.msra.mxu0 0.0
    %482 = vmatprep.subr.mxu0 0.0
    %483 = vmatpush1.msra.mxu0 0.0
    %484 = vmatprep.subr.mxu0 0.0
    %485 = vmatpush1.msra.mxu0 0.0
    %486 = vmatprep.subr.mxu0 0.0
    %487 = vmatpush1.msra.mxu0 0.0
    %488 = vmatprep.subr.mxu0 0.0
    %489 = vmatpush1.msra.mxu0 0.0
    %490 = vmatprep.subr.mxu0 0.0
    %491 = vmatpush1.msra.mxu0 0.0
    %492 = vmatprep.subr.mxu0 0.0
    %493 = vmatpush1.msra.mxu0 0.0
    %494 = vmatprep.subr.mxu0 0.0
    %495 = vmatpush1.msra.mxu0 0.0
    %496 = vmatprep.subr.mxu0 0.0
    %497 = vmatpush1.msra.mxu0 0.0
    %498 = vmatprep.subr.mxu0 0.0
    %499 = vmatpush1.msra.mxu0 0.0
    %500 = vmatprep.subr.mxu0 0.0
    %501 = vmatpush1.msra.mxu0 0.0
    %502 = vmatprep.subr.mxu0 0.0
    %503 = vmatpush1.msra.mxu0 0.0
    %504 = vmatprep.subr.mxu0 0.0
    %505 = vmatpush1.msra.mxu0 0.0
    %506 = vmatprep.subr.mxu0 0.0
    %507 = vmatpush1.msra.mxu0 0.0
    %508 = vmatprep.subr.mxu0 0.0
    %509 = vmatpush1.msra.mxu0 0.0
    %510 = vmatprep.subr.mxu0 0.0
    %511 = vmatpush1.msra.mxu0 0.0
    %512 = vmatprep.subr.mxu0 0.0
    %513 = vmatpush1.msra.mxu0 0.0
    %514 = vmatprep.subr.mxu0 0.0
    %515 = vmatpush1.msra.mxu0 0.0
    %516 = vmatprep.subr.mxu0 0.0
    %517 = vmatpush1.msra.mxu0 0.0
    %518 = vmatprep.subr.mxu0 0.0
    %519 = vmatpush1.msra.mxu0 0.0
    %520 = vmatprep.subr.mxu0 0.0
    %521 = vmatpush1.msra.mxu0 0.0
    %522 = vmatprep.subr.mxu0 0.0
    %523 = vmatpush1.msra.mxu0 0.0
    %524 = vmatprep.subr.mxu0 0.0
    %525 = vmatpush1.msra.mxu0 0.0
    %526 = vmatprep.subr.mxu0 0.0
    %527 = vmatpush1.msra.mxu0 0.0
    %528 = vmatprep.mubr.f32.mxu0 0.0
    %529 = vmatmul.mubr.f32.gmra.mrb[0].mxu0 %v460
    %v530 = vpop.f32.mrb[0].mxu0
    %v531 = vadd.f32 %v456, %v530
    %v532 = vpop.f32.mrb[0].mxu0
    %533 = vmatprep.mubr.f32.mxu0 0.0
    %534 = vmatmul.mubr.f32.gmra.mrb[0].mxu0 %v462
    %v535 = vpop.f32.mrb[0].mxu0
    %v536 = vadd.f32 %v456, %v535
    %v537 = vpop.f32.mrb[0].mxu0
    %538 = vdwg.mxu0
    %540 = vrot.lane.b32.xlu0 %v531, 96
    %v541 = vpop.permute.xlu0 %540
    %vm542 = vcmask 64512
    %v543 = vsel %vm542, %v531, 0
    %v545 = vsel %vm542, %v541, 0
    %547 = vmatprep.subr.mxu0 0.0
    %548 = vmatpush1.xpose.msra.mxu0 %v545
    %549 = vmatprep.subr.mxu0 0.0
    %550 = vmatpush1.xpose.msra.mxu0 0.0
    %551 = vmatprep.subr.mxu0 0.0
    %552 = vmatpush1.xpose.msra.mxu0 0.0
    %553 = vmatprep.subr.mxu0 0.0
    %554 = vmatpush1.xpose.msra.mxu0 0.0
    %555 = vmatprep.subr.mxu0 0.0
    %556 = vmatpush1.xpose.msra.mxu0 0.0
    %557 = vmatprep.subr.mxu0 0.0
    %558 = vmatpush1.xpose.msra.mxu0 0.0
    %559 = vmatprep.subr.mxu0 0.0
    %560 = vmatpush1.xpose.msra.mxu0 0.0
    %561 = vmatprep.subr.mxu0 0.0
    %562 = vmatpush1.xpose.msra.mxu0 0.0
    %563 = vmatprep.subr.mxu0 0.0
    %564 = vmatpush1.xpose.msra.mxu0 0.0
    %565 = vmatprep.subr.mxu0 0.0
    %566 = vmatpush1.xpose.msra.mxu0 0.0
    %567 = vmatprep.subr.mxu0 0.0
    %568 = vmatpush1.xpose.msra.mxu0 0.0
    %569 = vmatprep.subr.mxu0 0.0
    %570 = vmatpush1.xpose.msra.mxu0 0.0
    %571 = vmatprep.subr.mxu0 0.0
    %572 = vmatpush1.xpose.msra.mxu0 0.0
    %573 = vmatprep.subr.mxu0 0.0
    %574 = vmatpush1.xpose.msra.mxu0 0.0
    %575 = vmatprep.subr.mxu0 0.0
    %576 = vmatpush1.xpose.msra.mxu0 0.0
    %577 = vmatprep.subr.mxu0 0.0
    %578 = vmatpush1.xpose.msra.mxu0 0.0
    %579 = vmatprep.subr.mxu0 0.0
    %580 = vmatpush1.xpose.msra.mxu0 0.0
    %581 = vmatprep.subr.mxu0 0.0
    %582 = vmatpush1.xpose.msra.mxu0 0.0
    %583 = vmatprep.subr.mxu0 0.0
    %584 = vmatpush1.xpose.msra.mxu0 0.0
    %585 = vmatprep.subr.mxu0 0.0
    %586 = vmatpush1.xpose.msra.mxu0 0.0
    %587 = vmatprep.subr.mxu0 0.0
    %588 = vmatpush1.xpose.msra.mxu0 0.0
    %589 = vmatprep.subr.mxu0 0.0
    %590 = vmatpush1.xpose.msra.mxu0 0.0
    %591 = vmatprep.subr.mxu0 0.0
    %592 = vmatpush1.xpose.msra.mxu0 0.0
    %593 = vmatprep.subr.mxu0 0.0
    %594 = vmatpush1.xpose.msra.mxu0 0.0
    %595 = vmatprep.subr.mxu0 0.0
    %596 = vmatpush1.xpose.msra.mxu0 0.0
    %597 = vmatprep.subr.mxu0 0.0
    %598 = vmatpush1.xpose.msra.mxu0 0.0
    %599 = vmatprep.subr.mxu0 0.0
    %600 = vmatpush1.xpose.msra.mxu0 0.0
    %601 = vmatprep.subr.mxu0 0.0
    %602 = vmatpush1.xpose.msra.mxu0 0.0
    %603 = vmatprep.subr.mxu0 0.0
    %604 = vmatpush1.xpose.msra.mxu0 0.0
    %605 = vmatprep.subr.mxu0 0.0
    %606 = vmatpush1.xpose.msra.mxu0 0.0
    %607 = vmatprep.subr.mxu0 0.0
    %608 = vmatpush1.xpose.msra.mxu0 0.0
    %609 = vmatprep.subr.mxu0 0.0
    %610 = vmatpush1.xpose.msra.mxu0 0.0
    %611 = vmatprep.mubr.f32.mxu0 0.0
    %612 = vmatmul.mubr.f32.gmra.mrb[0].mxu0 %v543
    %v613 = vpop.f32.mrb[0].mxu0
    %v614 = vadd.f32 0.0, %v613
    %v615 = vpop.f32.mrb[0].mxu0
    %616 = vdwg.mxu0
    %617 = vrot.lane.b32.xlu0 %v531, 120
    %v618 = vpop.permute.xlu0 %617
    %619 = vrot.lane.b32.xlu0 %v531, 88
    %v620 = vpop.permute.xlu0 %619
    %v621 = vsel %vm542, %v618, 0
    %v623 = vsel %vm542, %v620, 0
    %625 = vmatprep.subr.mxu0 0.0
    %626 = vmatpush1.xpose.msra.mxu0 %v623
    %627 = vmatprep.subr.mxu0 0.0
    %628 = vmatpush1.xpose.msra.mxu0 0.0
    %629 = vmatprep.subr.mxu0 0.0
    %630 = vmatpush1.xpose.msra.mxu0 0.0
    %631 = vmatprep.subr.mxu0 0.0
    %632 = vmatpush1.xpose.msra.mxu0 0.0
    %633 = vmatprep.subr.mxu0 0.0
    %634 = vmatpush1.xpose.msra.mxu0 0.0
    %635 = vmatprep.subr.mxu0 0.0
    %636 = vmatpush1.xpose.msra.mxu0 0.0
    %637 = vmatprep.subr.mxu0 0.0
    %638 = vmatpush1.xpose.msra.mxu0 0.0
    %639 = vmatprep.subr.mxu0 0.0
    %640 = vmatpush1.xpose.msra.mxu0 0.0
    %641 = vmatprep.subr.mxu0 0.0
    %642 = vmatpush1.xpose.msra.mxu0 0.0
    %643 = vmatprep.subr.mxu0 0.0
    %644 = vmatpush1.xpose.msra.mxu0 0.0
    %645 = vmatprep.subr.mxu0 0.0
    %646 = vmatpush1.xpose.msra.mxu0 0.0
    %647 = vmatprep.subr.mxu0 0.0
    %648 = vmatpush1.xpose.msra.mxu0 0.0
    %649 = vmatprep.subr.mxu0 0.0
    %650 = vmatpush1.xpose.msra.mxu0 0.0
    %651 = vmatprep.subr.mxu0 0.0
    %652 = vmatpush1.xpose.msra.mxu0 0.0
    %653 = vmatprep.subr.mxu0 0.0
    %654 = vmatpush1.xpose.msra.mxu0 0.0
    %655 = vmatprep.subr.mxu0 0.0
    %656 = vmatpush1.xpose.msra.mxu0 0.0
    %657 = vmatprep.subr.mxu0 0.0
    %658 = vmatpush1.xpose.msra.mxu0 0.0
    %659 = vmatprep.subr.mxu0 0.0
    %660 = vmatpush1.xpose.msra.mxu0 0.0
    %661 = vmatprep.subr.mxu0 0.0
    %662 = vmatpush1.xpose.msra.mxu0 0.0
    %663 = vmatprep.subr.mxu0 0.0
    %664 = vmatpush1.xpose.msra.mxu0 0.0
    %665 = vmatprep.subr.mxu0 0.0
    %666 = vmatpush1.xpose.msra.mxu0 0.0
    %667 = vmatprep.subr.mxu0 0.0
    %668 = vmatpush1.xpose.msra.mxu0 0.0
    %669 = vmatprep.subr.mxu0 0.0
    %670 = vmatpush1.xpose.msra.mxu0 0.0
    %671 = vmatprep.subr.mxu0 0.0
    %672 = vmatpush1.xpose.msra.mxu0 0.0
    %673 = vmatprep.subr.mxu0 0.0
    %674 = vmatpush1.xpose.msra.mxu0 0.0
    %675 = vmatprep.subr.mxu0 0.0
    %676 = vmatpush1.xpose.msra.mxu0 0.0
    %677 = vmatprep.subr.mxu0 0.0
    %678 = vmatpush1.xpose.msra.mxu0 0.0
    %679 = vmatprep.subr.mxu0 0.0
    %680 = vmatpush1.xpose.msra.mxu0 0.0
    %681 = vmatprep.subr.mxu0 0.0
    %682 = vmatpush1.xpose.msra.mxu0 0.0
    %683 = vmatprep.subr.mxu0 0.0
    %684 = vmatpush1.xpose.msra.mxu0 0.0
    %685 = vmatprep.subr.mxu0 0.0
    %686 = vmatpush1.xpose.msra.mxu0 0.0
    %687 = vmatprep.subr.mxu0 0.0
    %688 = vmatpush1.xpose.msra.mxu0 0.0
    %689 = vmatprep.mubr.f32.mxu0 0.0
    %690 = vmatmul.mubr.f32.gmra.mrb[0].mxu0 %v621
    %v691 = vpop.f32.mrb[0].mxu0
    %v692 = vadd.f32 0.0, %v691
    %v693 = vpop.f32.mrb[0].mxu0
    %694 = vdwg.mxu0
    %695 = vrot.lane.b32.xlu0 %v531, 112
    %v696 = vpop.permute.xlu0 %695
    %697 = vrot.lane.b32.xlu0 %v531, 80
    %v698 = vpop.permute.xlu0 %697
    %v699 = vsel %vm542, %v696, 0
    %v701 = vsel %vm542, %v698, 0
    %703 = vmatprep.subr.mxu0 0.0
    %704 = vmatpush1.xpose.msra.mxu0 %v701
    %705 = vmatprep.subr.mxu0 0.0
    %706 = vmatpush1.xpose.msra.mxu0 0.0
    %707 = vmatprep.subr.mxu0 0.0
    %708 = vmatpush1.xpose.msra.mxu0 0.0
    %709 = vmatprep.subr.mxu0 0.0
    %710 = vmatpush1.xpose.msra.mxu0 0.0
    %711 = vmatprep.subr.mxu0 0.0
    %712 = vmatpush1.xpose.msra.mxu0 0.0
    %713 = vmatprep.subr.mxu0 0.0
    %714 = vmatpush1.xpose.msra.mxu0 0.0
    %715 = vmatprep.subr.mxu0 0.0
    %716 = vmatpush1.xpose.msra.mxu0 0.0
    %717 = vmatprep.subr.mxu0 0.0
    %718 = vmatpush1.xpose.msra.mxu0 0.0
    %719 = vmatprep.subr.mxu0 0.0
    %720 = vmatpush1.xpose.msra.mxu0 0.0
    %721 = vmatprep.subr.mxu0 0.0
    %722 = vmatpush1.xpose.msra.mxu0 0.0
    %723 = vmatprep.subr.mxu0 0.0
    %724 = vmatpush1.xpose.msra.mxu0 0.0
    %725 = vmatprep.subr.mxu0 0.0
    %726 = vmatpush1.xpose.msra.mxu0 0.0
    %727 = vmatprep.subr.mxu0 0.0
    %728 = vmatpush1.xpose.msra.mxu0 0.0
    %729 = vmatprep.subr.mxu0 0.0
    %730 = vmatpush1.xpose.msra.mxu0 0.0
    %731 = vmatprep.subr.mxu0 0.0
    %732 = vmatpush1.xpose.msra.mxu0 0.0
    %733 = vmatprep.subr.mxu0 0.0
    %734 = vmatpush1.xpose.msra.mxu0 0.0
    %735 = vmatprep.subr.mxu0 0.0
    %736 = vmatpush1.xpose.msra.mxu0 0.0
    %737 = vmatprep.subr.mxu0 0.0
    %738 = vmatpush1.xpose.msra.mxu0 0.0
    %739 = vmatprep.subr.mxu0 0.0
    %740 = vmatpush1.xpose.msra.mxu0 0.0
    %741 = vmatprep.subr.mxu0 0.0
    %742 = vmatpush1.xpose.msra.mxu0 0.0
    %743 = vmatprep.subr.mxu0 0.0
    %744 = vmatpush1.xpose.msra.mxu0 0.0
    %745 = vmatprep.subr.mxu0 0.0
    %746 = vmatpush1.xpose.msra.mxu0 0.0
    %747 = vmatprep.subr.mxu0 0.0
    %748 = vmatpush1.xpose.msra.mxu0 0.0
    %749 = vmatprep.subr.mxu0 0.0
    %750 = vmatpush1.xpose.msra.mxu0 0.0
    %751 = vmatprep.subr.mxu0 0.0
    %752 = vmatpush1.xpose.msra.mxu0 0.0
    %753 = vmatprep.subr.mxu0 0.0
    %754 = vmatpush1.xpose.msra.mxu0 0.0
    %755 = vmatprep.subr.mxu0 0.0
    %756 = vmatpush1.xpose.msra.mxu0 0.0
    %757 = vmatprep.subr.mxu0 0.0
    %758 = vmatpush1.xpose.msra.mxu0 0.0
    %759 = vmatprep.subr.mxu0 0.0
    %760 = vmatpush1.xpose.msra.mxu0 0.0
    %761 = vmatprep.subr.mxu0 0.0
    %762 = vmatpush1.xpose.msra.mxu0 0.0
    %763 = vmatprep.subr.mxu0 0.0
    %764 = vmatpush1.xpose.msra.mxu0 0.0
    %765 = vmatprep.subr.mxu0 0.0
    %766 = vmatpush1.xpose.msra.mxu0 0.0
    %767 = vmatprep.mubr.f32.mxu0 0.0
    %768 = vmatmul.mubr.f32.gmra.mrb[0].mxu0 %v699
    %v769 = vpop.f32.mrb[0].mxu0
    %v770 = vadd.f32 0.0, %v769
    %v771 = vpop.f32.mrb[0].mxu0
    %772 = vdwg.mxu0
    %773 = vrot.lane.b32.xlu0 %v531, 104
    %v774 = vpop.permute.xlu0 %773
    %775 = vrot.lane.b32.xlu0 %v531, 72
    %v776 = vpop.permute.xlu0 %775
    %v777 = vsel %vm542, %v774, 0
    %v779 = vsel %vm542, %v776, 0
    %781 = vmatprep.subr.mxu0 0.0
    %782 = vmatpush1.xpose.msra.mxu0 %v779
    %783 = vmatprep.subr.mxu0 0.0
    %784 = vmatpush1.xpose.msra.mxu0 0.0
    %785 = vmatprep.subr.mxu0 0.0
    %786 = vmatpush1.xpose.msra.mxu0 0.0
    %787 = vmatprep.subr.mxu0 0.0
    %788 = vmatpush1.xpose.msra.mxu0 0.0
    %789 = vmatprep.subr.mxu0 0.0
    %790 = vmatpush1.xpose.msra.mxu0 0.0
    %791 = vmatprep.subr.mxu0 0.0
    %792 = vmatpush1.xpose.msra.mxu0 0.0
    %793 = vmatprep.subr.mxu0 0.0
    %794 = vmatpush1.xpose.msra.mxu0 0.0
    %795 = vmatprep.subr.mxu0 0.0
    %796 = vmatpush1.xpose.msra.mxu0 0.0
    %797 = vmatprep.subr.mxu0 0.0
    %798 = vmatpush1.xpose.msra.mxu0 0.0
    %799 = vmatprep.subr.mxu0 0.0
    %800 = vmatpush1.xpose.msra.mxu0 0.0
    %801 = vmatprep.subr.mxu0 0.0
    %802 = vmatpush1.xpose.msra.mxu0 0.0
    %803 = vmatprep.subr.mxu0 0.0
    %804 = vmatpush1.xpose.msra.mxu0 0.0
    %805 = vmatprep.subr.mxu0 0.0
    %806 = vmatpush1.xpose.msra.mxu0 0.0
    %807 = vmatprep.subr.mxu0 0.0
    %808 = vmatpush1.xpose.msra.mxu0 0.0
    %809 = vmatprep.subr.mxu0 0.0
    %810 = vmatpush1.xpose.msra.mxu0 0.0
    %811 = vmatprep.subr.mxu0 0.0
    %812 = vmatpush1.xpose.msra.mxu0 0.0
    %813 = vmatprep.subr.mxu0 0.0
    %814 = vmatpush1.xpose.msra.mxu0 0.0
    %815 = vmatprep.subr.mxu0 0.0
    %816 = vmatpush1.xpose.msra.mxu0 0.0
    %817 = vmatprep.subr.mxu0 0.0
    %818 = vmatpush1.xpose.msra.mxu0 0.0
    %819 = vmatprep.subr.mxu0 0.0
    %820 = vmatpush1.xpose.msra.mxu0 0.0
    %821 = vmatprep.subr.mxu0 0.0
    %822 = vmatpush1.xpose.msra.mxu0 0.0
    %823 = vmatprep.subr.mxu0 0.0
    %824 = vmatpush1.xpose.msra.mxu0 0.0
    %825 = vmatprep.subr.mxu0 0.0
    %826 = vmatpush1.xpose.msra.mxu0 0.0
    %827 = vmatprep.subr.mxu0 0.0
    %828 = vmatpush1.xpose.msra.mxu0 0.0
    %829 = vmatprep.subr.mxu0 0.0
    %830 = vmatpush1.xpose.msra.mxu0 0.0
    %831 = vmatprep.subr.mxu0 0.0
    %832 = vmatpush1.xpose.msra.mxu0 0.0
    %833 = vmatprep.subr.mxu0 0.0
    %834 = vmatpush1.xpose.msra.mxu0 0.0
    %835 = vmatprep.subr.mxu0 0.0
    %836 = vmatpush1.xpose.msra.mxu0 0.0
    %837 = vmatprep.subr.mxu0 0.0
    %838 = vmatpush1.xpose.msra.mxu0 0.0
    %839 = vmatprep.subr.mxu0 0.0
    %840 = vmatpush1.xpose.msra.mxu0 0.0
    %841 = vmatprep.subr.mxu0 0.0
    %842 = vmatpush1.xpose.msra.mxu0 0.0
    %843 = vmatprep.subr.mxu0 0.0
    %844 = vmatpush1.xpose.msra.mxu0 0.0
    %845 = vmatprep.mubr.f32.mxu0 0.0
    %846 = vmatmul.mubr.f32.gmra.mrb[0].mxu0 %v777
    %v847 = vpop.f32.mrb[0].mxu0
    %v848 = vadd.f32 0.0, %v847
    %v849 = vpop.f32.mrb[0].mxu0
    %850 = vdwg.mxu0
    %v852 = vrot.slane %v531, 5
    %v853 = vrot.slane %v536, 5
    %v854 = vsel %vm273, %v852, %v853
    %855 = vrot.lane.b32.xlu0 %v854, 96
    %v856 = vpop.permute.xlu0 %855
    %v857 = vsel %vm542, %v854, 0
    %v859 = vsel %vm542, %v856, 0
    %861 = vmatprep.subr.mxu0 0.0
    %862 = vmatpush1.xpose.msra.mxu0 %v859
    %863 = vmatprep.subr.mxu0 0.0
    %864 = vmatpush1.xpose.msra.mxu0 0.0
    %865 = vmatprep.subr.mxu0 0.0
    %866 = vmatpush1.xpose.msra.mxu0 0.0
    %867 = vmatprep.subr.mxu0 0.0
    %868 = vmatpush1.xpose.msra.mxu0 0.0
    %869 = vmatprep.subr.mxu0 0.0
    %870 = vmatpush1.xpose.msra.mxu0 0.0
    %871 = vmatprep.subr.mxu0 0.0
    %872 = vmatpush1.xpose.msra.mxu0 0.0
    %873 = vmatprep.subr.mxu0 0.0
    %874 = vmatpush1.xpose.msra.mxu0 0.0
    %875 = vmatprep.subr.mxu0 0.0
    %876 = vmatpush1.xpose.msra.mxu0 0.0
    %877 = vmatprep.subr.mxu0 0.0
    %878 = vmatpush1.xpose.msra.mxu0 0.0
    %879 = vmatprep.subr.mxu0 0.0
    %880 = vmatpush1.xpose.msra.mxu0 0.0
    %881 = vmatprep.subr.mxu0 0.0
    %882 = vmatpush1.xpose.msra.mxu0 0.0
    %883 = vmatprep.subr.mxu0 0.0
    %884 = vmatpush1.xpose.msra.mxu0 0.0
    %885 = vmatprep.subr.mxu0 0.0
    %886 = vmatpush1.xpose.msra.mxu0 0.0
    %887 = vmatprep.subr.mxu0 0.0
    %888 = vmatpush1.xpose.msra.mxu0 0.0
    %889 = vmatprep.subr.mxu0 0.0
    %890 = vmatpush1.xpose.msra.mxu0 0.0
    %891 = vmatprep.subr.mxu0 0.0
    %892 = vmatpush1.xpose.msra.mxu0 0.0
    %893 = vmatprep.subr.mxu0 0.0
    %894 = vmatpush1.xpose.msra.mxu0 0.0
    %895 = vmatprep.subr.mxu0 0.0
    %896 = vmatpush1.xpose.msra.mxu0 0.0
    %897 = vmatprep.subr.mxu0 0.0
    %898 = vmatpush1.xpose.msra.mxu0 0.0
    %899 = vmatprep.subr.mxu0 0.0
    %900 = vmatpush1.xpose.msra.mxu0 0.0
    %901 = vmatprep.subr.mxu0 0.0
    %902 = vmatpush1.xpose.msra.mxu0 0.0
    %903 = vmatprep.subr.mxu0 0.0
    %904 = vmatpush1.xpose.msra.mxu0 0.0
    %905 = vmatprep.subr.mxu0 0.0
    %906 = vmatpush1.xpose.msra.mxu0 0.0
    %907 = vmatprep.subr.mxu0 0.0
    %908 = vmatpush1.xpose.msra.mxu0 0.0
    %909 = vmatprep.subr.mxu0 0.0
    %910 = vmatpush1.xpose.msra.mxu0 0.0
    %911 = vmatprep.subr.mxu0 0.0
    %912 = vmatpush1.xpose.msra.mxu0 0.0
    %913 = vmatprep.subr.mxu0 0.0
    %914 = vmatpush1.xpose.msra.mxu0 0.0
    %915 = vmatprep.subr.mxu0 0.0
    %916 = vmatpush1.xpose.msra.mxu0 0.0
    %917 = vmatprep.subr.mxu0 0.0
    %918 = vmatpush1.xpose.msra.mxu0 0.0
    %919 = vmatprep.subr.mxu0 0.0
    %920 = vmatpush1.xpose.msra.mxu0 0.0
    %921 = vmatprep.subr.mxu0 0.0
    %922 = vmatpush1.xpose.msra.mxu0 0.0
    %923 = vmatprep.subr.mxu0 0.0
    %924 = vmatpush1.xpose.msra.mxu0 0.0
    %925 = vmatprep.mubr.f32.mxu0 0.0
    %926 = vmatmul.mubr.f32.gmra.mrb[0].mxu0 %v857
    %v927 = vpop.f32.mrb[0].mxu0
    %v928 = vadd.f32 0.0, %v927
    %v929 = vpop.f32.mrb[0].mxu0
    %930 = vdwg.mxu0
    %931 = vrot.lane.b32.xlu0 %v854, 120
    %v932 = vpop.permute.xlu0 %931
    %933 = vrot.lane.b32.xlu0 %v854, 88
    %v934 = vpop.permute.xlu0 %933
    %v935 = vsel %vm542, %v932, 0
    %v937 = vsel %vm542, %v934, 0
    %939 = vmatprep.subr.mxu0 0.0
    %940 = vmatpush1.xpose.msra.mxu0 %v937
    %941 = vmatprep.subr.mxu0 0.0
    %942 = vmatpush1.xpose.msra.mxu0 0.0
    %943 = vmatprep.subr.mxu0 0.0
    %944 = vmatpush1.xpose.msra.mxu0 0.0
    %945 = vmatprep.subr.mxu0 0.0
    %946 = vmatpush1.xpose.msra.mxu0 0.0
    %947 = vmatprep.subr.mxu0 0.0
    %948 = vmatpush1.xpose.msra.mxu0 0.0
    %949 = vmatprep.subr.mxu0 0.0
    %950 = vmatpush1.xpose.msra.mxu0 0.0
    %951 = vmatprep.subr.mxu0 0.0
    %952 = vmatpush1.xpose.msra.mxu0 0.0
    %953 = vmatprep.subr.mxu0 0.0
    %954 = vmatpush1.xpose.msra.mxu0 0.0
    %955 = vmatprep.subr.mxu0 0.0
    %956 = vmatpush1.xpose.msra.mxu0 0.0
    %957 = vmatprep.subr.mxu0 0.0
    %958 = vmatpush1.xpose.msra.mxu0 0.0
    %959 = vmatprep.subr.mxu0 0.0
    %960 = vmatpush1.xpose.msra.mxu0 0.0
    %961 = vmatprep.subr.mxu0 0.0
    %962 = vmatpush1.xpose.msra.mxu0 0.0
    %963 = vmatprep.subr.mxu0 0.0
    %964 = vmatpush1.xpose.msra.mxu0 0.0
    %965 = vmatprep.subr.mxu0 0.0
    %966 = vmatpush1.xpose.msra.mxu0 0.0
    %967 = vmatprep.subr.mxu0 0.0
    %968 = vmatpush1.xpose.msra.mxu0 0.0
    %969 = vmatprep.subr.mxu0 0.0
    %970 = vmatpush1.xpose.msra.mxu0 0.0
    %971 = vmatprep.subr.mxu0 0.0
    %972 = vmatpush1.xpose.msra.mxu0 0.0
    %973 = vmatprep.subr.mxu0 0.0
    %974 = vmatpush1.xpose.msra.mxu0 0.0
    %975 = vmatprep.subr.mxu0 0.0
    %976 = vmatpush1.xpose.msra.mxu0 0.0
    %977 = vmatprep.subr.mxu0 0.0
    %978 = vmatpush1.xpose.msra.mxu0 0.0
    %979 = vmatprep.subr.mxu0 0.0
    %980 = vmatpush1.xpose.msra.mxu0 0.0
    %981 = vmatprep.subr.mxu0 0.0
    %982 = vmatpush1.xpose.msra.mxu0 0.0
    %983 = vmatprep.subr.mxu0 0.0
    %984 = vmatpush1.xpose.msra.mxu0 0.0
    %985 = vmatprep.subr.mxu0 0.0
    %986 = vmatpush1.xpose.msra.mxu0 0.0
    %987 = vmatprep.subr.mxu0 0.0
    %988 = vmatpush1.xpose.msra.mxu0 0.0
    %989 = vmatprep.subr.mxu0 0.0
    %990 = vmatpush1.xpose.msra.mxu0 0.0
    %991 = vmatprep.subr.mxu0 0.0
    %992 = vmatpush1.xpose.msra.mxu0 0.0
    %993 = vmatprep.subr.mxu0 0.0
    %994 = vmatpush1.xpose.msra.mxu0 0.0
    %995 = vmatprep.subr.mxu0 0.0
    %996 = vmatpush1.xpose.msra.mxu0 0.0
    %997 = vmatprep.subr.mxu0 0.0
    %998 = vmatpush1.xpose.msra.mxu0 0.0
    %999 = vmatprep.subr.mxu0 0.0
    %1000 = vmatpush1.xpose.msra.mxu0 0.0
    %1001 = vmatprep.subr.mxu0 0.0
    %1002 = vmatpush1.xpose.msra.mxu0 0.0
    %1003 = vmatprep.mubr.f32.mxu0 0.0
    %1004 = vmatmul.mubr.f32.gmra.mrb[0].mxu0 %v935
    %v1005 = vpop.f32.mrb[0].mxu0
    %v1006 = vadd.f32 0.0, %v1005
    %v1007 = vpop.f32.mrb[0].mxu0
    %1008 = vdwg.mxu0
    %1009 = vrot.lane.b32.xlu0 %v854, 112
    %v1010 = vpop.permute.xlu0 %1009
    %1011 = vrot.lane.b32.xlu0 %v854, 80
    %v1012 = vpop.permute.xlu0 %1011
    %v1013 = vsel %vm542, %v1010, 0
    %v1015 = vsel %vm542, %v1012, 0
    %1017 = vmatprep.subr.mxu0 0.0
    %1018 = vmatpush1.xpose.msra.mxu0 %v1015
    %1019 = vmatprep.subr.mxu0 0.0
    %1020 = vmatpush1.xpose.msra.mxu0 0.0
    %1021 = vmatprep.subr.mxu0 0.0
    %1022 = vmatpush1.xpose.msra.mxu0 0.0
    %1023 = vmatprep.subr.mxu0 0.0
    %1024 = vmatpush1.xpose.msra.mxu0 0.0
    %1025 = vmatprep.subr.mxu0 0.0
    %1026 = vmatpush1.xpose.msra.mxu0 0.0
    %1027 = vmatprep.subr.mxu0 0.0
    %1028 = vmatpush1.xpose.msra.mxu0 0.0
    %1029 = vmatprep.subr.mxu0 0.0
    %1030 = vmatpush1.xpose.msra.mxu0 0.0
    %1031 = vmatprep.subr.mxu0 0.0
    %1032 = vmatpush1.xpose.msra.mxu0 0.0
    %1033 = vmatprep.subr.mxu0 0.0
    %1034 = vmatpush1.xpose.msra.mxu0 0.0
    %1035 = vmatprep.subr.mxu0 0.0
    %1036 = vmatpush1.xpose.msra.mxu0 0.0
    %1037 = vmatprep.subr.mxu0 0.0
    %1038 = vmatpush1.xpose.msra.mxu0 0.0
    %1039 = vmatprep.subr.mxu0 0.0
    %1040 = vmatpush1.xpose.msra.mxu0 0.0
    %1041 = vmatprep.subr.mxu0 0.0
    %1042 = vmatpush1.xpose.msra.mxu0 0.0
    %1043 = vmatprep.subr.mxu0 0.0
    %1044 = vmatpush1.xpose.msra.mxu0 0.0
    %1045 = vmatprep.subr.mxu0 0.0
    %1046 = vmatpush1.xpose.msra.mxu0 0.0
    %1047 = vmatprep.subr.mxu0 0.0
    %1048 = vmatpush1.xpose.msra.mxu0 0.0
    %1049 = vmatprep.subr.mxu0 0.0
    %1050 = vmatpush1.xpose.msra.mxu0 0.0
    %1051 = vmatprep.subr.mxu0 0.0
    %1052 = vmatpush1.xpose.msra.mxu0 0.0
    %1053 = vmatprep.subr.mxu0 0.0
    %1054 = vmatpush1.xpose.msra.mxu0 0.0
    %1055 = vmatprep.subr.mxu0 0.0
    %1056 = vmatpush1.xpose.msra.mxu0 0.0
    %1057 = vmatprep.subr.mxu0 0.0
    %1058 = vmatpush1.xpose.msra.mxu0 0.0
    %1059 = vmatprep.subr.mxu0 0.0
    %1060 = vmatpush1.xpose.msra.mxu0 0.0
    %1061 = vmatprep.subr.mxu0 0.0
    %1062 = vmatpush1.xpose.msra.mxu0 0.0
    %1063 = vmatprep.subr.mxu0 0.0
    %1064 = vmatpush1.xpose.msra.mxu0 0.0
    %1065 = vmatprep.subr.mxu0 0.0
    %1066 = vmatpush1.xpose.msra.mxu0 0.0
    %1067 = vmatprep.subr.mxu0 0.0
    %1068 = vmatpush1.xpose.msra.mxu0 0.0
    %1069 = vmatprep.subr.mxu0 0.0
    %1070 = vmatpush1.xpose.msra.mxu0 0.0
    %1071 = vmatprep.subr.mxu0 0.0
    %1072 = vmatpush1.xpose.msra.mxu0 0.0
    %1073 = vmatprep.subr.mxu0 0.0
    %1074 = vmatpush1.xpose.msra.mxu0 0.0
    %1075 = vmatprep.subr.mxu0 0.0
    %1076 = vmatpush1.xpose.msra.mxu0 0.0
    %1077 = vmatprep.subr.mxu0 0.0
    %1078 = vmatpush1.xpose.msra.mxu0 0.0
    %1079 = vmatprep.subr.mxu0 0.0
    %1080 = vmatpush1.xpose.msra.mxu0 0.0
    %1081 = vmatprep.mubr.f32.mxu0 0.0
    %1082 = vmatmul.mubr.f32.gmra.mrb[0].mxu0 %v1013
    %v1083 = vpop.f32.mrb[0].mxu0
    %v1084 = vadd.f32 0.0, %v1083
    %v1085 = vpop.f32.mrb[0].mxu0
    %1086 = vdwg.mxu0
    %1087 = vrot.lane.b32.xlu0 %v854, 104
    %v1088 = vpop.permute.xlu0 %1087
    %1089 = vrot.lane.b32.xlu0 %v854, 72
    %v1090 = vpop.permute.xlu0 %1089
    %v1091 = vsel %vm542, %v1088, 0
    %v1093 = vsel %vm542, %v1090, 0
    %1095 = vmatprep.subr.mxu0 0.0
    %1096 = vmatpush1.xpose.msra.mxu0 %v1093
    %1097 = vmatprep.subr.mxu0 0.0
    %1098 = vmatpush1.xpose.msra.mxu0 0.0
    %1099 = vmatprep.subr.mxu0 0.0
    %1100 = vmatpush1.xpose.msra.mxu0 0.0
    %1101 = vmatprep.subr.mxu0 0.0
    %1102 = vmatpush1.xpose.msra.mxu0 0.0
    %1103 = vmatprep.subr.mxu0 0.0
    %1104 = vmatpush1.xpose.msra.mxu0 0.0
    %1105 = vmatprep.subr.mxu0 0.0
    %1106 = vmatpush1.xpose.msra.mxu0 0.0
    %1107 = vmatprep.subr.mxu0 0.0
    %1108 = vmatpush1.xpose.msra.mxu0 0.0
    %1109 = vmatprep.subr.mxu0 0.0
    %1110 = vmatpush1.xpose.msra.mxu0 0.0
    %1111 = vmatprep.subr.mxu0 0.0
    %1112 = vmatpush1.xpose.msra.mxu0 0.0
    %1113 = vmatprep.subr.mxu0 0.0
    %1114 = vmatpush1.xpose.msra.mxu0 0.0
    %1115 = vmatprep.subr.mxu0 0.0
    %1116 = vmatpush1.xpose.msra.mxu0 0.0
    %1117 = vmatprep.subr.mxu0 0.0
    %1118 = vmatpush1.xpose.msra.mxu0 0.0
    %1119 = vmatprep.subr.mxu0 0.0
    %1120 = vmatpush1.xpose.msra.mxu0 0.0
    %1121 = vmatprep.subr.mxu0 0.0
    %1122 = vmatpush1.xpose.msra.mxu0 0.0
    %1123 = vmatprep.subr.mxu0 0.0
    %1124 = vmatpush1.xpose.msra.mxu0 0.0
    %1125 = vmatprep.subr.mxu0 0.0
    %1126 = vmatpush1.xpose.msra.mxu0 0.0
    %1127 = vmatprep.subr.mxu0 0.0
    %1128 = vmatpush1.xpose.msra.mxu0 0.0
    %1129 = vmatprep.subr.mxu0 0.0
    %1130 = vmatpush1.xpose.msra.mxu0 0.0
    %1131 = vmatprep.subr.mxu0 0.0
    %1132 = vmatpush1.xpose.msra.mxu0 0.0
    %1133 = vmatprep.subr.mxu0 0.0
    %1134 = vmatpush1.xpose.msra.mxu0 0.0
    %1135 = vmatprep.subr.mxu0 0.0
    %1136 = vmatpush1.xpose.msra.mxu0 0.0
    %1137 = vmatprep.subr.mxu0 0.0
    %1138 = vmatpush1.xpose.msra.mxu0 0.0
    %1139 = vmatprep.subr.mxu0 0.0
    %1140 = vmatpush1.xpose.msra.mxu0 0.0
    %1141 = vmatprep.subr.mxu0 0.0
    %1142 = vmatpush1.xpose.msra.mxu0 0.0
    %1143 = vmatprep.subr.mxu0 0.0
    %1144 = vmatpush1.xpose.msra.mxu0 0.0
    %1145 = vmatprep.subr.mxu0 0.0
    %1146 = vmatpush1.xpose.msra.mxu0 0.0
    %1147 = vmatprep.subr.mxu0 0.0
    %1148 = vmatpush1.xpose.msra.mxu0 0.0
    %1149 = vmatprep.subr.mxu0 0.0
    %1150 = vmatpush1.xpose.msra.mxu0 0.0
    %1151 = vmatprep.subr.mxu0 0.0
    %1152 = vmatpush1.xpose.msra.mxu0 0.0
    %1153 = vmatprep.subr.mxu0 0.0
    %1154 = vmatpush1.xpose.msra.mxu0 0.0
    %1155 = vmatprep.subr.mxu0 0.0
    %1156 = vmatpush1.xpose.msra.mxu0 0.0
    %1157 = vmatprep.subr.mxu0 0.0
    %1158 = vmatpush1.xpose.msra.mxu0 0.0
    %1159 = vmatprep.mubr.f32.mxu0 0.0
    %1160 = vmatmul.mubr.f32.gmra.mrb[0].mxu0 %v1091
    %v1161 = vpop.f32.mrb[0].mxu0
    %v1162 = vadd.f32 0.0, %v1161
    %v1163 = vpop.f32.mrb[0].mxu0
    %1164 = vdwg.mxu0
    %v1166 = vrot.slane %v692, 3
    %v1169 = vrot.slane %v770, 6
    %v1172 = vrot.slane %v848, 1
    %v1175 = vrot.slane %v928, 4
    %v1178 = vrot.slane %v1006, 7
    %v1181 = vrot.slane %v1084, 2
    %v1184 = vrot.slane %v1162, 5
    %v1186 = vsel %vm445, %v614, %v1166
    %vm1187 = vcmask 1041408
    %v1188 = vsel %vm1187, %v1166, %v1169
    %vm1189 = vcmask 1046528
    %v1190 = vsel %vm1189, %v1188, %v1172
    %v1191 = vsel %vm275, %v1172, %v1175
    %vm1192 = vcmask 1040384
    %v1193 = vsel %vm1192, %v1175, %v1178
    %v1194 = vsel %vm109, %v1193, %v1181
    %v1195 = vsel %vm273, %v1181, %v1184
    %vm1196 = vcmask 39936
    %v1197 = vsel %vm1196, %v1186, -inf
    %1198 = vmax.xlane.f32.xlu0 %v1197
    %v1199 = vpop.xlane.xlu0 %1198
    %v1200 = vsel %vm1196, %v1190, -inf
    %1201 = vmax.xlane.f32.xlu0 %v1200
    %v1202 = vpop.xlane.xlu0 %1201
    %v1203 = vsel %vm1196, %v1191, -inf
    %1204 = vmax.xlane.f32.xlu0 %v1203
    %v1205 = vpop.xlane.xlu0 %1204
    %v1206 = vsel %vm1196, %v1194, -inf
    %1207 = vmax.xlane.f32.xlu0 %v1206
    %v1208 = vpop.xlane.xlu0 %1207
    %v1209 = vsel %vm1196, %v1195, -inf
    %1210 = vmax.xlane.f32.xlu0 %v1209
    %v1211 = vpop.xlane.xlu0 %1210
    %v1212 = vsub.f32 %v1186, %v1199
    %v1213 = vsub.f32 %v1190, %v1202
    %v1214 = vsub.f32 %v1191, %v1205
    %v1215 = vsub.f32 %v1194, %v1208
    %v1216 = vsub.f32 %v1195, %v1211
    %v1217 = vmul.f32 %v1212, 1.442695
    %v1218 = vpow.pop %v1217
    %v1219 = vmul.f32 %v1213, 1.442695
    %v1220 = vpow.pop %v1219
    %v1221 = vmul.f32 %v1214, 1.442695
    %v1222 = vpow.pop %v1221
    %v1223 = vmul.f32 %v1215, 1.442695
    %v1224 = vpow.pop %v1223
    %v1225 = vmul.f32 %v1216, 1.442695
    %v1226 = vpow.pop %v1225
    %v1227 = vsel %vm1196, %v1218, 0.0
    %1228 = vadd.xlane.f32.xlu0 %v1227
    %v1229 = vpop.xlane.xlu0 %1228
    %v1230 = vsel %vm1196, %v1220, 0.0
    %1231 = vadd.xlane.f32.xlu0 %v1230
    %v1232 = vpop.xlane.xlu0 %1231
    %v1233 = vsel %vm1196, %v1222, 0.0
    %1234 = vadd.xlane.f32.xlu0 %v1233
    %v1235 = vpop.xlane.xlu0 %1234
    %v1236 = vsel %vm1196, %v1224, 0.0
    %1237 = vadd.xlane.f32.xlu0 %v1236
    %v1238 = vpop.xlane.xlu0 %1237
    %v1239 = vsel %vm1196, %v1226, 0.0
    %1240 = vadd.xlane.f32.xlu0 %v1239
    %v1241 = vpop.xlane.xlu0 %1240
    %v1242 = vrcp.pop %v1229
    %v1243 = vmul.f32 %v1218, %v1242
    %v1244 = vrcp.pop %v1232
    %v1245 = vmul.f32 %v1220, %v1244
    %v1246 = vrcp.pop %v1235
    %v1247 = vmul.f32 %v1222, %v1246
    %v1248 = vrcp.pop %v1238
    %v1249 = vmul.f32 %v1224, %v1248
    %v1250 = vrcp.pop %v1241
    %v1251 = vmul.f32 %v1226, %v1250
    %1252 = vrot.lane.b32.xlu0 %v531, 64
    %v1253 = vpop.permute.xlu0 %1252
    %v1255 = vsel %vm1196, %v1243, 0
    %v1257 = vsel %vm445, %v1253, 0
    %1259 = vmatprep.subr.mxu0 0.0
    %1260 = vmatpush1.msra.mxu0 %v1257
    %1261 = vmatprep.subr.mxu0 0.0
    %1262 = vmatpush1.msra.mxu0 0.0
    %1263 = vmatprep.subr.mxu0 0.0
    %1264 = vmatpush1.msra.mxu0 0.0
    %1265 = vmatprep.subr.mxu0 0.0
    %1266 = vmatpush1.msra.mxu0 0.0
    %1267 = vmatprep.subr.mxu0 0.0
    %1268 = vmatpush1.msra.mxu0 0.0
    %1269 = vmatprep.subr.mxu0 0.0
    %1270 = vmatpush1.msra.mxu0 0.0
    %1271 = vmatprep.subr.mxu0 0.0
    %1272 = vmatpush1.msra.mxu0 0.0
    %1273 = vmatprep.subr.mxu0 0.0
    %1274 = vmatpush1.msra.mxu0 0.0
    %1275 = vmatprep.subr.mxu0 0.0
    %1276 = vmatpush1.msra.mxu0 0.0
    %1277 = vmatprep.subr.mxu0 0.0
    %1278 = vmatpush1.msra.mxu0 0.0
    %1279 = vmatprep.subr.mxu0 0.0
    %1280 = vmatpush1.msra.mxu0 0.0
    %1281 = vmatprep.subr.mxu0 0.0
    %1282 = vmatpush1.msra.mxu0 0.0
    %1283 = vmatprep.subr.mxu0 0.0
    %1284 = vmatpush1.msra.mxu0 0.0
    %1285 = vmatprep.subr.mxu0 0.0
    %1286 = vmatpush1.msra.mxu0 0.0
    %1287 = vmatprep.subr.mxu0 0.0
    %1288 = vmatpush1.msra.mxu0 0.0
    %1289 = vmatprep.subr.mxu0 0.0
    %1290 = vmatpush1.msra.mxu0 0.0
    %1291 = vmatprep.subr.mxu0 0.0
    %1292 = vmatpush1.msra.mxu0 0.0
    %1293 = vmatprep.subr.mxu0 0.0
    %1294 = vmatpush1.msra.mxu0 0.0
    %1295 = vmatprep.subr.mxu0 0.0
    %1296 = vmatpush1.msra.mxu0 0.0
    %1297 = vmatprep.subr.mxu0 0.0
    %1298 = vmatpush1.msra.mxu0 0.0
    %1299 = vmatprep.subr.mxu0 0.0
    %1300 = vmatpush1.msra.mxu0 0.0
    %1301 = vmatprep.subr.mxu0 0.0
    %1302 = vmatpush1.msra.mxu0 0.0
    %1303 = vmatprep.subr.mxu0 0.0
    %1304 = vmatpush1.msra.mxu0 0.0
    %1305 = vmatprep.subr.mxu0 0.0
    %1306 = vmatpush1.msra.mxu0 0.0
    %1307 = vmatprep.subr.mxu0 0.0
    %1308 = vmatpush1.msra.mxu0 0.0
    %1309 = vmatprep.subr.mxu0 0.0
    %1310 = vmatpush1.msra.mxu0 0.0
    %1311 = vmatprep.subr.mxu0 0.0
    %1312 = vmatpush1.msra.mxu0 0.0
    %1313 = vmatprep.subr.mxu0 0.0
    %1314 = vmatpush1.msra.mxu0 0.0
    %1315 = vmatprep.subr.mxu0 0.0
    %1316 = vmatpush1.msra.mxu0 0.0
    %1317 = vmatprep.subr.mxu0 0.0
    %1318 = vmatpush1.msra.mxu0 0.0
    %1319 = vmatprep.subr.mxu0 0.0
    %1320 = vmatpush1.msra.mxu0 0.0
    %1321 = vmatprep.subr.mxu0 0.0
    %1322 = vmatpush1.msra.mxu0 0.0
    %1323 = vmatprep.mubr.f32.mxu0 0.0
    %1324 = vmatmul.mubr.f32.gmra.mrb[0].mxu0 %v1255
    %v1325 = vpop.f32.mrb[0].mxu0
    %v1326 = vadd.f32 0.0, %v1325
    %v1327 = vpop.f32.mrb[0].mxu0
    %1328 = vdwg.mxu0
    %v1330 = vrot.slane %v1243, 5
    %v1331 = vrot.slane %v1245, 5
    %v1332 = vsel %vm273, %v1330, %v1331
    %1333 = vrot.lane.b32.xlu0 %v531, 56
    %v1334 = vpop.permute.xlu0 %1333
    %v1335 = vsel %vm1196, %v1332, 0
    %v1337 = vsel %vm445, %v1334, 0
    %1339 = vmatprep.subr.mxu0 0.0
    %1340 = vmatpush1.msra.mxu0 %v1337
    %1341 = vmatprep.subr.mxu0 0.0
    %1342 = vmatpush1.msra.mxu0 0.0
    %1343 = vmatprep.subr.mxu0 0.0
    %1344 = vmatpush1.msra.mxu0 0.0
    %1345 = vmatprep.subr.mxu0 0.0
    %1346 = vmatpush1.msra.mxu0 0.0
    %1347 = vmatprep.subr.mxu0 0.0
    %1348 = vmatpush1.msra.mxu0 0.0
    %1349 = vmatprep.subr.mxu0 0.0
    %1350 = vmatpush1.msra.mxu0 0.0
    %1351 = vmatprep.subr.mxu0 0.0
    %1352 = vmatpush1.msra.mxu0 0.0
    %1353 = vmatprep.subr.mxu0 0.0
    %1354 = vmatpush1.msra.mxu0 0.0
    %1355 = vmatprep.subr.mxu0 0.0
    %1356 = vmatpush1.msra.mxu0 0.0
    %1357 = vmatprep.subr.mxu0 0.0
    %1358 = vmatpush1.msra.mxu0 0.0
    %1359 = vmatprep.subr.mxu0 0.0
    %1360 = vmatpush1.msra.mxu0 0.0
    %1361 = vmatprep.subr.mxu0 0.0
    %1362 = vmatpush1.msra.mxu0 0.0
    %1363 = vmatprep.subr.mxu0 0.0
    %1364 = vmatpush1.msra.mxu0 0.0
    %1365 = vmatprep.subr.mxu0 0.0
    %1366 = vmatpush1.msra.mxu0 0.0
    %1367 = vmatprep.subr.mxu0 0.0
    %1368 = vmatpush1.msra.mxu0 0.0
    %1369 = vmatprep.subr.mxu0 0.0
    %1370 = vmatpush1.msra.mxu0 0.0
    %1371 = vmatprep.subr.mxu0 0.0
    %1372 = vmatpush1.msra.mxu0 0.0
    %1373 = vmatprep.subr.mxu0 0.0
    %1374 = vmatpush1.msra.mxu0 0.0
    %1375 = vmatprep.subr.mxu0 0.0
    %1376 = vmatpush1.msra.mxu0 0.0
    %1377 = vmatprep.subr.mxu0 0.0
    %1378 = vmatpush1.msra.mxu0 0.0
    %1379 = vmatprep.subr.mxu0 0.0
    %1380 = vmatpush1.msra.mxu0 0.0
    %1381 = vmatprep.subr.mxu0 0.0
    %1382 = vmatpush1.msra.mxu0 0.0
    %1383 = vmatprep.subr.mxu0 0.0
    %1384 = vmatpush1.msra.mxu0 0.0
    %1385 = vmatprep.subr.mxu0 0.0
    %1386 = vmatpush1.msra.mxu0 0.0
    %1387 = vmatprep.subr.mxu0 0.0
    %1388 = vmatpush1.msra.mxu0 0.0
    %1389 = vmatprep.subr.mxu0 0.0
    %1390 = vmatpush1.msra.mxu0 0.0
    %1391 = vmatprep.subr.mxu0 0.0
    %1392 = vmatpush1.msra.mxu0 0.0
    %1393 = vmatprep.subr.mxu0 0.0
    %1394 = vmatpush1.msra.mxu0 0.0
    %1395 = vmatprep.subr.mxu0 0.0
    %1396 = vmatpush1.msra.mxu0 0.0
    %1397 = vmatprep.subr.mxu0 0.0
    %1398 = vmatpush1.msra.mxu0 0.0
    %1399 = vmatprep.subr.mxu0 0.0
    %1400 = vmatpush1.msra.mxu0 0.0
    %1401 = vmatprep.subr.mxu0 0.0
    %1402 = vmatpush1.msra.mxu0 0.0
    %1403 = vmatprep.mubr.f32.mxu0 0.0
    %1404 = vmatmul.mubr.f32.gmra.mrb[0].mxu0 %v1335
    %v1405 = vpop.f32.mrb[0].mxu0
    %v1406 = vadd.f32 0.0, %v1405
    %v1407 = vpop.f32.mrb[0].mxu0
    %1408 = vdwg.mxu0
    %v1409 = vrot.slane %v1245, 2
    %1410 = vrot.lane.b32.xlu0 %v531, 48
    %v1411 = vpop.permute.xlu0 %1410
    %v1412 = vsel %vm1196, %v1409, 0
    %v1414 = vsel %vm445, %v1411, 0
    %1416 = vmatprep.subr.mxu0 0.0
    %1417 = vmatpush1.msra.mxu0 %v1414
    %1418 = vmatprep.subr.mxu0 0.0
    %1419 = vmatpush1.msra.mxu0 0.0
    %1420 = vmatprep.subr.mxu0 0.0
    %1421 = vmatpush1.msra.mxu0 0.0
    %1422 = vmatprep.subr.mxu0 0.0
    %1423 = vmatpush1.msra.mxu0 0.0
    %1424 = vmatprep.subr.mxu0 0.0
    %1425 = vmatpush1.msra.mxu0 0.0
    %1426 = vmatprep.subr.mxu0 0.0
    %1427 = vmatpush1.msra.mxu0 0.0
    %1428 = vmatprep.subr.mxu0 0.0
    %1429 = vmatpush1.msra.mxu0 0.0
    %1430 = vmatprep.subr.mxu0 0.0
    %1431 = vmatpush1.msra.mxu0 0.0
    %1432 = vmatprep.subr.mxu0 0.0
    %1433 = vmatpush1.msra.mxu0 0.0
    %1434 = vmatprep.subr.mxu0 0.0
    %1435 = vmatpush1.msra.mxu0 0.0
    %1436 = vmatprep.subr.mxu0 0.0
    %1437 = vmatpush1.msra.mxu0 0.0
    %1438 = vmatprep.subr.mxu0 0.0
    %1439 = vmatpush1.msra.mxu0 0.0
    %1440 = vmatprep.subr.mxu0 0.0
    %1441 = vmatpush1.msra.mxu0 0.0
    %1442 = vmatprep.subr.mxu0 0.0
    %1443 = vmatpush1.msra.mxu0 0.0
    %1444 = vmatprep.subr.mxu0 0.0
    %1445 = vmatpush1.msra.mxu0 0.0
    %1446 = vmatprep.subr.mxu0 0.0
    %1447 = vmatpush1.msra.mxu0 0.0
    %1448 = vmatprep.subr.mxu0 0.0
    %1449 = vmatpush1.msra.mxu0 0.0
    %1450 = vmatprep.subr.mxu0 0.0
    %1451 = vmatpush1.msra.mxu0 0.0
    %1452 = vmatprep.subr.mxu0 0.0
    %1453 = vmatpush1.msra.mxu0 0.0
    %1454 = vmatprep.subr.mxu0 0.0
    %1455 = vmatpush1.msra.mxu0 0.0
    %1456 = vmatprep.subr.mxu0 0.0
    %1457 = vmatpush1.msra.mxu0 0.0
    %1458 = vmatprep.subr.mxu0 0.0
    %1459 = vmatpush1.msra.mxu0 0.0
    %1460 = vmatprep.subr.mxu0 0.0
    %1461 = vmatpush1.msra.mxu0 0.0
    %1462 = vmatprep.subr.mxu0 0.0
    %1463 = vmatpush1.msra.mxu0 0.0
    %1464 = vmatprep.subr.mxu0 0.0
    %1465 = vmatpush1.msra.mxu0 0.0
    %1466 = vmatprep.subr.mxu0 0.0
    %1467 = vmatpush1.msra.mxu0 0.0
    %1468 = vmatprep.subr.mxu0 0.0
    %1469 = vmatpush1.msra.mxu0 0.0
    %1470 = vmatprep.subr.mxu0 0.0
    %1471 = vmatpush1.msra.mxu0 0.0
    %1472 = vmatprep.subr.mxu0 0.0
    %1473 = vmatpush1.msra.mxu0 0.0
    %1474 = vmatprep.subr.mxu0 0.0
    %1475 = vmatpush1.msra.mxu0 0.0
    %1476 = vmatprep.subr.mxu0 0.0
    %1477 = vmatpush1.msra.mxu0 0.0
    %1478 = vmatprep.subr.mxu0 0.0
    %1479 = vmatpush1.msra.mxu0 0.0
    %1480 = vmatprep.mubr.f32.mxu0 0.0
    %1481 = vmatmul.mubr.f32.gmra.mrb[0].mxu0 %v1412
    %v1482 = vpop.f32.mrb[0].mxu0
    %v1483 = vadd.f32 0.0, %v1482
    %v1484 = vpop.f32.mrb[0].mxu0
    %1485 = vdwg.mxu0
    %v1487 = vrot.slane %v1245, 7
    %v1488 = vrot.slane %v1247, 7
    %v1489 = vsel %vm1192, %v1487, %v1488
    %1490 = vrot.lane.b32.xlu0 %v531, 40
    %v1491 = vpop.permute.xlu0 %1490
    %v1492 = vsel %vm1196, %v1489, 0
    %v1494 = vsel %vm445, %v1491, 0
    %1496 = vmatprep.subr.mxu0 0.0
    %1497 = vmatpush1.msra.mxu0 %v1494
    %1498 = vmatprep.subr.mxu0 0.0
    %1499 = vmatpush1.msra.mxu0 0.0
    %1500 = vmatprep.subr.mxu0 0.0
    %1501 = vmatpush1.msra.mxu0 0.0
    %1502 = vmatprep.subr.mxu0 0.0
    %1503 = vmatpush1.msra.mxu0 0.0
    %1504 = vmatprep.subr.mxu0 0.0
    %1505 = vmatpush1.msra.mxu0 0.0
    %1506 = vmatprep.subr.mxu0 0.0
    %1507 = vmatpush1.msra.mxu0 0.0
    %1508 = vmatprep.subr.mxu0 0.0
    %1509 = vmatpush1.msra.mxu0 0.0
    %1510 = vmatprep.subr.mxu0 0.0
    %1511 = vmatpush1.msra.mxu0 0.0
    %1512 = vmatprep.subr.mxu0 0.0
    %1513 = vmatpush1.msra.mxu0 0.0
    %1514 = vmatprep.subr.mxu0 0.0
    %1515 = vmatpush1.msra.mxu0 0.0
    %1516 = vmatprep.subr.mxu0 0.0
    %1517 = vmatpush1.msra.mxu0 0.0
    %1518 = vmatprep.subr.mxu0 0.0
    %1519 = vmatpush1.msra.mxu0 0.0
    %1520 = vmatprep.subr.mxu0 0.0
    %1521 = vmatpush1.msra.mxu0 0.0
    %1522 = vmatprep.subr.mxu0 0.0
    %1523 = vmatpush1.msra.mxu0 0.0
    %1524 = vmatprep.subr.mxu0 0.0
    %1525 = vmatpush1.msra.mxu0 0.0
    %1526 = vmatprep.subr.mxu0 0.0
    %1527 = vmatpush1.msra.mxu0 0.0
    %1528 = vmatprep.subr.mxu0 0.0
    %1529 = vmatpush1.msra.mxu0 0.0
    %1530 = vmatprep.subr.mxu0 0.0
    %1531 = vmatpush1.msra.mxu0 0.0
    %1532 = vmatprep.subr.mxu0 0.0
    %1533 = vmatpush1.msra.mxu0 0.0
    %1534 = vmatprep.subr.mxu0 0.0
    %1535 = vmatpush1.msra.mxu0 0.0
    %1536 = vmatprep.subr.mxu0 0.0
    %1537 = vmatpush1.msra.mxu0 0.0
    %1538 = vmatprep.subr.mxu0 0.0
    %1539 = vmatpush1.msra.mxu0 0.0
    %1540 = vmatprep.subr.mxu0 0.0
    %1541 = vmatpush1.msra.mxu0 0.0
    %1542 = vmatprep.subr.mxu0 0.0
    %1543 = vmatpush1.msra.mxu0 0.0
    %1544 = vmatprep.subr.mxu0 0.0
    %1545 = vmatpush1.msra.mxu0 0.0
    %1546 = vmatprep.subr.mxu0 0.0
    %1547 = vmatpush1.msra.mxu0 0.0
    %1548 = vmatprep.subr.mxu0 0.0
    %1549 = vmatpush1.msra.mxu0 0.0
    %1550 = vmatprep.subr.mxu0 0.0
    %1551 = vmatpush1.msra.mxu0 0.0
    %1552 = vmatprep.subr.mxu0 0.0
    %1553 = vmatpush1.msra.mxu0 0.0
    %1554 = vmatprep.subr.mxu0 0.0
    %1555 = vmatpush1.msra.mxu0 0.0
    %1556 = vmatprep.subr.mxu0 0.0
    %1557 = vmatpush1.msra.mxu0 0.0
    %1558 = vmatprep.subr.mxu0 0.0
    %1559 = vmatpush1.msra.mxu0 0.0
    %1560 = vmatprep.mubr.f32.mxu0 0.0
    %1561 = vmatmul.mubr.f32.gmra.mrb[0].mxu0 %v1492
    %v1562 = vpop.f32.mrb[0].mxu0
    %v1563 = vadd.f32 0.0, %v1562
    %v1564 = vpop.f32.mrb[0].mxu0
    %1565 = vdwg.mxu0
    %1567 = vrot.lane.b32.xlu0 %v1406, 8
    %v1568 = vpop.permute.xlu0 %1567
    %1571 = vrot.lane.b32.xlu0 %v1483, 16
    %v1572 = vpop.permute.xlu0 %1571
    %1575 = vrot.lane.b32.xlu0 %v1563, 24
    %v1576 = vpop.permute.xlu0 %1575
    %v1578 = vsel %vm542, %v1326, %v1568
    %vm1579 = vcmask 130048
    %v1580 = vsel %vm1579, %v1578, %v1572
    %vm1581 = vcmask 195584
    %v1582 = vsel %vm1581, %v1580, %v1576
    %v1584 = vrot.slane %v1247, 4
    %v1585 = vrot.slane %v1249, 4
    %v1586 = vsel %vm275, %v1584, %v1585
    %1587 = vrot.lane.b32.xlu0 %v854, 64
    %v1588 = vpop.permute.xlu0 %1587
    %v1589 = vsel %vm1196, %v1586, 0
    %v1591 = vsel %vm445, %v1588, 0
    %1593 = vmatprep.subr.mxu0 0.0
    %1594 = vmatpush1.msra.mxu0 %v1591
    %1595 = vmatprep.subr.mxu0 0.0
    %1596 = vmatpush1.msra.mxu0 0.0
    %1597 = vmatprep.subr.mxu0 0.0
    %1598 = vmatpush1.msra.mxu0 0.0
    %1599 = vmatprep.subr.mxu0 0.0
    %1600 = vmatpush1.msra.mxu0 0.0
    %1601 = vmatprep.subr.mxu0 0.0
    %1602 = vmatpush1.msra.mxu0 0.0
    %1603 = vmatprep.subr.mxu0 0.0
    %1604 = vmatpush1.msra.mxu0 0.0
    %1605 = vmatprep.subr.mxu0 0.0
    %1606 = vmatpush1.msra.mxu0 0.0
    %1607 = vmatprep.subr.mxu0 0.0
    %1608 = vmatpush1.msra.mxu0 0.0
    %1609 = vmatprep.subr.mxu0 0.0
    %1610 = vmatpush1.msra.mxu0 0.0
    %1611 = vmatprep.subr.mxu0 0.0
    %1612 = vmatpush1.msra.mxu0 0.0
    %1613 = vmatprep.subr.mxu0 0.0
    %1614 = vmatpush1.msra.mxu0 0.0
    %1615 = vmatprep.subr.mxu0 0.0
    %1616 = vmatpush1.msra.mxu0 0.0
    %1617 = vmatprep.subr.mxu0 0.0
    %1618 = vmatpush1.msra.mxu0 0.0
    %1619 = vmatprep.subr.mxu0 0.0
    %1620 = vmatpush1.msra.mxu0 0.0
    %1621 = vmatprep.subr.mxu0 0.0
    %1622 = vmatpush1.msra.mxu0 0.0
    %1623 = vmatprep.subr.mxu0 0.0
    %1624 = vmatpush1.msra.mxu0 0.0
    %1625 = vmatprep.subr.mxu0 0.0
    %1626 = vmatpush1.msra.mxu0 0.0
    %1627 = vmatprep.subr.mxu0 0.0
    %1628 = vmatpush1.msra.mxu0 0.0
    %1629 = vmatprep.subr.mxu0 0.0
    %1630 = vmatpush1.msra.mxu0 0.0
    %1631 = vmatprep.subr.mxu0 0.0
    %1632 = vmatpush1.msra.mxu0 0.0
    %1633 = vmatprep.subr.mxu0 0.0
    %1634 = vmatpush1.msra.mxu0 0.0
    %1635 = vmatprep.subr.mxu0 0.0
    %1636 = vmatpush1.msra.mxu0 0.0
    %1637 = vmatprep.subr.mxu0 0.0
    %1638 = vmatpush1.msra.mxu0 0.0
    %1639 = vmatprep.subr.mxu0 0.0
    %1640 = vmatpush1.msra.mxu0 0.0
    %1641 = vmatprep.subr.mxu0 0.0
    %1642 = vmatpush1.msra.mxu0 0.0
    %1643 = vmatprep.subr.mxu0 0.0
    %1644 = vmatpush1.msra.mxu0 0.0
    %1645 = vmatprep.subr.mxu0 0.0
    %1646 = vmatpush1.msra.mxu0 0.0
    %1647 = vmatprep.subr.mxu0 0.0
    %1648 = vmatpush1.msra.mxu0 0.0
    %1649 = vmatprep.subr.mxu0 0.0
    %1650 = vmatpush1.msra.mxu0 0.0
    %1651 = vmatprep.subr.mxu0 0.0
    %1652 = vmatpush1.msra.mxu0 0.0
    %1653 = vmatprep.subr.mxu0 0.0
    %1654 = vmatpush1.msra.mxu0 0.0
    %1655 = vmatprep.subr.mxu0 0.0
    %1656 = vmatpush1.msra.mxu0 0.0
    %1657 = vmatprep.mubr.f32.mxu0 0.0
    %1658 = vmatmul.mubr.f32.gmra.mrb[0].mxu0 %v1589
    %v1659 = vpop.f32.mrb[0].mxu0
    %v1660 = vadd.f32 0.0, %v1659
    %v1661 = vpop.f32.mrb[0].mxu0
    %1662 = vdwg.mxu0
    %v1663 = vrot.slane %v1249, 1
    %1664 = vrot.lane.b32.xlu0 %v854, 56
    %v1665 = vpop.permute.xlu0 %1664
    %v1666 = vsel %vm1196, %v1663, 0
    %v1668 = vsel %vm445, %v1665, 0
    %1670 = vmatprep.subr.mxu0 0.0
    %1671 = vmatpush1.msra.mxu0 %v1668
    %1672 = vmatprep.subr.mxu0 0.0
    %1673 = vmatpush1.msra.mxu0 0.0
    %1674 = vmatprep.subr.mxu0 0.0
    %1675 = vmatpush1.msra.mxu0 0.0
    %1676 = vmatprep.subr.mxu0 0.0
    %1677 = vmatpush1.msra.mxu0 0.0
    %1678 = vmatprep.subr.mxu0 0.0
    %1679 = vmatpush1.msra.mxu0 0.0
    %1680 = vmatprep.subr.mxu0 0.0
    %1681 = vmatpush1.msra.mxu0 0.0
    %1682 = vmatprep.subr.mxu0 0.0
    %1683 = vmatpush1.msra.mxu0 0.0
    %1684 = vmatprep.subr.mxu0 0.0
    %1685 = vmatpush1.msra.mxu0 0.0
    %1686 = vmatprep.subr.mxu0 0.0
    %1687 = vmatpush1.msra.mxu0 0.0
    %1688 = vmatprep.subr.mxu0 0.0
    %1689 = vmatpush1.msra.mxu0 0.0
    %1690 = vmatprep.subr.mxu0 0.0
    %1691 = vmatpush1.msra.mxu0 0.0
    %1692 = vmatprep.subr.mxu0 0.0
    %1693 = vmatpush1.msra.mxu0 0.0
    %1694 = vmatprep.subr.mxu0 0.0
    %1695 = vmatpush1.msra.mxu0 0.0
    %1696 = vmatprep.subr.mxu0 0.0
    %1697 = vmatpush1.msra.mxu0 0.0
    %1698 = vmatprep.subr.mxu0 0.0
    %1699 = vmatpush1.msra.mxu0 0.0
    %1700 = vmatprep.subr.mxu0 0.0
    %1701 = vmatpush1.msra.mxu0 0.0
    %1702 = vmatprep.subr.mxu0 0.0
    %1703 = vmatpush1.msra.mxu0 0.0
    %1704 = vmatprep.subr.mxu0 0.0
    %1705 = vmatpush1.msra.mxu0 0.0
    %1706 = vmatprep.subr.mxu0 0.0
    %1707 = vmatpush1.msra.mxu0 0.0
    %1708 = vmatprep.subr.mxu0 0.0
    %1709 = vmatpush1.msra.mxu0 0.0
    %1710 = vmatprep.subr.mxu0 0.0
    %1711 = vmatpush1.msra.mxu0 0.0
    %1712 = vmatprep.subr.mxu0 0.0
    %1713 = vmatpush1.msra.mxu0 0.0
    %1714 = vmatprep.subr.mxu0 0.0
    %1715 = vmatpush1.msra.mxu0 0.0
    %1716 = vmatprep.subr.mxu0 0.0
    %1717 = vmatpush1.msra.mxu0 0.0
    %1718 = vmatprep.subr.mxu0 0.0
    %1719 = vmatpush1.msra.mxu0 0.0
    %1720 = vmatprep.subr.mxu0 0.0
    %1721 = vmatpush1.msra.mxu0 0.0
    %1722 = vmatprep.subr.mxu0 0.0
    %1723 = vmatpush1.msra.mxu0 0.0
    %1724 = vmatprep.subr.mxu0 0.0
    %1725 = vmatpush1.msra.mxu0 0.0
    %1726 = vmatprep.subr.mxu0 0.0
    %1727 = vmatpush1.msra.mxu0 0.0
    %1728 = vmatprep.subr.mxu0 0.0
    %1729 = vmatpush1.msra.mxu0 0.0
    %1730 = vmatprep.subr.mxu0 0.0
    %1731 = vmatpush1.msra.mxu0 0.0
    %1732 = vmatprep.subr.mxu0 0.0
    %1733 = vmatpush1.msra.mxu0 0.0
    %1734 = vmatprep.mubr.f32.mxu0 0.0
    %1735 = vmatmul.mubr.f32.gmra.mrb[0].mxu0 %v1666
    %v1736 = vpop.f32.mrb[0].mxu0
    %v1737 = vadd.f32 0.0, %v1736
    %v1738 = vpop.f32.mrb[0].mxu0
    %1739 = vdwg.mxu0
    %v1741 = vrot.slane %v1249, 6
    %v1742 = vrot.slane %v1251, 6
    %v1743 = vsel %vm1187, %v1741, %v1742
    %1744 = vrot.lane.b32.xlu0 %v854, 48
    %v1745 = vpop.permute.xlu0 %1744
    %v1746 = vsel %vm1196, %v1743, 0
    %v1748 = vsel %vm445, %v1745, 0
    %1750 = vmatprep.subr.mxu0 0.0
    %1751 = vmatpush1.msra.mxu0 %v1748
    %1752 = vmatprep.subr.mxu0 0.0
    %1753 = vmatpush1.msra.mxu0 0.0
    %1754 = vmatprep.subr.mxu0 0.0
    %1755 = vmatpush1.msra.mxu0 0.0
    %1756 = vmatprep.subr.mxu0 0.0
    %1757 = vmatpush1.msra.mxu0 0.0
    %1758 = vmatprep.subr.mxu0 0.0
    %1759 = vmatpush1.msra.mxu0 0.0
    %1760 = vmatprep.subr.mxu0 0.0
    %1761 = vmatpush1.msra.mxu0 0.0
    %1762 = vmatprep.subr.mxu0 0.0
    %1763 = vmatpush1.msra.mxu0 0.0
    %1764 = vmatprep.subr.mxu0 0.0
    %1765 = vmatpush1.msra.mxu0 0.0
    %1766 = vmatprep.subr.mxu0 0.0
    %1767 = vmatpush1.msra.mxu0 0.0
    %1768 = vmatprep.subr.mxu0 0.0
    %1769 = vmatpush1.msra.mxu0 0.0
    %1770 = vmatprep.subr.mxu0 0.0
    %1771 = vmatpush1.msra.mxu0 0.0
    %1772 = vmatprep.subr.mxu0 0.0
    %1773 = vmatpush1.msra.mxu0 0.0
    %1774 = vmatprep.subr.mxu0 0.0
    %1775 = vmatpush1.msra.mxu0 0.0
    %1776 = vmatprep.subr.mxu0 0.0
    %1777 = vmatpush1.msra.mxu0 0.0
    %1778 = vmatprep.subr.mxu0 0.0
    %1779 = vmatpush1.msra.mxu0 0.0
    %1780 = vmatprep.subr.mxu0 0.0
    %1781 = vmatpush1.msra.mxu0 0.0
    %1782 = vmatprep.subr.mxu0 0.0
    %1783 = vmatpush1.msra.mxu0 0.0
    %1784 = vmatprep.subr.mxu0 0.0
    %1785 = vmatpush1.msra.mxu0 0.0
    %1786 = vmatprep.subr.mxu0 0.0
    %1787 = vmatpush1.msra.mxu0 0.0
    %1788 = vmatprep.subr.mxu0 0.0
    %1789 = vmatpush1.msra.mxu0 0.0
    %1790 = vmatprep.subr.mxu0 0.0
    %1791 = vmatpush1.msra.mxu0 0.0
    %1792 = vmatprep.subr.mxu0 0.0
    %1793 = vmatpush1.msra.mxu0 0.0
    %1794 = vmatprep.subr.mxu0 0.0
    %1795 = vmatpush1.msra.mxu0 0.0
    %1796 = vmatprep.subr.mxu0 0.0
    %1797 = vmatpush1.msra.mxu0 0.0
    %1798 = vmatprep.subr.mxu0 0.0
    %1799 = vmatpush1.msra.mxu0 0.0
    %1800 = vmatprep.subr.mxu0 0.0
    %1801 = vmatpush1.msra.mxu0 0.0
    %1802 = vmatprep.subr.mxu0 0.0
    %1803 = vmatpush1.msra.mxu0 0.0
    %1804 = vmatprep.subr.mxu0 0.0
    %1805 = vmatpush1.msra.mxu0 0.0
    %1806 = vmatprep.subr.mxu0 0.0
    %1807 = vmatpush1.msra.mxu0 0.0
    %1808 = vmatprep.subr.mxu0 0.0
    %1809 = vmatpush1.msra.mxu0 0.0
    %1810 = vmatprep.subr.mxu0 0.0
    %1811 = vmatpush1.msra.mxu0 0.0
    %1812 = vmatprep.subr.mxu0 0.0
    %1813 = vmatpush1.msra.mxu0 0.0
    %1814 = vmatprep.mubr.f32.mxu0 0.0
    %1815 = vmatmul.mubr.f32.gmra.mrb[0].mxu0 %v1746
    %v1816 = vpop.f32.mrb[0].mxu0
    %v1817 = vadd.f32 0.0, %v1816
    %v1818 = vpop.f32.mrb[0].mxu0
    %1819 = vdwg.mxu0
    %v1820 = vrot.slane %v1251, 3
    %1821 = vrot.lane.b32.xlu0 %v854, 40
    %v1822 = vpop.permute.xlu0 %1821
    %v1823 = vsel %vm1196, %v1820, 0
    %v1825 = vsel %vm445, %v1822, 0
    %1827 = vmatprep.subr.mxu0 0.0
    %1828 = vmatpush1.msra.mxu0 %v1825
    %1829 = vmatprep.subr.mxu0 0.0
    %1830 = vmatpush1.msra.mxu0 0.0
    %1831 = vmatprep.subr.mxu0 0.0
    %1832 = vmatpush1.msra.mxu0 0.0
    %1833 = vmatprep.subr.mxu0 0.0
    %1834 = vmatpush1.msra.mxu0 0.0
    %1835 = vmatprep.subr.mxu0 0.0
    %1836 = vmatpush1.msra.mxu0 0.0
    %1837 = vmatprep.subr.mxu0 0.0
    %1838 = vmatpush1.msra.mxu0 0.0
    %1839 = vmatprep.subr.mxu0 0.0
    %1840 = vmatpush1.msra.mxu0 0.0
    %1841 = vmatprep.subr.mxu0 0.0
    %1842 = vmatpush1.msra.mxu0 0.0
    %1843 = vmatprep.subr.mxu0 0.0
    %1844 = vmatpush1.msra.mxu0 0.0
    %1845 = vmatprep.subr.mxu0 0.0
    %1846 = vmatpush1.msra.mxu0 0.0
    %1847 = vmatprep.subr.mxu0 0.0
    %1848 = vmatpush1.msra.mxu0 0.0
    %1849 = vmatprep.subr.mxu0 0.0
    %1850 = vmatpush1.msra.mxu0 0.0
    %1851 = vmatprep.subr.mxu0 0.0
    %1852 = vmatpush1.msra.mxu0 0.0
    %1853 = vmatprep.subr.mxu0 0.0
    %1854 = vmatpush1.msra.mxu0 0.0
    %1855 = vmatprep.subr.mxu0 0.0
    %1856 = vmatpush1.msra.mxu0 0.0
    %1857 = vmatprep.subr.mxu0 0.0
    %1858 = vmatpush1.msra.mxu0 0.0
    %1859 = vmatprep.subr.mxu0 0.0
    %1860 = vmatpush1.msra.mxu0 0.0
    %1861 = vmatprep.subr.mxu0 0.0
    %1862 = vmatpush1.msra.mxu0 0.0
    %1863 = vmatprep.subr.mxu0 0.0
    %1864 = vmatpush1.msra.mxu0 0.0
    %1865 = vmatprep.subr.mxu0 0.0
    %1866 = vmatpush1.msra.mxu0 0.0
    %1867 = vmatprep.subr.mxu0 0.0
    %1868 = vmatpush1.msra.mxu0 0.0
    %1869 = vmatprep.subr.mxu0 0.0
    %1870 = vmatpush1.msra.mxu0 0.0
    %1871 = vmatprep.subr.mxu0 0.0
    %1872 = vmatpush1.msra.mxu0 0.0
    %1873 = vmatprep.subr.mxu0 0.0
    %1874 = vmatpush1.msra.mxu0 0.0
    %1875 = vmatprep.subr.mxu0 0.0
    %1876 = vmatpush1.msra.mxu0 0.0
    %1877 = vmatprep.subr.mxu0 0.0
    %1878 = vmatpush1.msra.mxu0 0.0
    %1879 = vmatprep.subr.mxu0 0.0
    %1880 = vmatpush1.msra.mxu0 0.0
    %1881 = vmatprep.subr.mxu0 0.0
    %1882 = vmatpush1.msra.mxu0 0.0
    %1883 = vmatprep.subr.mxu0 0.0
    %1884 = vmatpush1.msra.mxu0 0.0
    %1885 = vmatprep.subr.mxu0 0.0
    %1886 = vmatpush1.msra.mxu0 0.0
    %1887 = vmatprep.subr.mxu0 0.0
    %1888 = vmatpush1.msra.mxu0 0.0
    %1889 = vmatprep.subr.mxu0 0.0
    %1890 = vmatpush1.msra.mxu0 0.0
    %1891 = vmatprep.mubr.f32.mxu0 0.0
    %1892 = vmatmul.mubr.f32.gmra.mrb[0].mxu0 %v1823
    %v1893 = vpop.f32.mrb[0].mxu0
    %v1894 = vadd.f32 0.0, %v1893
    %v1895 = vpop.f32.mrb[0].mxu0
    %1896 = vdwg.mxu0
    %1898 = vrot.lane.b32.xlu0 %v1737, 8
    %v1899 = vpop.permute.xlu0 %1898
    %1902 = vrot.lane.b32.xlu0 %v1817, 16
    %v1903 = vpop.permute.xlu0 %1902
    %1906 = vrot.lane.b32.xlu0 %v1894, 24
    %v1907 = vpop.permute.xlu0 %1906
    %v1909 = vsel %vm542, %v1660, %v1899
    %v1910 = vsel %vm1579, %v1909, %v1903
    %v1911 = vsel %vm1581, %v1910, %v1907
    %v1913 = vrot.slane %v1911, 3
    %v1915 = vsel %vm445, %v1582, %v1913
    %v1916 = vld [vmem:[%s10] sm:$0xff]
    %v1917 = vld [vmem:[%s10 + $0x8] sm:$0xff]
    %v1918 = vld [vmem:[%s10 + $0x10] sm:$0xff]
    %v1919 = vld [vmem:[%s10 + $0x18] sm:$0xff]
    %v1920 = vld [vmem:[%s11] sm:$0x1]
    %v1922 = vlaneseq
    %v1923 = vshrl.u32 %v1922, 7
    %v1924 = vsub.s32 0, %v1923
    %v1925 = vrot.slane %v1920, %v1924
    %v1928 = vsel %vm458, %v1915, 0
    %v1930 = vsel %vm458, %v1913, 0
    %1932 = vmatprep.subr.mxu0 0.0
    %1933 = vmatpush1.msra.mxu0 %v1916
    %1934 = vmatprep.subr.mxu0 0.0
    %1935 = vmatpush1.msra.mxu0 %v1917
    %1936 = vmatprep.subr.mxu0 0.0
    %1937 = vmatpush1.msra.mxu0 %v1918
    %1938 = vmatprep.subr.mxu0 0.0
    %1939 = vmatpush1.msra.mxu0 %v1919
    %1940 = vmatprep.subr.mxu0 0.0
    %1941 = vmatpush1.msra.mxu0 0.0
    %1942 = vmatprep.subr.mxu0 0.0
    %1943 = vmatpush1.msra.mxu0 0.0
    %1944 = vmatprep.subr.mxu0 0.0
    %1945 = vmatpush1.msra.mxu0 0.0
    %1946 = vmatprep.subr.mxu0 0.0
    %1947 = vmatpush1.msra.mxu0 0.0
    %1948 = vmatprep.subr.mxu0 0.0
    %1949 = vmatpush1.msra.mxu0 0.0
    %1950 = vmatprep.subr.mxu0 0.0
    %1951 = vmatpush1.msra.mxu0 0.0
    %1952 = vmatprep.subr.mxu0 0.0
    %1953 = vmatpush1.msra.mxu0 0.0
    %1954 = vmatprep.subr.mxu0 0.0
    %1955 = vmatpush1.msra.mxu0 0.0
    %1956 = vmatprep.subr.mxu0 0.0
    %1957 = vmatpush1.msra.mxu0 0.0
    %1958 = vmatprep.subr.mxu0 0.0
    %1959 = vmatpush1.msra.mxu0 0.0
    %1960 = vmatprep.subr.mxu0 0.0
    %1961 = vmatpush1.msra.mxu0 0.0
    %1962 = vmatprep.subr.mxu0 0.0
    %1963 = vmatpush1.msra.mxu0 0.0
    %1964 = vmatprep.subr.mxu0 0.0
    %1965 = vmatpush1.msra.mxu0 0.0
    %1966 = vmatprep.subr.mxu0 0.0
    %1967 = vmatpush1.msra.mxu0 0.0
    %1968 = vmatprep.subr.mxu0 0.0
    %1969 = vmatpush1.msra.mxu0 0.0
    %1970 = vmatprep.subr.mxu0 0.0
    %1971 = vmatpush1.msra.mxu0 0.0
    %1972 = vmatprep.subr.mxu0 0.0
    %1973 = vmatpush1.msra.mxu0 0.0
    %1974 = vmatprep.subr.mxu0 0.0
    %1975 = vmatpush1.msra.mxu0 0.0
    %1976 = vmatprep.subr.mxu0 0.0
    %1977 = vmatpush1.msra.mxu0 0.0
    %1978 = vmatprep.subr.mxu0 0.0
    %1979 = vmatpush1.msra.mxu0 0.0
    %1980 = vmatprep.subr.mxu0 0.0
    %1981 = vmatpush1.msra.mxu0 0.0
    %1982 = vmatprep.subr.mxu0 0.0
    %1983 = vmatpush1.msra.mxu0 0.0
    %1984 = vmatprep.subr.mxu0 0.0
    %1985 = vmatpush1.msra.mxu0 0.0
    %1986 = vmatprep.subr.mxu0 0.0
    %1987 = vmatpush1.msra.mxu0 0.0
    %1988 = vmatprep.subr.mxu0 0.0
    %1989 = vmatpush1.msra.mxu0 0.0
    %1990 = vmatprep.subr.mxu0 0.0
    %1991 = vmatpush1.msra.mxu0 0.0
    %1992 = vmatprep.subr.mxu0 0.0
    %1993 = vmatpush1.msra.mxu0 0.0
    %1994 = vmatprep.subr.mxu0 0.0
    %1995 = vmatpush1.msra.mxu0 0.0
    %1996 = vmatprep.mubr.f32.mxu0 0.0
    %1997 = vmatmul.mubr.f32.gmra.mrb[0].mxu0 %v1928
    %v1998 = vpop.f32.mrb[0].mxu0
    %v1999 = vadd.f32 %v1925, %v1998
    %v2000 = vpop.f32.mrb[0].mxu0
    %2001 = vmatprep.mubr.f32.mxu0 0.0
    %2002 = vmatmul.mubr.f32.gmra.mrb[0].mxu0 %v1930
    %v2003 = vpop.f32.mrb[0].mxu0
    %v2004 = vadd.f32 %v1925, %v2003
    %v2005 = vpop.f32.mrb[0].mxu0
    %2006 = vdwg.mxu0
    %v2007 = vadd.f32 %v446, %v1999
    %v2008 = vadd.f32 %v443, %v2004
    %v2009 = vld [vmem:[%s12] sm:$0x1]
    %v2010 = vld [vmem:[%s13] sm:$0x1]
    %v2011 = vsel %vm458, %v2007, 0.0
    %2012 = vadd.xlane.f32.xlu0 %v2011
    %v2013 = vpop.xlane.xlu0 %2012
    %vm2014 = vcmask 254976
    %v2015 = vsel %vm2014, %v2008, 0.0
    %2016 = vadd.xlane.f32.xlu0 %v2015
    %v2017 = vpop.xlane.xlu0 %2016
    %v2018 = vrcp.pop 32.0
    %v2019 = vmul.f32 %v2013, %v2018
    %v2020 = vmul.f32 %v2017, %v2018
    %v2021 = vsub.f32 %v2007, %v2019
    %v2022 = vsub.f32 %v2008, %v2020
    %v2023 = vmul.f32 %v2021, %v2021
    %v2024 = vmul.f32 %v2022, %v2022
    %v2025 = vsel %vm458, %v2023, 0.0
    %2026 = vadd.xlane.f32.xlu0 %v2025
    %v2027 = vpop.xlane.xlu0 %2026
    %v2028 = vsel %vm2014, %v2024, 0.0
    %2029 = vadd.xlane.f32.xlu0 %v2028
    %v2030 = vpop.xlane.xlu0 %2029
    %v2031 = vmul.f32 %v2027, %v2018
    %v2032 = vmul.f32 %v2030, %v2018
    %v2033 = vadd.f32 %v2031, 1e-05
    %v2034 = vadd.f32 %v2032, 1e-05
    %v2035 = vrsqrt.pop %v2033
    %v2036 = vrsqrt.pop %v2034
    %v2037 = vmul.f32 %v2021, %v2035
    %v2038 = vmul.f32 %v2022, %v2036
    %v2040 = vlaneseq
    %v2041 = vshrl.u32 %v2040, 7
    %v2042 = vsub.s32 0, %v2041
    %v2043 = vrot.slane %v2009, %v2042
    %v2045 = vmul.f32 %v2037, %v2043
    %v2046 = vmul.f32 %v2038, %v2043
    %v2048 = vlaneseq
    %v2049 = vshrl.u32 %v2048, 7
    %v2050 = vsub.s32 0, %v2049
    %v2051 = vrot.slane %v2010, %v2050
    %v2053 = vadd.f32 %v2045, %v2051
    %v2054 = vadd.f32 %v2046, %v2051
    %v2055 = vld [vmem:[%s14] sm:$0xff]
    %v2056 = vld [vmem:[%s14 + $0x8] sm:$0xff]
    %v2057 = vld [vmem:[%s14 + $0x10] sm:$0xff]
    %v2058 = vld [vmem:[%s14 + $0x18] sm:$0xff]
    %v2059 = vld [vmem:[%s15] sm:$0x1]
    %v2061 = vlaneseq
    %v2062 = vshrl.u32 %v2061, 7
    %v2063 = vsub.s32 0, %v2062
    %v2064 = vrot.slane %v2059, %v2063
    %v2067 = vsel %vm458, %v2053, 0
    %v2070 = vsel %vm458, %v2054, 0
    %2072 = vmatprep.subr.mxu0 0.0
    %2073 = vmatpush1.msra.mxu0 %v2055
    %2074 = vmatprep.subr.mxu0 0.0
    %2075 = vmatpush1.msra.mxu0 %v2056
    %2076 = vmatprep.subr.mxu0 0.0
    %2077 = vmatpush1.msra.mxu0 %v2057
    %2078 = vmatprep.subr.mxu0 0.0
    %2079 = vmatpush1.msra.mxu0 %v2058
    %2080 = vmatprep.subr.mxu0 0.0
    %2081 = vmatpush1.msra.mxu0 0.0
    %2082 = vmatprep.subr.mxu0 0.0
    %2083 = vmatpush1.msra.mxu0 0.0
    %2084 = vmatprep.subr.mxu0 0.0
    %2085 = vmatpush1.msra.mxu0 0.0
    %2086 = vmatprep.subr.mxu0 0.0
    %2087 = vmatpush1.msra.mxu0 0.0
    %2088 = vmatprep.subr.mxu0 0.0
    %2089 = vmatpush1.msra.mxu0 0.0
    %2090 = vmatprep.subr.mxu0 0.0
    %2091 = vmatpush1.msra.mxu0 0.0
    %2092 = vmatprep.subr.mxu0 0.0
    %2093 = vmatpush1.msra.mxu0 0.0
    %2094 = vmatprep.subr.mxu0 0.0
    %2095 = vmatpush1.msra.mxu0 0.0
    %2096 = vmatprep.subr.mxu0 0.0
    %2097 = vmatpush1.msra.mxu0 0.0
    %2098 = vmatprep.subr.mxu0 0.0
    %2099 = vmatpush1.msra.mxu0 0.0
    %2100 = vmatprep.subr.mxu0 0.0
    %2101 = vmatpush1.msra.mxu0 0.0
    %2102 = vmatprep.subr.mxu0 0.0
    %2103 = vmatpush1.msra.mxu0 0.0
    %2104 = vmatprep.subr.mxu0 0.0
    %2105 = vmatpush1.msra.mxu0 0.0
    %2106 = vmatprep.subr.mxu0 0.0
    %2107 = vmatpush1.msra.mxu0 0.0
    %2108 = vmatprep.subr.mxu0 0.0
    %2109 = vmatpush1.msra.mxu0 0.0
    %2110 = vmatprep.subr.mxu0 0.0
    %2111 = vmatpush1.msra.mxu0 0.0
    %2112 = vmatprep.subr.mxu0 0.0
    %2113 = vmatpush1.msra.mxu0 0.0
    %2114 = vmatprep.subr.mxu0 0.0
    %2115 = vmatpush1.msra.mxu0 0.0
    %2116 = vmatprep.subr.mxu0 0.0
    %2117 = vmatpush1.msra.mxu0 0.0
    %2118 = vmatprep.subr.mxu0 0.0
    %2119 = vmatpush1.msra.mxu0 0.0
    %2120 = vmatprep.subr.mxu0 0.0
    %2121 = vmatpush1.msra.mxu0 0.0
    %2122 = vmatprep.subr.mxu0 0.0
    %2123 = vmatpush1.msra.mxu0 0.0
    %2124 = vmatprep.subr.mxu0 0.0
    %2125 = vmatpush1.msra.mxu0 0.0
    %2126 = vmatprep.subr.mxu0 0.0
    %2127 = vmatpush1.msra.mxu0 0.0
    %2128 = vmatprep.subr.mxu0 0.0
    %2129 = vmatpush1.msra.mxu0 0.0
    %2130 = vmatprep.subr.mxu0 0.0
    %2131 = vmatpush1.msra.mxu0 0.0
    %2132 = vmatprep.subr.mxu0 0.0
    %2133 = vmatpush1.msra.mxu0 0.0
    %2134 = vmatprep.subr.mxu0 0.0
    %2135 = vmatpush1.msra.mxu0 0.0
    %2136 = vmatprep.mubr.f32.mxu0 0.0
    %2137 = vmatmul.mubr.f32.gmra.mrb[0].mxu0 %v2067
    %v2138 = vpop.f32.mrb[0].mxu0
    %v2139 = vadd.f32 %v2064, %v2138
    %v2140 = vpop.f32.mrb[0].mxu0
    %2141 = vmatprep.mubr.f32.mxu0 0.0
    %2142 = vmatmul.mubr.f32.gmra.mrb[0].mxu0 %v2070
    %v2143 = vpop.f32.mrb[0].mxu0
    %v2144 = vadd.f32 %v2064, %v2143
    %v2145 = vpop.f32.mrb[0].mxu0
    %2146 = vdwg.mxu0
    %v2147 = vmax.f32 %v2139, 0.0
    %v2148 = vmax.f32 %v2144, 0.0
    %v2149 = vld [vmem:[%s16] sm:$0xff]
    %v2150 = vld [vmem:[%s16 + $0x8] sm:$0xff]
    %v2151 = vld [vmem:[%s16 + $0x10] sm:$0xff]
    %v2152 = vld [vmem:[%s16 + $0x18] sm:$0xff]
    %v2153 = vld [vmem:[%s16 + $0x20] sm:$0xff]
    %v2154 = vld [vmem:[%s16 + $0x28] sm:$0xff]
    %v2155 = vld [vmem:[%s16 + $0x30] sm:$0xff]
    %v2156 = vld [vmem:[%s16 + $0x38] sm:$0xff]
    %v2157 = vld [vmem:[%s16 + $0x40] sm:$0xff]
    %v2158 = vld [vmem:[%s16 + $0x48] sm:$0xff]
    %v2159 = vld [vmem:[%s16 + $0x50] sm:$0xff]
    %v2160 = vld [vmem:[%s16 + $0x58] sm:$0xff]
    %v2161 = vld [vmem:[%s16 + $0x60] sm:$0xff]
    %v2162 = vld [vmem:[%s16 + $0x68] sm:$0xff]
    %v2163 = vld [vmem:[%s16 + $0x70] sm:$0xff]
    %v2164 = vld [vmem:[%s16 + $0x78] sm:$0xff]
    %v2165 = vld [vmem:[%s17] sm:$0x1]
    %v2167 = vlaneseq
    %v2168 = vshrl.u32 %v2167, 7
    %v2169 = vsub.s32 0, %v2168
    %v2170 = vrot.slane %v2165, %v2169
    %2172 = vmatprep.subr.mxu0 0.0
    %2173 = vmatpush1.msra.mxu0 %v2149
    %2174 = vmatprep.subr.mxu0 0.0
    %2175 = vmatpush1.msra.mxu0 %v2150
    %2176 = vmatprep.subr.mxu0 0.0
    %2177 = vmatpush1.msra.mxu0 %v2151
    %2178 = vmatprep.subr.mxu0 0.0
    %2179 = vmatpush1.msra.mxu0 %v2152
    %2180 = vmatprep.subr.mxu0 0.0
    %2181 = vmatpush1.msra.mxu0 %v2153
    %2182 = vmatprep.subr.mxu0 0.0
    %2183 = vmatpush1.msra.mxu0 %v2154
    %2184 = vmatprep.subr.mxu0 0.0
    %2185 = vmatpush1.msra.mxu0 %v2155
    %2186 = vmatprep.subr.mxu0 0.0
    %2187 = vmatpush1.msra.mxu0 %v2156
    %2188 = vmatprep.subr.mxu0 0.0
    %2189 = vmatpush1.msra.mxu0 %v2157
    %2190 = vmatprep.subr.mxu0 0.0
    %2191 = vmatpush1.msra.mxu0 %v2158
    %2192 = vmatprep.subr.mxu0 0.0
    %2193 = vmatpush1.msra.mxu0 %v2159
    %2194 = vmatprep.subr.mxu0 0.0
    %2195 = vmatpush1.msra.mxu0 %v2160
    %2196 = vmatprep.subr.mxu0 0.0
    %2197 = vmatpush1.msra.mxu0 %v2161
    %2198 = vmatprep.subr.mxu0 0.0
    %2199 = vmatpush1.msra.mxu0 %v2162
    %2200 = vmatprep.subr.mxu0 0.0
    %2201 = vmatpush1.msra.mxu0 %v2163
    %2202 = vmatprep.subr.mxu0 0.0
    %2203 = vmatpush1.msra.mxu0 %v2164
    %2204 = vmatprep.subr.mxu0 0.0
    %2205 = vmatpush1.msra.mxu0 0.0
    %2206 = vmatprep.subr.mxu0 0.0
    %2207 = vmatpush1.msra.mxu0 0.0
    %2208 = vmatprep.subr.mxu0 0.0
    %2209 = vmatpush1.msra.mxu0 0.0
    %2210 = vmatprep.subr.mxu0 0.0
    %2211 = vmatpush1.msra.mxu0 0.0
    %2212 = vmatprep.subr.mxu0 0.0
    %2213 = vmatpush1.msra.mxu0 0.0
    %2214 = vmatprep.subr.mxu0 0.0
    %2215 = vmatpush1.msra.mxu0 0.0
    %2216 = vmatprep.subr.mxu0 0.0
    %2217 = vmatpush1.msra.mxu0 0.0
    %2218 = vmatprep.subr.mxu0 0.0
    %2219 = vmatpush1.msra.mxu0 0.0
    %2220 = vmatprep.subr.mxu0 0.0
    %2221 = vmatpush1.msra.mxu0 0.0
    %2222 = vmatprep.subr.mxu0 0.0
    %2223 = vmatpush1.msra.mxu0 0.0
    %2224 = vmatprep.subr.mxu0 0.0
    %2225 = vmatpush1.msra.mxu0 0.0
    %2226 = vmatprep.subr.mxu0 0.0
    %2227 = vmatpush1.msra.mxu0 0.0
    %2228 = vmatprep.subr.mxu0 0.0
    %2229 = vmatpush1.msra.mxu0 0.0
    %2230 = vmatprep.subr.mxu0 0.0
    %2231 = vmatpush1.msra.mxu0 0.0
    %2232 = vmatprep.subr.mxu0 0.0
    %2233 = vmatpush1.msra.mxu0 0.0
    %2234 = vmatprep.subr.mxu0 0.0
    %2235 = vmatpush1.msra.mxu0 0.0
    %2236 = vmatprep.mubr.f32.mxu0 0.0
    %2237 = vmatmul.mubr.f32.gmra.mrb[0].mxu0 %v2147
    %v2238 = vpop.f32.mrb[0].mxu0
    %v2239 = vadd.f32 %v2170, %v2238
    %v2240 = vpop.f32.mrb[0].mxu0
    %2241 = vmatprep.mubr.f32.mxu0 0.0
    %2242 = vmatmul.mubr.f32.gmra.mrb[0].mxu0 %v2148
    %v2243 = vpop.f32.mrb[0].mxu0
    %v2244 = vadd.f32 %v2170, %v2243
    %v2245 = vpop.f32.mrb[0].mxu0
    %2246 = vdwg.mxu0
    %v2247 = vadd.f32 %v2053, %v2239
    %v2248 = vadd.f32 %v2054, %v2244
    %v2249 = vld [vmem:[%s18] sm:$0x1]
    %v2250 = vld [vmem:[%s19] sm:$0x1]
    %v2251 = vsel %vm458, %v2247, 0.0
    %2252 = vadd.xlane.f32.xlu0 %v2251
    %v2253 = vpop.xlane.xlu0 %2252
    %v2254 = vsel %vm2014, %v2248, 0.0
    %2255 = vadd.xlane.f32.xlu0 %v2254
    %v2256 = vpop.xlane.xlu0 %2255
    %v2257 = vmul.f32 %v2253, %v2018
    %v2258 = vmul.f32 %v2256, %v2018
    %v2259 = vsub.f32 %v2247, %v2257
    %v2260 = vsub.f32 %v2248, %v2258
    %v2261 = vmul.f32 %v2259, %v2259
    %v2262 = vmul.f32 %v2260, %v2260
    %v2263 = vsel %vm458, %v2261, 0.0
    %2264 = vadd.xlane.f32.xlu0 %v2263
    %v2265 = vpop.xlane.xlu0 %2264
    %v2266 = vsel %vm2014, %v2262, 0.0
    %2267 = vadd.xlane.f32.xlu0 %v2266
    %v2268 = vpop.xlane.xlu0 %2267
    %v2269 = vmul.f32 %v2265, %v2018
    %v2270 = vmul.f32 %v2268, %v2018
    %v2271 = vadd.f32 %v2269, 1e-05
    %v2272 = vadd.f32 %v2270, 1e-05
    %v2273 = vrsqrt.pop %v2271
    %v2274 = vrsqrt.pop %v2272
    %v2275 = vmul.f32 %v2259, %v2273
    %v2276 = vmul.f32 %v2260, %v2274
    %v2278 = vlaneseq
    %v2279 = vshrl.u32 %v2278, 7
    %v2280 = vsub.s32 0, %v2279
    %v2281 = vrot.slane %v2249, %v2280
    %v2283 = vmul.f32 %v2275, %v2281
    %v2284 = vmul.f32 %v2276, %v2281
    %v2286 = vlaneseq
    %v2287 = vshrl.u32 %v2286, 7
    %v2288 = vsub.s32 0, %v2287
    %v2289 = vrot.slane %v2250, %v2288
    %v2291 = vadd.f32 %v2283, %v2289
    %v2292 = vadd.f32 %v2284, %v2289
    %s2293 = scalar_lea.vmem %s8, 32
    %v2294 = vld [vmem:[%s2293] sm:$0xff]
    %v2295 = vld [vmem:[%s2293 + $0x8] sm:$0xff]
    %v2296 = vld [vmem:[%s2293 + $0x10] sm:$0xff]
    %v2297 = vld [vmem:[%s2293 + $0x18] sm:$0xff]
    %s2298 = scalar_lea.vmem %s9, 1
    %v2299 = vld [vmem:[%s2298] sm:$0x1]
    %v2301 = vlaneseq
    %v2302 = vshrl.u32 %v2301, 7
    %v2303 = vsub.s32 0, %v2302
    %v2304 = vrot.slane %v2299, %v2303
    %v2307 = vsel %vm458, %v2291, 0
    %v2310 = vsel %vm458, %v2292, 0
    %2312 = vmatprep.subr.mxu0 0.0
    %2313 = vmatpush1.msra.mxu0 %v2294
    %2314 = vmatprep.subr.mxu0 0.0
    %2315 = vmatpush1.msra.mxu0 %v2295
    %2316 = vmatprep.subr.mxu0 0.0
    %2317 = vmatpush1.msra.mxu0 %v2296
    %2318 = vmatprep.subr.mxu0 0.0
    %2319 = vmatpush1.msra.mxu0 %v2297
    %2320 = vmatprep.subr.mxu0 0.0
    %2321 = vmatpush1.msra.mxu0 0.0
    %2322 = vmatprep.subr.mxu0 0.0
    %2323 = vmatpush1.msra.mxu0 0.0
    %2324 = vmatprep.subr.mxu0 0.0
    %2325 = vmatpush1.msra.mxu0 0.0
    %2326 = vmatprep.subr.mxu0 0.0
    %2327 = vmatpush1.msra.mxu0 0.0
    %2328 = vmatprep.subr.mxu0 0.0
    %2329 = vmatpush1.msra.mxu0 0.0
    %2330 = vmatprep.subr.mxu0 0.0
    %2331 = vmatpush1.msra.mxu0 0.0
    %2332 = vmatprep.subr.mxu0 0.0
    %2333 = vmatpush1.msra.mxu0 0.0
    %2334 = vmatprep.subr.mxu0 0.0
    %2335 = vmatpush1.msra.mxu0 0.0
    %2336 = vmatprep.subr.mxu0 0.0
    %2337 = vmatpush1.msra.mxu0 0.0
    %2338 = vmatprep.subr.mxu0 0.0
    %2339 = vmatpush1.msra.mxu0 0.0
    %2340 = vmatprep.subr.mxu0 0.0
    %2341 = vmatpush1.msra.mxu0 0.0
    %2342 = vmatprep.subr.mxu0 0.0
    %2343 = vmatpush1.msra.mxu0 0.0
    %2344 = vmatprep.subr.mxu0 0.0
    %2345 = vmatpush1.msra.mxu0 0.0
    %2346 = vmatprep.subr.mxu0 0.0
    %2347 = vmatpush1.msra.mxu0 0.0
    %2348 = vmatprep.subr.mxu0 0.0
    %2349 = vmatpush1.msra.mxu0 0.0
    %2350 = vmatprep.subr.mxu0 0.0
    %2351 = vmatpush1.msra.mxu0 0.0
    %2352 = vmatprep.subr.mxu0 0.0
    %2353 = vmatpush1.msra.mxu0 0.0
    %2354 = vmatprep.subr.mxu0 0.0
    %2355 = vmatpush1.msra.mxu0 0.0
    %2356 = vmatprep.subr.mxu0 0.0
    %2357 = vmatpush1.msra.mxu0 0.0
    %2358 = vmatprep.subr.mxu0 0.0
    %2359 = vmatpush1.msra.mxu0 0.0
    %2360 = vmatprep.subr.mxu0 0.0
    %2361 = vmatpush1.msra.mxu0 0.0
    %2362 = vmatprep.subr.mxu0 0.0
    %2363 = vmatpush1.msra.mxu0 0.0
    %2364 = vmatprep.subr.mxu0 0.0
    %2365 = vmatpush1.msra.mxu0 0.0
    %2366 = vmatprep.subr.mxu0 0.0
    %2367 = vmatpush1.msra.mxu0 0.0
    %2368 = vmatprep.subr.mxu0 0.0
    %2369 = vmatpush1.msra.mxu0 0.0
    %2370 = vmatprep.subr.mxu0 0.0
    %2371 = vmatpush1.msra.mxu0 0.0
    %2372 = vmatprep.subr.mxu0 0.0
    %2373 = vmatpush1.msra.mxu0 0.0
    %2374 = vmatprep.subr.mxu0 0.0
    %2375 = vmatpush1.msra.mxu0 0.0
    %2376 = vmatprep.mubr.f32.mxu0 0.0
    %2377 = vmatmul.mubr.f32.gmra.mrb[0].mxu0 %v2307
    %v2378 = vpop.f32.mrb[0].mxu0
    %v2379 = vadd.f32 %v2304, %v2378
    %v2380 = vpop.f32.mrb[0].mxu0
    %2381 = vmatprep.mubr.f32.mxu0 0.0
    %2382 = vmatmul.mubr.f32.gmra.mrb[0].mxu0 %v2310
    %v2383 = vpop.f32.mrb[0].mxu0
    %v2384 = vadd.f32 %v2304, %v2383
    %v2385 = vpop.f32.mrb[0].mxu0
    %2386 = vdwg.mxu0
    %2388 = vrot.lane.b32.xlu0 %v2379, 96
    %v2389 = vpop.permute.xlu0 %2388
    %v2390 = vsel %vm542, %v2379, 0
    %v2392 = vsel %vm542, %v2389, 0
    %2394 = vmatprep.subr.mxu0 0.0
    %2395 = vmatpush1.xpose.msra.mxu0 %v2392
    %2396 = vmatprep.subr.mxu0 0.0
    %2397 = vmatpush1.xpose.msra.mxu0 0.0
    %2398 = vmatprep.subr.mxu0 0.0
    %2399 = vmatpush1.xpose.msra.mxu0 0.0
    %2400 = vmatprep.subr.mxu0 0.0
    %2401 = vmatpush1.xpose.msra.mxu0 0.0
    %2402 = vmatprep.subr.mxu0 0.0
    %2403 = vmatpush1.xpose.msra.mxu0 0.0
    %2404 = vmatprep.subr.mxu0 0.0
    %2405 = vmatpush1.xpose.msra.mxu0 0.0
    %2406 = vmatprep.subr.mxu0 0.0
    %2407 = vmatpush1.xpose.msra.mxu0 0.0
    %2408 = vmatprep.subr.mxu0 0.0
    %2409 = vmatpush1.xpose.msra.mxu0 0.0
    %2410 = vmatprep.subr.mxu0 0.0
    %2411 = vmatpush1.xpose.msra.mxu0 0.0
    %2412 = vmatprep.subr.mxu0 0.0
    %2413 = vmatpush1.xpose.msra.mxu0 0.0
    %2414 = vmatprep.subr.mxu0 0.0
    %2415 = vmatpush1.xpose.msra.mxu0 0.0
    %2416 = vmatprep.subr.mxu0 0.0
    %2417 = vmatpush1.xpose.msra.mxu0 0.0
    %2418 = vmatprep.subr.mxu0 0.0
    %2419 = vmatpush1.xpose.msra.mxu0 0.0
    %2420 = vmatprep.subr.mxu0 0.0
    %2421 = vmatpush1.xpose.msra.mxu0 0.0
    %2422 = vmatprep.subr.mxu0 0.0
    %2423 = vmatpush1.xpose.msra.mxu0 0.0
    %2424 = vmatprep.subr.mxu0 0.0
    %2425 = vmatpush1.xpose.msra.mxu0 0.0
    %2426 = vmatprep.subr.mxu0 0.0
    %2427 = vmatpush1.xpose.msra.mxu0 0.0
    %2428 = vmatprep.subr.mxu0 0.0
    %2429 = vmatpush1.xpose.msra.mxu0 0.0
    %2430 = vmatprep.subr.mxu0 0.0
    %2431 = vmatpush1.xpose.msra.mxu0 0.0
    %2432 = vmatprep.subr.mxu0 0.0
    %2433 = vmatpush1.xpose.msra.mxu0 0.0
    %2434 = vmatprep.subr.mxu0 0.0
    %2435 = vmatpush1.xpose.msra.mxu0 0.0
    %2436 = vmatprep.subr.mxu0 0.0
    %2437 = vmatpush1.xpose.msra.mxu0 0.0
    %2438 = vmatprep.subr.mxu0 0.0
    %2439 = vmatpush1.xpose.msra.mxu0 0.0
    %2440 = vmatprep.subr.mxu0 0.0
    %2441 = vmatpush1.xpose.msra.mxu0 0.0
    %2442 = vmatprep.subr.mxu0 0.0
    %2443 = vmatpush1.xpose.msra.mxu0 0.0
    %2444 = vmatprep.subr.mxu0 0.0
    %2445 = vmatpush1.xpose.msra.mxu0 0.0
    %2446 = vmatprep.subr.mxu0 0.0
    %2447 = vmatpush1.xpose.msra.mxu0 0.0
    %2448 = vmatprep.subr.mxu0 0.0
    %2449 = vmatpush1.xpose.msra.mxu0 0.0
    %2450 = vmatprep.subr.mxu0 0.0
    %2451 = vmatpush1.xpose.msra.mxu0 0.0
    %2452 = vmatprep.subr.mxu0 0.0
    %2453 = vmatpush1.xpose.msra.mxu0 0.0
    %2454 = vmatprep.subr.mxu0 0.0
    %2455 = vmatpush1.xpose.msra.mxu0 0.0
    %2456 = vmatprep.subr.mxu0 0.0
    %2457 = vmatpush1.xpose.msra.mxu0 0.0
    %2458 = vmatprep.mubr.f32.mxu0 0.0
    %2459 = vmatmul.mubr.f32.gmra.mrb[0].mxu0 %v2390
    %v2460 = vpop.f32.mrb[0].mxu0
    %v2461 = vadd.f32 0.0, %v2460
    %v2462 = vpop.f32.mrb[0].mxu0
    %2463 = vdwg.mxu0
    %2464 = vrot.lane.b32.xlu0 %v2379, 120
    %v2465 = vpop.permute.xlu0 %2464
    %2466 = vrot.lane.b32.xlu0 %v2379, 88
    %v2467 = vpop.permute.xlu0 %2466
    %v2468 = vsel %vm542, %v2465, 0
    %v2470 = vsel %vm542, %v2467, 0
    %2472 = vmatprep.subr.mxu0 0.0
    %2473 = vmatpush1.xpose.msra.mxu0 %v2470
    %2474 = vmatprep.subr.mxu0 0.0
    %2475 = vmatpush1.xpose.msra.mxu0 0.0
    %2476 = vmatprep.subr.mxu0 0.0
    %2477 = vmatpush1.xpose.msra.mxu0 0.0
    %2478 = vmatprep.subr.mxu0 0.0
    %2479 = vmatpush1.xpose.msra.mxu0 0.0
    %2480 = vmatprep.subr.mxu0 0.0
    %2481 = vmatpush1.xpose.msra.mxu0 0.0
    %2482 = vmatprep.subr.mxu0 0.0
    %2483 = vmatpush1.xpose.msra.mxu0 0.0
    %2484 = vmatprep.subr.mxu0 0.0
    %2485 = vmatpush1.xpose.msra.mxu0 0.0
    %2486 = vmatprep.subr.mxu0 0.0
    %2487 = vmatpush1.xpose.msra.mxu0 0.0
    %2488 = vmatprep.subr.mxu0 0.0
    %2489 = vmatpush1.xpose.msra.mxu0 0.0
    %2490 = vmatprep.subr.mxu0 0.0
    %2491 = vmatpush1.xpose.msra.mxu0 0.0
    %2492 = vmatprep.subr.mxu0 0.0
    %2493 = vmatpush1.xpose.msra.mxu0 0.0
    %2494 = vmatprep.subr.mxu0 0.0
    %2495 = vmatpush1.xpose.msra.mxu0 0.0
    %2496 = vmatprep.subr.mxu0 0.0
    %2497 = vmatpush1.xpose.msra.mxu0 0.0
    %2498 = vmatprep.subr.mxu0 0.0
    %2499 = vmatpush1.xpose.msra.mxu0 0.0
    %2500 = vmatprep.subr.mxu0 0.0
    %2501 = vmatpush1.xpose.msra.mxu0 0.0
    %2502 = vmatprep.subr.mxu0 0.0
    %2503 = vmatpush1.xpose.msra.mxu0 0.0
    %2504 = vmatprep.subr.mxu0 0.0
    %2505 = vmatpush1.xpose.msra.mxu0 0.0
    %2506 = vmatprep.subr.mxu0 0.0
    %2507 = vmatpush1.xpose.msra.mxu0 0.0
    %2508 = vmatprep.subr.mxu0 0.0
    %2509 = vmatpush1.xpose.msra.mxu0 0.0
    %2510 = vmatprep.subr.mxu0 0.0
    %2511 = vmatpush1.xpose.msra.mxu0 0.0
    %2512 = vmatprep.subr.mxu0 0.0
    %2513 = vmatpush1.xpose.msra.mxu0 0.0
    %2514 = vmatprep.subr.mxu0 0.0
    %2515 = vmatpush1.xpose.msra.mxu0 0.0
    %2516 = vmatprep.subr.mxu0 0.0
    %2517 = vmatpush1.xpose.msra.mxu0 0.0
    %2518 = vmatprep.subr.mxu0 0.0
    %2519 = vmatpush1.xpose.msra.mxu0 0.0
    %2520 = vmatprep.subr.mxu0 0.0
    %2521 = vmatpush1.xpose.msra.mxu0 0.0
    %2522 = vmatprep.subr.mxu0 0.0
    %2523 = vmatpush1.xpose.msra.mxu0 0.0
    %2524 = vmatprep.subr.mxu0 0.0
    %2525 = vmatpush1.xpose.msra.mxu0 0.0
    %2526 = vmatprep.subr.mxu0 0.0
    %2527 = vmatpush1.xpose.msra.mxu0 0.0
    %2528 = vmatprep.subr.mxu0 0.0
    %2529 = vmatpush1.xpose.msra.mxu0 0.0
    %2530 = vmatprep.subr.mxu0 0.0
    %2531 = vmatpush1.xpose.msra.mxu0 0.0
    %2532 = vmatprep.subr.mxu0 0.0
    %2533 = vmatpush1.xpose.msra.mxu0 0.0
    %2534 = vmatprep.subr.mxu0 0.0
    %2535 = vmatpush1.xpose.msra.mxu0 0.0
    %2536 = vmatprep.mubr.f32.mxu0 0.0
    %2537 = vmatmul.mubr.f32.gmra.mrb[0].mxu0 %v2468
    %v2538 = vpop.f32.mrb[0].mxu0
    %v2539 = vadd.f32 0.0, %v2538
    %v2540 = vpop.f32.mrb[0].mxu0
    %2541 = vdwg.mxu0
    %2542 = vrot.lane.b32.xlu0 %v2379, 112
    %v2543 = vpop.permute.xlu0 %2542
    %2544 = vrot.lane.b32.xlu0 %v2379, 80
    %v2545 = vpop.permute.xlu0 %2544
    %v2546 = vsel %vm542, %v2543, 0
    %v2548 = vsel %vm542, %v2545, 0
    %2550 = vmatprep.subr.mxu0 0.0
    %2551 = vmatpush1.xpose.msra.mxu0 %v2548
    %2552 = vmatprep.subr.mxu0 0.0
    %2553 = vmatpush1.xpose.msra.mxu0 0.0
    %2554 = vmatprep.subr.mxu0 0.0
    %2555 = vmatpush1.xpose.msra.mxu0 0.0
    %2556 = vmatprep.subr.mxu0 0.0
    %2557 = vmatpush1.xpose.msra.mxu0 0.0
    %2558 = vmatprep.subr.mxu0 0.0
    %2559 = vmatpush1.xpose.msra.mxu0 0.0
    %2560 = vmatprep.subr.mxu0 0.0
    %2561 = vmatpush1.xpose.msra.mxu0 0.0
    %2562 = vmatprep.subr.mxu0 0.0
    %2563 = vmatpush1.xpose.msra.mxu0 0.0
    %2564 = vmatprep.subr.mxu0 0.0
    %2565 = vmatpush1.xpose.msra.mxu0 0.0
    %2566 = vmatprep.subr.mxu0 0.0
    %2567 = vmatpush1.xpose.msra.mxu0 0.0
    %2568 = vmatprep.subr.mxu0 0.0
    %2569 = vmatpush1.xpose.msra.mxu0 0.0
    %2570 = vmatprep.subr.mxu0 0.0
    %2571 = vmatpush1.xpose.msra.mxu0 0.0
    %2572 = vmatprep.subr.mxu0 0.0
    %2573 = vmatpush1.xpose.msra.mxu0 0.0
    %2574 = vmatprep.subr.mxu0 0.0
    %2575 = vmatpush1.xpose.msra.mxu0 0.0
    %2576 = vmatprep.subr.mxu0 0.0
    %2577 = vmatpush1.xpose.msra.mxu0 0.0
    %2578 = vmatprep.subr.mxu0 0.0
    %2579 = vmatpush1.xpose.msra.mxu0 0.0
    %2580 = vmatprep.subr.mxu0 0.0
    %2581 = vmatpush1.xpose.msra.mxu0 0.0
    %2582 = vmatprep.subr.mxu0 0.0
    %2583 = vmatpush1.xpose.msra.mxu0 0.0
    %2584 = vmatprep.subr.mxu0 0.0
    %2585 = vmatpush1.xpose.msra.mxu0 0.0
    %2586 = vmatprep.subr.mxu0 0.0
    %2587 = vmatpush1.xpose.msra.mxu0 0.0
    %2588 = vmatprep.subr.mxu0 0.0
    %2589 = vmatpush1.xpose.msra.mxu0 0.0
    %2590 = vmatprep.subr.mxu0 0.0
    %2591 = vmatpush1.xpose.msra.mxu0 0.0
    %2592 = vmatprep.subr.mxu0 0.0
    %2593 = vmatpush1.xpose.msra.mxu0 0.0
    %2594 = vmatprep.subr.mxu0 0.0
    %2595 = vmatpush1.xpose.msra.mxu0 0.0
    %2596 = vmatprep.subr.mxu0 0.0
    %2597 = vmatpush1.xpose.msra.mxu0 0.0
    %2598 = vmatprep.subr.mxu0 0.0
    %2599 = vmatpush1.xpose.msra.mxu0 0.0
    %2600 = vmatprep.subr.mxu0 0.0
    %2601 = vmatpush1.xpose.msra.mxu0 0.0
    %2602 = vmatprep.subr.mxu0 0.0
    %2603 = vmatpush1.xpose.msra.mxu0 0.0
    %2604 = vmatprep.subr.mxu0 0.0
    %2605 = vmatpush1.xpose.msra.mxu0 0.0
    %2606 = vmatprep.subr.mxu0 0.0
    %2607 = vmatpush1.xpose.msra.mxu0 0.0
    %2608 = vmatprep.subr.mxu0 0.0
    %2609 = vmatpush1.xpose.msra.mxu0 0.0
    %2610 = vmatprep.subr.mxu0 0.0
    %2611 = vmatpush1.xpose.msra.mxu0 0.0
    %2612 = vmatprep.subr.mxu0 0.0
    %2613 = vmatpush1.xpose.msra.mxu0 0.0
    %2614 = vmatprep.mubr.f32.mxu0 0.0
    %2615 = vmatmul.mubr.f32.gmra.mrb[0].mxu0 %v2546
    %v2616 = vpop.f32.mrb[0].mxu0
    %v2617 = vadd.f32 0.0, %v2616
    %v2618 = vpop.f32.mrb[0].mxu0
    %2619 = vdwg.mxu0
    %2620 = vrot.lane.b32.xlu0 %v2379, 104
    %v2621 = vpop.permute.xlu0 %2620
    %2622 = vrot.lane.b32.xlu0 %v2379, 72
    %v2623 = vpop.permute.xlu0 %2622
    %v2624 = vsel %vm542, %v2621, 0
    %v2626 = vsel %vm542, %v2623, 0
    %2628 = vmatprep.subr.mxu0 0.0
    %2629 = vmatpush1.xpose.msra.mxu0 %v2626
    %2630 = vmatprep.subr.mxu0 0.0
    %2631 = vmatpush1.xpose.msra.mxu0 0.0
    %2632 = vmatprep.subr.mxu0 0.0
    %2633 = vmatpush1.xpose.msra.mxu0 0.0
    %2634 = vmatprep.subr.mxu0 0.0
    %2635 = vmatpush1.xpose.msra.mxu0 0.0
    %2636 = vmatprep.subr.mxu0 0.0
    %2637 = vmatpush1.xpose.msra.mxu0 0.0
    %2638 = vmatprep.subr.mxu0 0.0
    %2639 = vmatpush1.xpose.msra.mxu0 0.0
    %2640 = vmatprep.subr.mxu0 0.0
    %2641 = vmatpush1.xpose.msra.mxu0 0.0
    %2642 = vmatprep.subr.mxu0 0.0
    %2643 = vmatpush1.xpose.msra.mxu0 0.0
    %2644 = vmatprep.subr.mxu0 0.0
    %2645 = vmatpush1.xpose.msra.mxu0 0.0
    %2646 = vmatprep.subr.mxu0 0.0
    %2647 = vmatpush1.xpose.msra.mxu0 0.0
    %2648 = vmatprep.subr.mxu0 0.0
    %2649 = vmatpush1.xpose.msra.mxu0 0.0
    %2650 = vmatprep.subr.mxu0 0.0
    %2651 = vmatpush1.xpose.msra.mxu0 0.0
    %2652 = vmatprep.subr.mxu0 0.0
    %2653 = vmatpush1.xpose.msra.mxu0 0.0
    %2654 = vmatprep.subr.mxu0 0.0
    %2655 = vmatpush1.xpose.msra.mxu0 0.0
    %2656 = vmatprep.subr.mxu0 0.0
    %2657 = vmatpush1.xpose.msra.mxu0 0.0
    %2658 = vmatprep.subr.mxu0 0.0
    %2659 = vmatpush1.xpose.msra.mxu0 0.0
    %2660 = vmatprep.subr.mxu0 0.0
    %2661 = vmatpush1.xpose.msra.mxu0 0.0
    %2662 = vmatprep.subr.mxu0 0.0
    %2663 = vmatpush1.xpose.msra.mxu0 0.0
    %2664 = vmatprep.subr.mxu0 0.0
    %2665 = vmatpush1.xpose.msra.mxu0 0.0
    %2666 = vmatprep.subr.mxu0 0.0
    %2667 = vmatpush1.xpose.msra.mxu0 0.0
    %2668 = vmatprep.subr.mxu0 0.0
    %2669 = vmatpush1.xpose.msra.mxu0 0.0
    %2670 = vmatprep.subr.mxu0 0.0
    %2671 = vmatpush1.xpose.msra.mxu0 0.0
    %2672 = vmatprep.subr.mxu0 0.0
    %2673 = vmatpush1.xpose.msra.mxu0 0.0
    %2674 = vmatprep.subr.mxu0 0.0
    %2675 = vmatpush1.xpose.msra.mxu0 0.0
    %2676 = vmatprep.subr.mxu0 0.0
    %2677 = vmatpush1.xpose.msra.mxu0 0.0
    %2678 = vmatprep.subr.mxu0 0.0
    %2679 = vmatpush1.xpose.msra.mxu0 0.0
    %2680 = vmatprep.subr.mxu0 0.0
    %2681 = vmatpush1.xpose.msra.mxu0 0.0
    %2682 = vmatprep.subr.mxu0 0.0
    %2683 = vmatpush1.xpose.msra.mxu0 0.0
    %2684 = vmatprep.subr.mxu0 0.0
    %2685 = vmatpush1.xpose.msra.mxu0 0.0
    %2686 = vmatprep.subr.mxu0 0.0
    %2687 = vmatpush1.xpose.msra.mxu0 0.0
    %2688 = vmatprep.subr.mxu0 0.0
    %2689 = vmatpush1.xpose.msra.mxu0 0.0
    %2690 = vmatprep.subr.mxu0 0.0
    %2691 = vmatpush1.xpose.msra.mxu0 0.0
    %2692 = vmatprep.mubr.f32.mxu0 0.0
    %2693 = vmatmul.mubr.f32.gmra.mrb[0].mxu0 %v2624
    %v2694 = vpop.f32.mrb[0].mxu0
    %v2695 = vadd.f32 0.0, %v2694
    %v2696 = vpop.f32.mrb[0].mxu0
    %2697 = vdwg.mxu0
    %v2699 = vrot.slane %v2379, 5
    %v2700 = vrot.slane %v2384, 5
    %v2701 = vsel %vm273, %v2699, %v2700
    %2702 = vrot.lane.b32.xlu0 %v2701, 96
    %v2703 = vpop.permute.xlu0 %2702
    %v2704 = vsel %vm542, %v2701, 0
    %v2706 = vsel %vm542, %v2703, 0
    %2708 = vmatprep.subr.mxu0 0.0
    %2709 = vmatpush1.xpose.msra.mxu0 %v2706
    %2710 = vmatprep.subr.mxu0 0.0
    %2711 = vmatpush1.xpose.msra.mxu0 0.0
    %2712 = vmatprep.subr.mxu0 0.0
    %2713 = vmatpush1.xpose.msra.mxu0 0.0
    %2714 = vmatprep.subr.mxu0 0.0
    %2715 = vmatpush1.xpose.msra.mxu0 0.0
    %2716 = vmatprep.subr.mxu0 0.0
    %2717 = vmatpush1.xpose.msra.mxu0 0.0
    %2718 = vmatprep.subr.mxu0 0.0
    %2719 = vmatpush1.xpose.msra.mxu0 0.0
    %2720 = vmatprep.subr.mxu0 0.0
    %2721 = vmatpush1.xpose.msra.mxu0 0.0
    %2722 = vmatprep.subr.mxu0 0.0
    %2723 = vmatpush1.xpose.msra.mxu0 0.0
    %2724 = vmatprep.subr.mxu0 0.0
    %2725 = vmatpush1.xpose.msra.mxu0 0.0
    %2726 = vmatprep.subr.mxu0 0.0
    %2727 = vmatpush1.xpose.msra.mxu0 0.0
    %2728 = vmatprep.subr.mxu0 0.0
    %2729 = vmatpush1.xpose.msra.mxu0 0.0
    %2730 = vmatprep.subr.mxu0 0.0
    %2731 = vmatpush1.xpose.msra.mxu0 0.0
    %2732 = vmatprep.subr.mxu0 0.0
    %2733 = vmatpush1.xpose.msra.mxu0 0.0
    %2734 = vmatprep.subr.mxu0 0.0
    %2735 = vmatpush1.xpose.msra.mxu0 0.0
    %2736 = vmatprep.subr.mxu0 0.0
    %2737 = vmatpush1.xpose.msra.mxu0 0.0
    %2738 = vmatprep.subr.mxu0 0.0
    %2739 = vmatpush1.xpose.msra.mxu0 0.0
    %2740 = vmatprep.subr.mxu0 0.0
    %2741 = vmatpush1.xpose.msra.mxu0 0.0
    %2742 = vmatprep.subr.mxu0 0.0
    %2743 = vmatpush1.xpose.msra.mxu0 0.0
    %2744 = vmatprep.subr.mxu0 0.0
    %2745 = vmatpush1.xpose.msra.mxu0 0.0
    %2746 = vmatprep.subr.mxu0 0.0
    %2747 = vmatpush1.xpose.msra.mxu0 0.0
    %2748 = vmatprep.subr.mxu0 0.0
    %2749 = vmatpush1.xpose.msra.mxu0 0.0
    %2750 = vmatprep.subr.mxu0 0.0
    %2751 = vmatpush1.xpose.msra.mxu0 0.0
    %2752 = vmatprep.subr.mxu0 0.0
    %2753 = vmatpush1.xpose.msra.mxu0 0.0
    %2754 = vmatprep.subr.mxu0 0.0
    %2755 = vmatpush1.xpose.msra.mxu0 0.0
    %2756 = vmatprep.subr.mxu0 0.0
    %2757 = vmatpush1.xpose.msra.mxu0 0.0
    %2758 = vmatprep.subr.mxu0 0.0
    %2759 = vmatpush1.xpose.msra.mxu0 0.0
    %2760 = vmatprep.subr.mxu0 0.0
    %2761 = vmatpush1.xpose.msra.mxu0 0.0
    %2762 = vmatprep.subr.mxu0 0.0
    %2763 = vmatpush1.xpose.msra.mxu0 0.0
    %2764 = vmatprep.subr.mxu0 0.0
    %2765 = vmatpush1.xpose.msra.mxu0 0.0
    %2766 = vmatprep.subr.mxu0 0.0
    %2767 = vmatpush1.xpose.msra.mxu0 0.0
    %2768 = vmatprep.subr.mxu0 0.0
    %2769 = vmatpush1.xpose.msra.mxu0 0.0
    %2770 = vmatprep.subr.mxu0 0.0
    %2771 = vmatpush1.xpose.msra.mxu0 0.0
    %2772 = vmatprep.mubr.f32.mxu0 0.0
    %2773 = vmatmul.mubr.f32.gmra.mrb[0].mxu0 %v2704
    %v2774 = vpop.f32.mrb[0].mxu0
    %v2775 = vadd.f32 0.0, %v2774
    %v2776 = vpop.f32.mrb[0].mxu0
    %2777 = vdwg.mxu0
    %2778 = vrot.lane.b32.xlu0 %v2701, 120
    %v2779 = vpop.permute.xlu0 %2778
    %2780 = vrot.lane.b32.xlu0 %v2701, 88
    %v2781 = vpop.permute.xlu0 %2780
    %v2782 = vsel %vm542, %v2779, 0
    %v2784 = vsel %vm542, %v2781, 0
    %2786 = vmatprep.subr.mxu0 0.0
    %2787 = vmatpush1.xpose.msra.mxu0 %v2784
    %2788 = vmatprep.subr.mxu0 0.0
    %2789 = vmatpush1.xpose.msra.mxu0 0.0
    %2790 = vmatprep.subr.mxu0 0.0
    %2791 = vmatpush1.xpose.msra.mxu0 0.0
    %2792 = vmatprep.subr.mxu0 0.0
    %2793 = vmatpush1.xpose.msra.mxu0 0.0
    %2794 = vmatprep.subr.mxu0 0.0
    %2795 = vmatpush1.xpose.msra.mxu0 0.0
    %2796 = vmatprep.subr.mxu0 0.0
    %2797 = vmatpush1.xpose.msra.mxu0 0.0
    %2798 = vmatprep.subr.mxu0 0.0
    %2799 = vmatpush1.xpose.msra.mxu0 0.0
    %2800 = vmatprep.subr.mxu0 0.0
    %2801 = vmatpush1.xpose.msra.mxu0 0.0
    %2802 = vmatprep.subr.mxu0 0.0
    %2803 = vmatpush1.xpose.msra.mxu0 0.0
    %2804 = vmatprep.subr.mxu0 0.0
    %2805 = vmatpush1.xpose.msra.mxu0 0.0
    %2806 = vmatprep.subr.mxu0 0.0
    %2807 = vmatpush1.xpose.msra.mxu0 0.0
    %2808 = vmatprep.subr.mxu0 0.0
    %2809 = vmatpush1.xpose.msra.mxu0 0.0
    %2810 = vmatprep.subr.mxu0 0.0
    %2811 = vmatpush1.xpose.msra.mxu0 0.0
    %2812 = vmatprep.subr.mxu0 0.0
    %2813 = vmatpush1.xpose.msra.mxu0 0.0
    %2814 = vmatprep.subr.mxu0 0.0
    %2815 = vmatpush1.xpose.msra.mxu0 0.0
    %2816 = vmatprep.subr.mxu0 0.0
    %2817 = vmatpush1.xpose.msra.mxu0 0.0
    %2818 = vmatprep.subr.mxu0 0.0
    %2819 = vmatpush1.xpose.msra.mxu0 0.0
    %2820 = vmatprep.subr.mxu0 0.0
    %2821 = vmatpush1.xpose.msra.mxu0 0.0
    %2822 = vmatprep.subr.mxu0 0.0
    %2823 = vmatpush1.xpose.msra.mxu0 0.0
    %2824 = vmatprep.subr.mxu0 0.0
    %2825 = vmatpush1.xpose.msra.mxu0 0.0
    %2826 = vmatprep.subr.mxu0 0.0
    %2827 = vmatpush1.xpose.msra.mxu0 0.0
    %2828 = vmatprep.subr.mxu0 0.0
    %2829 = vmatpush1.xpose.msra.mxu0 0.0
    %2830 = vmatprep.subr.mxu0 0.0
    %2831 = vmatpush1.xpose.msra.mxu0 0.0
    %2832 = vmatprep.subr.mxu0 0.0
    %2833 = vmatpush1.xpose.msra.mxu0 0.0
    %2834 = vmatprep.subr.mxu0 0.0
    %2835 = vmatpush1.xpose.msra.mxu0 0.0
    %2836 = vmatprep.subr.mxu0 0.0
    %2837 = vmatpush1.xpose.msra.mxu0 0.0
    %2838 = vmatprep.subr.mxu0 0.0
    %2839 = vmatpush1.xpose.msra.mxu0 0.0
    %2840 = vmatprep.subr.mxu0 0.0
    %2841 = vmatpush1.xpose.msra.mxu0 0.0
    %2842 = vmatprep.subr.mxu0 0.0
    %2843 = vmatpush1.xpose.msra.mxu0 0.0
    %2844 = vmatprep.subr.mxu0 0.0
    %2845 = vmatpush1.xpose.msra.mxu0 0.0
    %2846 = vmatprep.subr.mxu0 0.0
    %2847 = vmatpush1.xpose.msra.mxu0 0.0
    %2848 = vmatprep.subr.mxu0 0.0
    %2849 = vmatpush1.xpose.msra.mxu0 0.0
    %2850 = vmatprep.mubr.f32.mxu0 0.0
    %2851 = vmatmul.mubr.f32.gmra.mrb[0].mxu0 %v2782
    %v2852 = vpop.f32.mrb[0].mxu0
    %v2853 = vadd.f32 0.0, %v2852
    %v2854 = vpop.f32.mrb[0].mxu0
    %2855 = vdwg.mxu0
    %2856 = vrot.lane.b32.xlu0 %v2701, 112
    %v2857 = vpop.permute.xlu0 %2856
    %2858 = vrot.lane.b32.xlu0 %v2701, 80
    %v2859 = vpop.permute.xlu0 %2858
    %v2860 = vsel %vm542, %v2857, 0
    %v2862 = vsel %vm542, %v2859, 0
    %2864 = vmatprep.subr.mxu0 0.0
    %2865 = vmatpush1.xpose.msra.mxu0 %v2862
    %2866 = vmatprep.subr.mxu0 0.0
    %2867 = vmatpush1.xpose.msra.mxu0 0.0
    %2868 = vmatprep.subr.mxu0 0.0
    %2869 = vmatpush1.xpose.msra.mxu0 0.0
    %2870 = vmatprep.subr.mxu0 0.0
    %2871 = vmatpush1.xpose.msra.mxu0 0.0
    %2872 = vmatprep.subr.mxu0 0.0
    %2873 = vmatpush1.xpose.msra.mxu0 0.0
    %2874 = vmatprep.subr.mxu0 0.0
    %2875 = vmatpush1.xpose.msra.mxu0 0.0
    %2876 = vmatprep.subr.mxu0 0.0
    %2877 = vmatpush1.xpose.msra.mxu0 0.0
    %2878 = vmatprep.subr.mxu0 0.0
    %2879 = vmatpush1.xpose.msra.mxu0 0.0
    %2880 = vmatprep.subr.mxu0 0.0
    %2881 = vmatpush1.xpose.msra.mxu0 0.0
    %2882 = vmatprep.subr.mxu0 0.0
    %2883 = vmatpush1.xpose.msra.mxu0 0.0
    %2884 = vmatprep.subr.mxu0 0.0
    %2885 = vmatpush1.xpose.msra.mxu0 0.0
    %2886 = vmatprep.subr.mxu0 0.0
    %2887 = vmatpush1.xpose.msra.mxu0 0.0
    %2888 = vmatprep.subr.mxu0 0.0
    %2889 = vmatpush1.xpose.msra.mxu0 0.0
    %2890 = vmatprep.subr.mxu0 0.0
    %2891 = vmatpush1.xpose.msra.mxu0 0.0
    %2892 = vmatprep.subr.mxu0 0.0
    %2893 = vmatpush1.xpose.msra.mxu0 0.0
    %2894 = vmatprep.subr.mxu0 0.0
    %2895 = vmatpush1.xpose.msra.mxu0 0.0
    %2896 = vmatprep.subr.mxu0 0.0
    %2897 = vmatpush1.xpose.msra.mxu0 0.0
    %2898 = vmatprep.subr.mxu0 0.0
    %2899 = vmatpush1.xpose.msra.mxu0 0.0
    %2900 = vmatprep.subr.mxu0 0.0
    %2901 = vmatpush1.xpose.msra.mxu0 0.0
    %2902 = vmatprep.subr.mxu0 0.0
    %2903 = vmatpush1.xpose.msra.mxu0 0.0
    %2904 = vmatprep.subr.mxu0 0.0
    %2905 = vmatpush1.xpose.msra.mxu0 0.0
    %2906 = vmatprep.subr.mxu0 0.0
    %2907 = vmatpush1.xpose.msra.mxu0 0.0
    %2908 = vmatprep.subr.mxu0 0.0
    %2909 = vmatpush1.xpose.msra.mxu0 0.0
    %2910 = vmatprep.subr.mxu0 0.0
    %2911 = vmatpush1.xpose.msra.mxu0 0.0
    %2912 = vmatprep.subr.mxu0 0.0
    %2913 = vmatpush1.xpose.msra.mxu0 0.0
    %2914 = vmatprep.subr.mxu0 0.0
    %2915 = vmatpush1.xpose.msra.mxu0 0.0
    %2916 = vmatprep.subr.mxu0 0.0
    %2917 = vmatpush1.xpose.msra.mxu0 0.0
    %2918 = vmatprep.subr.mxu0 0.0
    %2919 = vmatpush1.xpose.msra.mxu0 0.0
    %2920 = vmatprep.subr.mxu0 0.0
    %2921 = vmatpush1.xpose.msra.mxu0 0.0
    %2922 = vmatprep.subr.mxu0 0.0
    %2923 = vmatpush1.xpose.msra.mxu0 0.0
    %2924 = vmatprep.subr.mxu0 0.0
    %2925 = vmatpush1.xpose.msra.mxu0 0.0
    %2926 = vmatprep.subr.mxu0 0.0
    %2927 = vmatpush1.xpose.msra.mxu0 0.0
    %2928 = vmatprep.mubr.f32.mxu0 0.0
    %2929 = vmatmul.mubr.f32.gmra.mrb[0].mxu0 %v2860
    %v2930 = vpop.f32.mrb[0].mxu0
    %v2931 = vadd.f32 0.0, %v2930
    %v2932 = vpop.f32.mrb[0].mxu0
    %2933 = vdwg.mxu0
    %2934 = vrot.lane.b32.xlu0 %v2701, 104
    %v2935 = vpop.permute.xlu0 %2934
    %2936 = vrot.lane.b32.xlu0 %v2701, 72
    %v2937 = vpop.permute.xlu0 %2936
    %v2938 = vsel %vm542, %v2935, 0
    %v2940 = vsel %vm542, %v2937, 0
    %2942 = vmatprep.subr.mxu0 0.0
    %2943 = vmatpush1.xpose.msra.mxu0 %v2940
    %2944 = vmatprep.subr.mxu0 0.0
    %2945 = vmatpush1.xpose.msra.mxu0 0.0
    %2946 = vmatprep.subr.mxu0 0.0
    %2947 = vmatpush1.xpose.msra.mxu0 0.0
    %2948 = vmatprep.subr.mxu0 0.0
    %2949 = vmatpush1.xpose.msra.mxu0 0.0
    %2950 = vmatprep.subr.mxu0 0.0
    %2951 = vmatpush1.xpose.msra.mxu0 0.0
    %2952 = vmatprep.subr.mxu0 0.0
    %2953 = vmatpush1.xpose.msra.mxu0 0.0
    %2954 = vmatprep.subr.mxu0 0.0
    %2955 = vmatpush1.xpose.msra.mxu0 0.0
    %2956 = vmatprep.subr.mxu0 0.0
    %2957 = vmatpush1.xpose.msra.mxu0 0.0
    %2958 = vmatprep.subr.mxu0 0.0
    %2959 = vmatpush1.xpose.msra.mxu0 0.0
    %2960 = vmatprep.subr.mxu0 0.0
    %2961 = vmatpush1.xpose.msra.mxu0 0.0
    %2962 = vmatprep.subr.mxu0 0.0
    %2963 = vmatpush1.xpose.msra.mxu0 0.0
    %2964 = vmatprep.subr.mxu0 0.0
    %2965 = vmatpush1.xpose.msra.mxu0 0.0
    %2966 = vmatprep.subr.mxu0 0.0
    %2967 = vmatpush1.xpose.msra.mxu0 0.0
    %2968 = vmatprep.subr.mxu0 0.0
    %2969 = vmatpush1.xpose.msra.mxu0 0.0
    %2970 = vmatprep.subr.mxu0 0.0
    %2971 = vmatpush1.xpose.msra.mxu0 0.0
    %2972 = vmatprep.subr.mxu0 0.0
    %2973 = vmatpush1.xpose.msra.mxu0 0.0
    %2974 = vmatprep.subr.mxu0 0.0
    %2975 = vmatpush1.xpose.msra.mxu0 0.0
    %2976 = vmatprep.subr.mxu0 0.0
    %2977 = vmatpush1.xpose.msra.mxu0 0.0
    %2978 = vmatprep.subr.mxu0 0.0
    %2979 = vmatpush1.xpose.msra.mxu0 0.0
    %2980 = vmatprep.subr.mxu0 0.0
    %2981 = vmatpush1.xpose.msra.mxu0 0.0
    %2982 = vmatprep.subr.mxu0 0.0
    %2983 = vmatpush1.xpose.msra.mxu0 0.0
    %2984 = vmatprep.subr.mxu0 0.0
    %2985 = vmatpush1.xpose.msra.mxu0 0.0
    %2986 = vmatprep.subr.mxu0 0.0
    %2987 = vmatpush1.xpose.msra.mxu0 0.0
    %2988 = vmatprep.subr.mxu0 0.0
    %2989 = vmatpush1.xpose.msra.mxu0 0.0
    %2990 = vmatprep.subr.mxu0 0.0
    %2991 = vmatpush1.xpose.msra.mxu0 0.0
    %2992 = vmatprep.subr.mxu0 0.0
    %2993 = vmatpush1.xpose.msra.mxu0 0.0
    %2994 = vmatprep.subr.mxu0 0.0
    %2995 = vmatpush1.xpose.msra.mxu0 0.0
    %2996 = vmatprep.subr.mxu0 0.0
    %2997 = vmatpush1.xpose.msra.mxu0 0.0
    %2998 = vmatprep.subr.mxu0 0.0
    %2999 = vmatpush1.xpose.msra.mxu0 0.0
    %3000 = vmatprep.subr.mxu0 0.0
    %3001 = vmatpush1.xpose.msra.mxu0 0.0
    %3002 = vmatprep.subr.mxu0 0.0
    %3003 = vmatpush1.xpose.msra.mxu0 0.0
    %3004 = vmatprep.subr.mxu0 0.0
    %3005 = vmatpush1.xpose.msra.mxu0 0.0
    %3006 = vmatprep.mubr.f32.mxu0 0.0
    %3007 = vmatmul.mubr.f32.gmra.mrb[0].mxu0 %v2938
    %v3008 = vpop.f32.mrb[0].mxu0
    %v3009 = vadd.f32 0.0, %v3008
    %v3010 = vpop.f32.mrb[0].mxu0
    %3011 = vdwg.mxu0
    %v3013 = vrot.slane %v2539, 3
    %v3016 = vrot.slane %v2617, 6
    %v3019 = vrot.slane %v2695, 1
    %v3022 = vrot.slane %v2775, 4
    %v3025 = vrot.slane %v2853, 7
    %v3028 = vrot.slane %v2931, 2
    %v3031 = vrot.slane %v3009, 5
    %v3033 = vsel %vm445, %v2461, %v3013
    %v3034 = vsel %vm1187, %v3013, %v3016
    %v3035 = vsel %vm1189, %v3034, %v3019
    %v3036 = vsel %vm275, %v3019, %v3022
    %v3037 = vsel %vm1192, %v3022, %v3025
    %v3038 = vsel %vm109, %v3037, %v3028
    %v3039 = vsel %vm273, %v3028, %v3031
    %v3040 = vsel %vm1196, %v3033, -inf
    %3041 = vmax.xlane.f32.xlu0 %v3040
    %v3042 = vpop.xlane.xlu0 %3041
    %v3043 = vsel %vm1196, %v3035, -inf
    %3044 = vmax.xlane.f32.xlu0 %v3043
    %v3045 = vpop.xlane.xlu0 %3044
    %v3046 = vsel %vm1196, %v3036, -inf
    %3047 = vmax.xlane.f32.xlu0 %v3046
    %v3048 = vpop.xlane.xlu0 %3047
    %v3049 = vsel %vm1196, %v3038, -inf
    %3050 = vmax.xlane.f32.xlu0 %v3049
    %v3051 = vpop.xlane.xlu0 %3050
    %v3052 = vsel %vm1196, %v3039, -inf
    %3053 = vmax.xlane.f32.xlu0 %v3052
    %v3054 = vpop.xlane.xlu0 %3053
    %v3055 = vsub.f32 %v3033, %v3042
    %v3056 = vsub.f32 %v3035, %v3045
    %v3057 = vsub.f32 %v3036, %v3048
    %v3058 = vsub.f32 %v3038, %v3051
    %v3059 = vsub.f32 %v3039, %v3054
    %v3060 = vmul.f32 %v3055, 1.442695
    %v3061 = vpow.pop %v3060
    %v3062 = vmul.f32 %v3056, 1.442695
    %v3063 = vpow.pop %v3062
    %v3064 = vmul.f32 %v3057, 1.442695
    %v3065 = vpow.pop %v3064
    %v3066 = vmul.f32 %v3058, 1.442695
    %v3067 = vpow.pop %v3066
    %v3068 = vmul.f32 %v3059, 1.442695
    %v3069 = vpow.pop %v3068
    %v3070 = vsel %vm1196, %v3061, 0.0
    %3071 = vadd.xlane.f32.xlu0 %v3070
    %v3072 = vpop.xlane.xlu0 %3071
    %v3073 = vsel %vm1196, %v3063, 0.0
    %3074 = vadd.xlane.f32.xlu0 %v3073
    %v3075 = vpop.xlane.xlu0 %3074
    %v3076 = vsel %vm1196, %v3065, 0.0
    %3077 = vadd.xlane.f32.xlu0 %v3076
    %v3078 = vpop.xlane.xlu0 %3077
    %v3079 = vsel %vm1196, %v3067, 0.0
    %3080 = vadd.xlane.f32.xlu0 %v3079
    %v3081 = vpop.xlane.xlu0 %3080
    %v3082 = vsel %vm1196, %v3069, 0.0
    %3083 = vadd.xlane.f32.xlu0 %v3082
    %v3084 = vpop.xlane.xlu0 %3083
    %v3085 = vrcp.pop %v3072
    %v3086 = vmul.f32 %v3061, %v3085
    %v3087 = vrcp.pop %v3075
    %v3088 = vmul.f32 %v3063, %v3087
    %v3089 = vrcp.pop %v3078
    %v3090 = vmul.f32 %v3065, %v3089
    %v3091 = vrcp.pop %v3081
    %v3092 = vmul.f32 %v3067, %v3091
    %v3093 = vrcp.pop %v3084
    %v3094 = vmul.f32 %v3069, %v3093
    %3095 = vrot.lane.b32.xlu0 %v2379, 64
    %v3096 = vpop.permute.xlu0 %3095
    %v3098 = vsel %vm1196, %v3086, 0
    %v3100 = vsel %vm445, %v3096, 0
    %3102 = vmatprep.subr.mxu0 0.0
    %3103 = vmatpush1.msra.mxu0 %v3100
    %3104 = vmatprep.subr.mxu0 0.0
    %3105 = vmatpush1.msra.mxu0 0.0
    %3106 = vmatprep.subr.mxu0 0.0
    %3107 = vmatpush1.msra.mxu0 0.0
    %3108 = vmatprep.subr.mxu0 0.0
    %3109 = vmatpush1.msra.mxu0 0.0
    %3110 = vmatprep.subr.mxu0 0.0
    %3111 = vmatpush1.msra.mxu0 0.0
    %3112 = vmatprep.subr.mxu0 0.0
    %3113 = vmatpush1.msra.mxu0 0.0
    %3114 = vmatprep.subr.mxu0 0.0
    %3115 = vmatpush1.msra.mxu0 0.0
    %3116 = vmatprep.subr.mxu0 0.0
    %3117 = vmatpush1.msra.mxu0 0.0
    %3118 = vmatprep.subr.mxu0 0.0
    %3119 = vmatpush1.msra.mxu0 0.0
    %3120 = vmatprep.subr.mxu0 0.0
    %3121 = vmatpush1.msra.mxu0 0.0
    %3122 = vmatprep.subr.mxu0 0.0
    %3123 = vmatpush1.msra.mxu0 0.0
    %3124 = vmatprep.subr.mxu0 0.0
    %3125 = vmatpush1.msra.mxu0 0.0
    %3126 = vmatprep.subr.mxu0 0.0
    %3127 = vmatpush1.msra.mxu0 0.0
    %3128 = vmatprep.subr.mxu0 0.0
    %3129 = vmatpush1.msra.mxu0 0.0
    %3130 = vmatprep.subr.mxu0 0.0
    %3131 = vmatpush1.msra.mxu0 0.0
    %3132 = vmatprep.subr.mxu0 0.0
    %3133 = vmatpush1.msra.mxu0 0.0
    %3134 = vmatprep.subr.mxu0 0.0
    %3135 = vmatpush1.msra.mxu0 0.0
    %3136 = vmatprep.subr.mxu0 0.0
    %3137 = vmatpush1.msra.mxu0 0.0
    %3138 = vmatprep.subr.mxu0 0.0
    %3139 = vmatpush1.msra.mxu0 0.0
    %3140 = vmatprep.subr.mxu0 0.0
    %3141 = vmatpush1.msra.mxu0 0.0
    %3142 = vmatprep.subr.mxu0 0.0
    %3143 = vmatpush1.msra.mxu0 0.0
    %3144 = vmatprep.subr.mxu0 0.0
    %3145 = vmatpush1.msra.mxu0 0.0
    %3146 = vmatprep.subr.mxu0 0.0
    %3147 = vmatpush1.msra.mxu0 0.0
    %3148 = vmatprep.subr.mxu0 0.0
    %3149 = vmatpush1.msra.mxu0 0.0
    %3150 = vmatprep.subr.mxu0 0.0
    %3151 = vmatpush1.msra.mxu0 0.0
    %3152 = vmatprep.subr.mxu0 0.0
    %3153 = vmatpush1.msra.mxu0 0.0
    %3154 = vmatprep.subr.mxu0 0.0
    %3155 = vmatpush1.msra.mxu0 0.0
    %3156 = vmatprep.subr.mxu0 0.0
    %3157 = vmatpush1.msra.mxu0 0.0
    %3158 = vmatprep.subr.mxu0 0.0
    %3159 = vmatpush1.msra.mxu0 0.0
    %3160 = vmatprep.subr.mxu0 0.0
    %3161 = vmatpush1.msra.mxu0 0.0
    %3162 = vmatprep.subr.mxu0 0.0
    %3163 = vmatpush1.msra.mxu0 0.0
    %3164 = vmatprep.subr.mxu0 0.0
    %3165 = vmatpush1.msra.mxu0 0.0
    %3166 = vmatprep.mubr.f32.mxu0 0.0
    %3167 = vmatmul.mubr.f32.gmra.mrb[0].mxu0 %v3098
    %v3168 = vpop.f32.mrb[0].mxu0
    %v3169 = vadd.f32 0.0, %v3168
    %v3170 = vpop.f32.mrb[0].mxu0
    %3171 = vdwg.mxu0
    %v3173 = vrot.slane %v3086, 5
    %v3174 = vrot.slane %v3088, 5
    %v3175 = vsel %vm273, %v3173, %v3174
    %3176 = vrot.lane.b32.xlu0 %v2379, 56
    %v3177 = vpop.permute.xlu0 %3176
    %v3178 = vsel %vm1196, %v3175, 0
    %v3180 = vsel %vm445, %v3177, 0
    %3182 = vmatprep.subr.mxu0 0.0
    %3183 = vmatpush1.msra.mxu0 %v3180
    %3184 = vmatprep.subr.mxu0 0.0
    %3185 = vmatpush1.msra.mxu0 0.0
    %3186 = vmatprep.subr.mxu0 0.0
    %3187 = vmatpush1.msra.mxu0 0.0
    %3188 = vmatprep.subr.mxu0 0.0
    %3189 = vmatpush1.msra.mxu0 0.0
    %3190 = vmatprep.subr.mxu0 0.0
    %3191 = vmatpush1.msra.mxu0 0.0
    %3192 = vmatprep.subr.mxu0 0.0
    %3193 = vmatpush1.msra.mxu0 0.0
    %3194 = vmatprep.subr.mxu0 0.0
    %3195 = vmatpush1.msra.mxu0 0.0
    %3196 = vmatprep.subr.mxu0 0.0
    %3197 = vmatpush1.msra.mxu0 0.0
    %3198 = vmatprep.subr.mxu0 0.0
    %3199 = vmatpush1.msra.mxu0 0.0
    %3200 = vmatprep.subr.mxu0 0.0
    %3201 = vmatpush1.msra.mxu0 0.0
    %3202 = vmatprep.subr.mxu0 0.0
    %3203 = vmatpush1.msra.mxu0 0.0
    %3204 = vmatprep.subr.mxu0 0.0
    %3205 = vmatpush1.msra.mxu0 0.0
    %3206 = vmatprep.subr.mxu0 0.0
    %3207 = vmatpush1.msra.mxu0 0.0
    %3208 = vmatprep.subr.mxu0 0.0
    %3209 = vmatpush1.msra.mxu0 0.0
    %3210 = vmatprep.subr.mxu0 0.0
    %3211 = vmatpush1.msra.mxu0 0.0
    %3212 = vmatprep.subr.mxu0 0.0
    %3213 = vmatpush1.msra.mxu0 0.0
    %3214 = vmatprep.subr.mxu0 0.0
    %3215 = vmatpush1.msra.mxu0 0.0
    %3216 = vmatprep.subr.mxu0 0.0
    %3217 = vmatpush1.msra.mxu0 0.0
    %3218 = vmatprep.subr.mxu0 0.0
    %3219 = vmatpush1.msra.mxu0 0.0
    %3220 = vmatprep.subr.mxu0 0.0
    %3221 = vmatpush1.msra.mxu0 0.0
    %3222 = vmatprep.subr.mxu0 0.0
    %3223 = vmatpush1.msra.mxu0 0.0
    %3224 = vmatprep.subr.mxu0 0.0
    %3225 = vmatpush1.msra.mxu0 0.0
    %3226 = vmatprep.subr.mxu0 0.0
    %3227 = vmatpush1.msra.mxu0 0.0
    %3228 = vmatprep.subr.mxu0 0.0
    %3229 = vmatpush1.msra.mxu0 0.0
    %3230 = vmatprep.subr.mxu0 0.0
    %3231 = vmatpush1.msra.mxu0 0.0
    %3232 = vmatprep.subr.mxu0 0.0
    %3233 = vmatpush1.msra.mxu0 0.0
    %3234 = vmatprep.subr.mxu0 0.0
    %3235 = vmatpush1.msra.mxu0 0.0
    %3236 = vmatprep.subr.mxu0 0.0
    %3237 = vmatpush1.msra.mxu0 0.0
    %3238 = vmatprep.subr.mxu0 0.0
    %3239 = vmatpush1.msra.mxu0 0.0
    %3240 = vmatprep.subr.mxu0 0.0
    %3241 = vmatpush1.msra.mxu0 0.0
    %3242 = vmatprep.subr.mxu0 0.0
    %3243 = vmatpush1.msra.mxu0 0.0
    %3244 = vmatprep.subr.mxu0 0.0
    %3245 = vmatpush1.msra.mxu0 0.0
    %3246 = vmatprep.mubr.f32.mxu0 0.0
    %3247 = vmatmul.mubr.f32.gmra.mrb[0].mxu0 %v3178
    %v3248 = vpop.f32.mrb[0].mxu0
    %v3249 = vadd.f32 0.0, %v3248
    %v3250 = vpop.f32.mrb[0].mxu0
    %3251 = vdwg.mxu0
    %v3252 = vrot.slane %v3088, 2
    %3253 = vrot.lane.b32.xlu0 %v2379, 48
    %v3254 = vpop.permute.xlu0 %3253
    %v3255 = vsel %vm1196, %v3252, 0
    %v3257 = vsel %vm445, %v3254, 0
    %3259 = vmatprep.subr.mxu0 0.0
    %3260 = vmatpush1.msra.mxu0 %v3257
    %3261 = vmatprep.subr.mxu0 0.0
    %3262 = vmatpush1.msra.mxu0 0.0
    %3263 = vmatprep.subr.mxu0 0.0
    %3264 = vmatpush1.msra.mxu0 0.0
    %3265 = vmatprep.subr.mxu0 0.0
    %3266 = vmatpush1.msra.mxu0 0.0
    %3267 = vmatprep.subr.mxu0 0.0
    %3268 = vmatpush1.msra.mxu0 0.0
    %3269 = vmatprep.subr.mxu0 0.0
    %3270 = vmatpush1.msra.mxu0 0.0
    %3271 = vmatprep.subr.mxu0 0.0
    %3272 = vmatpush1.msra.mxu0 0.0
    %3273 = vmatprep.subr.mxu0 0.0
    %3274 = vmatpush1.msra.mxu0 0.0
    %3275 = vmatprep.subr.mxu0 0.0
    %3276 = vmatpush1.msra.mxu0 0.0
    %3277 = vmatprep.subr.mxu0 0.0
    %3278 = vmatpush1.msra.mxu0 0.0
    %3279 = vmatprep.subr.mxu0 0.0
    %3280 = vmatpush1.msra.mxu0 0.0
    %3281 = vmatprep.subr.mxu0 0.0
    %3282 = vmatpush1.msra.mxu0 0.0
    %3283 = vmatprep.subr.mxu0 0.0
    %3284 = vmatpush1.msra.mxu0 0.0
    %3285 = vmatprep.subr.mxu0 0.0
    %3286 = vmatpush1.msra.mxu0 0.0
    %3287 = vmatprep.subr.mxu0 0.0
    %3288 = vmatpush1.msra.mxu0 0.0
    %3289 = vmatprep.subr.mxu0 0.0
    %3290 = vmatpush1.msra.mxu0 0.0
    %3291 = vmatprep.subr.mxu0 0.0
    %3292 = vmatpush1.msra.mxu0 0.0
    %3293 = vmatprep.subr.mxu0 0.0
    %3294 = vmatpush1.msra.mxu0 0.0
    %3295 = vmatprep.subr.mxu0 0.0
    %3296 = vmatpush1.msra.mxu0 0.0
    %3297 = vmatprep.subr.mxu0 0.0
    %3298 = vmatpush1.msra.mxu0 0.0
    %3299 = vmatprep.subr.mxu0 0.0
    %3300 = vmatpush1.msra.mxu0 0.0
    %3301 = vmatprep.subr.mxu0 0.0
    %3302 = vmatpush1.msra.mxu0 0.0
    %3303 = vmatprep.subr.mxu0 0.0
    %3304 = vmatpush1.msra.mxu0 0.0
    %3305 = vmatprep.subr.mxu0 0.0
    %3306 = vmatpush1.msra.mxu0 0.0
    %3307 = vmatprep.subr.mxu0 0.0
    %3308 = vmatpush1.msra.mxu0 0.0
    %3309 = vmatprep.subr.mxu0 0.0
    %3310 = vmatpush1.msra.mxu0 0.0
    %3311 = vmatprep.subr.mxu0 0.0
    %3312 = vmatpush1.msra.mxu0 0.0
    %3313 = vmatprep.subr.mxu0 0.0
    %3314 = vmatpush1.msra.mxu0 0.0
    %3315 = vmatprep.subr.mxu0 0.0
    %3316 = vmatpush1.msra.mxu0 0.0
    %3317 = vmatprep.subr.mxu0 0.0
    %3318 = vmatpush1.msra.mxu0 0.0
    %3319 = vmatprep.subr.mxu0 0.0
    %3320 = vmatpush1.msra.mxu0 0.0
    %3321 = vmatprep.subr.mxu0 0.0
    %3322 = vmatpush1.msra.mxu0 0.0
    %3323 = vmatprep.mubr.f32.mxu0 0.0
    %3324 = vmatmul.mubr.f32.gmra.mrb[0].mxu0 %v3255
    %v3325 = vpop.f32.mrb[0].mxu0
    %v3326 = vadd.f32 0.0, %v3325
    %v3327 = vpop.f32.mrb[0].mxu0
    %3328 = vdwg.mxu0
    %v3330 = vrot.slane %v3088, 7
    %v3331 = vrot.slane %v3090, 7
    %v3332 = vsel %vm1192, %v3330, %v3331
    %3333 = vrot.lane.b32.xlu0 %v2379, 40
    %v3334 = vpop.permute.xlu0 %3333
    %v3335 = vsel %vm1196, %v3332, 0
    %v3337 = vsel %vm445, %v3334, 0
    %3339 = vmatprep.subr.mxu0 0.0
    %3340 = vmatpush1.msra.mxu0 %v3337
    %3341 = vmatprep.subr.mxu0 0.0
    %3342 = vmatpush1.msra.mxu0 0.0
    %3343 = vmatprep.subr.mxu0 0.0
    %3344 = vmatpush1.msra.mxu0 0.0
    %3345 = vmatprep.subr.mxu0 0.0
    %3346 = vmatpush1.msra.mxu0 0.0
    %3347 = vmatprep.subr.mxu0 0.0
    %3348 = vmatpush1.msra.mxu0 0.0
    %3349 = vmatprep.subr.mxu0 0.0
    %3350 = vmatpush1.msra.mxu0 0.0
    %3351 = vmatprep.subr.mxu0 0.0
    %3352 = vmatpush1.msra.mxu0 0.0
    %3353 = vmatprep.subr.mxu0 0.0
    %3354 = vmatpush1.msra.mxu0 0.0
    %3355 = vmatprep.subr.mxu0 0.0
    %3356 = vmatpush1.msra.mxu0 0.0
    %3357 = vmatprep.subr.mxu0 0.0
    %3358 = vmatpush1.msra.mxu0 0.0
    %3359 = vmatprep.subr.mxu0 0.0
    %3360 = vmatpush1.msra.mxu0 0.0
    %3361 = vmatprep.subr.mxu0 0.0
    %3362 = vmatpush1.msra.mxu0 0.0
    %3363 = vmatprep.subr.mxu0 0.0
    %3364 = vmatpush1.msra.mxu0 0.0
    %3365 = vmatprep.subr.mxu0 0.0
    %3366 = vmatpush1.msra.mxu0 0.0
    %3367 = vmatprep.subr.mxu0 0.0
    %3368 = vmatpush1.msra.mxu0 0.0
    %3369 = vmatprep.subr.mxu0 0.0
    %3370 = vmatpush1.msra.mxu0 0.0
    %3371 = vmatprep.subr.mxu0 0.0
    %3372 = vmatpush1.msra.mxu0 0.0
    %3373 = vmatprep.subr.mxu0 0.0
    %3374 = vmatpush1.msra.mxu0 0.0
    %3375 = vmatprep.subr.mxu0 0.0
    %3376 = vmatpush1.msra.mxu0 0.0
    %3377 = vmatprep.subr.mxu0 0.0
    %3378 = vmatpush1.msra.mxu0 0.0
    %3379 = vmatprep.subr.mxu0 0.0
    %3380 = vmatpush1.msra.mxu0 0.0
    %3381 = vmatprep.subr.mxu0 0.0
    %3382 = vmatpush1.msra.mxu0 0.0
    %3383 = vmatprep.subr.mxu0 0.0
    %3384 = vmatpush1.msra.mxu0 0.0
    %3385 = vmatprep.subr.mxu0 0.0
    %3386 = vmatpush1.msra.mxu0 0.0
    %3387 = vmatprep.subr.mxu0 0.0
    %3388 = vmatpush1.msra.mxu0 0.0
    %3389 = vmatprep.subr.mxu0 0.0
    %3390 = vmatpush1.msra.mxu0 0.0
    %3391 = vmatprep.subr.mxu0 0.0
    %3392 = vmatpush1.msra.mxu0 0.0
    %3393 = vmatprep.subr.mxu0 0.0
    %3394 = vmatpush1.msra.mxu0 0.0
    %3395 = vmatprep.subr.mxu0 0.0
    %3396 = vmatpush1.msra.mxu0 0.0
    %3397 = vmatprep.subr.mxu0 0.0
    %3398 = vmatpush1.msra.mxu0 0.0
    %3399 = vmatprep.subr.mxu0 0.0
    %3400 = vmatpush1.msra.mxu0 0.0
    %3401 = vmatprep.subr.mxu0 0.0
    %3402 = vmatpush1.msra.mxu0 0.0
    %3403 = vmatprep.mubr.f32.mxu0 0.0
    %3404 = vmatmul.mubr.f32.gmra.mrb[0].mxu0 %v3335
    %v3405 = vpop.f32.mrb[0].mxu0
    %v3406 = vadd.f32 0.0, %v3405
    %v3407 = vpop.f32.mrb[0].mxu0
    %3408 = vdwg.mxu0
    %3410 = vrot.lane.b32.xlu0 %v3249, 8
    %v3411 = vpop.permute.xlu0 %3410
    %3414 = vrot.lane.b32.xlu0 %v3326, 16
    %v3415 = vpop.permute.xlu0 %3414
    %3418 = vrot.lane.b32.xlu0 %v3406, 24
    %v3419 = vpop.permute.xlu0 %3418
    %v3421 = vsel %vm542, %v3169, %v3411
    %v3422 = vsel %vm1579, %v3421, %v3415
    %v3423 = vsel %vm1581, %v3422, %v3419
    %v3425 = vrot.slane %v3090, 4
    %v3426 = vrot.slane %v3092, 4
    %v3427 = vsel %vm275, %v3425, %v3426
    %3428 = vrot.lane.b32.xlu0 %v2701, 64
    %v3429 = vpop.permute.xlu0 %3428
    %v3430 = vsel %vm1196, %v3427, 0
    %v3432 = vsel %vm445, %v3429, 0
    %3434 = vmatprep.subr.mxu0 0.0
    %3435 = vmatpush1.msra.mxu0 %v3432
    %3436 = vmatprep.subr.mxu0 0.0
    %3437 = vmatpush1.msra.mxu0 0.0
    %3438 = vmatprep.subr.mxu0 0.0
    %3439 = vmatpush1.msra.mxu0 0.0
    %3440 = vmatprep.subr.mxu0 0.0
    %3441 = vmatpush1.msra.mxu0 0.0
    %3442 = vmatprep.subr.mxu0 0.0
    %3443 = vmatpush1.msra.mxu0 0.0
    %3444 = vmatprep.subr.mxu0 0.0
    %3445 = vmatpush1.msra.mxu0 0.0
    %3446 = vmatprep.subr.mxu0 0.0
    %3447 = vmatpush1.msra.mxu0 0.0
    %3448 = vmatprep.subr.mxu0 0.0
    %3449 = vmatpush1.msra.mxu0 0.0
    %3450 = vmatprep.subr.mxu0 0.0
    %3451 = vmatpush1.msra.mxu0 0.0
    %3452 = vmatprep.subr.mxu0 0.0
    %3453 = vmatpush1.msra.mxu0 0.0
    %3454 = vmatprep.subr.mxu0 0.0
    %3455 = vmatpush1.msra.mxu0 0.0
    %3456 = vmatprep.subr.mxu0 0.0
    %3457 = vmatpush1.msra.mxu0 0.0
    %3458 = vmatprep.subr.mxu0 0.0
    %3459 = vmatpush1.msra.mxu0 0.0
    %3460 = vmatprep.subr.mxu0 0.0
    %3461 = vmatpush1.msra.mxu0 0.0
    %3462 = vmatprep.subr.mxu0 0.0
    %3463 = vmatpush1.msra.mxu0 0.0
    %3464 = vmatprep.subr.mxu0 0.0
    %3465 = vmatpush1.msra.mxu0 0.0
    %3466 = vmatprep.subr.mxu0 0.0
    %3467 = vmatpush1.msra.mxu0 0.0
    %3468 = vmatprep.subr.mxu0 0.0
    %3469 = vmatpush1.msra.mxu0 0.0
    %3470 = vmatprep.subr.mxu0 0.0
    %3471 = vmatpush1.msra.mxu0 0.0
    %3472 = vmatprep.subr.mxu0 0.0
    %3473 = vmatpush1.msra.mxu0 0.0
    %3474 = vmatprep.subr.mxu0 0.0
    %3475 = vmatpush1.msra.mxu0 0.0
    %3476 = vmatprep.subr.mxu0 0.0
    %3477 = vmatpush1.msra.mxu0 0.0
    %3478 = vmatprep.subr.mxu0 0.0
    %3479 = vmatpush1.msra.mxu0 0.0
    %3480 = vmatprep.subr.mxu0 0.0
    %3481 = vmatpush1.msra.mxu0 0.0
    %3482 = vmatprep.subr.mxu0 0.0
    %3483 = vmatpush1.msra.mxu0 0.0
    %3484 = vmatprep.subr.mxu0 0.0
    %3485 = vmatpush1.msra.mxu0 0.0
    %3486 = vmatprep.subr.mxu0 0.0
    %3487 = vmatpush1.msra.mxu0 0.0
    %3488 = vmatprep.subr.mxu0 0.0
    %3489 = vmatpush1.msra.mxu0 0.0
    %3490 = vmatprep.subr.mxu0 0.0
    %3491 = vmatpush1.msra.mxu0 0.0
    %3492 = vmatprep.subr.mxu0 0.0
    %3493 = vmatpush1.msra.mxu0 0.0
    %3494 = vmatprep.subr.mxu0 0.0
    %3495 = vmatpush1.msra.mxu0 0.0
    %3496 = vmatprep.subr.mxu0 0.0
    %3497 = vmatpush1.msra.mxu0 0.0
    %3498 = vmatprep.mubr.f32.mxu0 0.0
    %3499 = vmatmul.mubr.f32.gmra.mrb[0].mxu0 %v3430
    %v3500 = vpop.f32.mrb[0].mxu0
    %v3501 = vadd.f32 0.0, %v3500
    %v3502 = vpop.f32.mrb[0].mxu0
    %3503 = vdwg.mxu0
    %v3504 = vrot.slane %v3092, 1
    %3505 = vrot.lane.b32.xlu0 %v2701, 56
    %v3506 = vpop.permute.xlu0 %3505
    %v3507 = vsel %vm1196, %v3504, 0
    %v3509 = vsel %vm445, %v3506, 0
    %3511 = vmatprep.subr.mxu0 0.0
    %3512 = vmatpush1.msra.mxu0 %v3509
    %3513 = vmatprep.subr.mxu0 0.0
    %3514 = vmatpush1.msra.mxu0 0.0
    %3515 = vmatprep.subr.mxu0 0.0
    %3516 = vmatpush1.msra.mxu0 0.0
    %3517 = vmatprep.subr.mxu0 0.0
    %3518 = vmatpush1.msra.mxu0 0.0
    %3519 = vmatprep.subr.mxu0 0.0
    %3520 = vmatpush1.msra.mxu0 0.0
    %3521 = vmatprep.subr.mxu0 0.0
    %3522 = vmatpush1.msra.mxu0 0.0
    %3523 = vmatprep.subr.mxu0 0.0
    %3524 = vmatpush1.msra.mxu0 0.0
    %3525 = vmatprep.subr.mxu0 0.0
    %3526 = vmatpush1.msra.mxu0 0.0
    %3527 = vmatprep.subr.mxu0 0.0
    %3528 = vmatpush1.msra.mxu0 0.0
    %3529 = vmatprep.subr.mxu0 0.0
    %3530 = vmatpush1.msra.mxu0 0.0
    %3531 = vmatprep.subr.mxu0 0.0
    %3532 = vmatpush1.msra.mxu0 0.0
    %3533 = vmatprep.subr.mxu0 0.0
    %3534 = vmatpush1.msra.mxu0 0.0
    %3535 = vmatprep.subr.mxu0 0.0
    %3536 = vmatpush1.msra.mxu0 0.0
    %3537 = vmatprep.subr.mxu0 0.0
    %3538 = vmatpush1.msra.mxu0 0.0
    %3539 = vmatprep.subr.mxu0 0.0
    %3540 = vmatpush1.msra.mxu0 0.0
    %3541 = vmatprep.subr.mxu0 0.0
    %3542 = vmatpush1.msra.mxu0 0.0
    %3543 = vmatprep.subr.mxu0 0.0
    %3544 = vmatpush1.msra.mxu0 0.0
    %3545 = vmatprep.subr.mxu0 0.0
    %3546 = vmatpush1.msra.mxu0 0.0
    %3547 = vmatprep.subr.mxu0 0.0
    %3548 = vmatpush1.msra.mxu0 0.0
    %3549 = vmatprep.subr.mxu0 0.0
    %3550 = vmatpush1.msra.mxu0 0.0
    %3551 = vmatprep.subr.mxu0 0.0
    %3552 = vmatpush1.msra.mxu0 0.0
    %3553 = vmatprep.subr.mxu0 0.0
    %3554 = vmatpush1.msra.mxu0 0.0
    %3555 = vmatprep.subr.mxu0 0.0
    %3556 = vmatpush1.msra.mxu0 0.0
    %3557 = vmatprep.subr.mxu0 0.0
    %3558 = vmatpush1.msra.mxu0 0.0
    %3559 = vmatprep.subr.mxu0 0.0
    %3560 = vmatpush1.msra.mxu0 0.0
    %3561 = vmatprep.subr.mxu0 0.0
    %3562 = vmatpush1.msra.mxu0 0.0
    %3563 = vmatprep.subr.mxu0 0.0
    %3564 = vmatpush1.msra.mxu0 0.0
    %3565 = vmatprep.subr.mxu0 0.0
    %3566 = vmatpush1.msra.mxu0 0.0
    %3567 = vmatprep.subr.mxu0 0.0
    %3568 = vmatpush1.msra.mxu0 0.0
    %3569 = vmatprep.subr.mxu0 0.0
    %3570 = vmatpush1.msra.mxu0 0.0
    %3571 = vmatprep.subr.mxu0 0.0
    %3572 = vmatpush1.msra.mxu0 0.0
    %3573 = vmatprep.subr.mxu0 0.0
    %3574 = vmatpush1.msra.mxu0 0.0
    %3575 = vmatprep.mubr.f32.mxu0 0.0
    %3576 = vmatmul.mubr.f32.gmra.mrb[0].mxu0 %v3507
    %v3577 = vpop.f32.mrb[0].mxu0
    %v3578 = vadd.f32 0.0, %v3577
    %v3579 = vpop.f32.mrb[0].mxu0
    %3580 = vdwg.mxu0
    %v3582 = vrot.slane %v3092, 6
    %v3583 = vrot.slane %v3094, 6
    %v3584 = vsel %vm1187, %v3582, %v3583
    %3585 = vrot.lane.b32.xlu0 %v2701, 48
    %v3586 = vpop.permute.xlu0 %3585
    %v3587 = vsel %vm1196, %v3584, 0
    %v3589 = vsel %vm445, %v3586, 0
    %3591 = vmatprep.subr.mxu0 0.0
    %3592 = vmatpush1.msra.mxu0 %v3589
    %3593 = vmatprep.subr.mxu0 0.0
    %3594 = vmatpush1.msra.mxu0 0.0
    %3595 = vmatprep.subr.mxu0 0.0
    %3596 = vmatpush1.msra.mxu0 0.0
    %3597 = vmatprep.subr.mxu0 0.0
    %3598 = vmatpush1.msra.mxu0 0.0
    %3599 = vmatprep.subr.mxu0 0.0
    %3600 = vmatpush1.msra.mxu0 0.0
    %3601 = vmatprep.subr.mxu0 0.0
    %3602 = vmatpush1.msra.mxu0 0.0
    %3603 = vmatprep.subr.mxu0 0.0
    %3604 = vmatpush1.msra.mxu0 0.0
    %3605 = vmatprep.subr.mxu0 0.0
    %3606 = vmatpush1.msra.mxu0 0.0
    %3607 = vmatprep.subr.mxu0 0.0
    %3608 = vmatpush1.msra.mxu0 0.0
    %3609 = vmatprep.subr.mxu0 0.0
    %3610 = vmatpush1.msra.mxu0 0.0
    %3611 = vmatprep.subr.mxu0 0.0
    %3612 = vmatpush1.msra.mxu0 0.0
    %3613 = vmatprep.subr.mxu0 0.0
    %3614 = vmatpush1.msra.mxu0 0.0
    %3615 = vmatprep.subr.mxu0 0.0
    %3616 = vmatpush1.msra.mxu0 0.0
    %3617 = vmatprep.subr.mxu0 0.0
    %3618 = vmatpush1.msra.mxu0 0.0
    %3619 = vmatprep.subr.mxu0 0.0
    %3620 = vmatpush1.msra.mxu0 0.0
    %3621 = vmatprep.subr.mxu0 0.0
    %3622 = vmatpush1.msra.mxu0 0.0
    %3623 = vmatprep.subr.mxu0 0.0
    %3624 = vmatpush1.msra.mxu0 0.0
    %3625 = vmatprep.subr.mxu0 0.0
    %3626 = vmatpush1.msra.mxu0 0.0
    %3627 = vmatprep.subr.mxu0 0.0
    %3628 = vmatpush1.msra.mxu0 0.0
    %3629 = vmatprep.subr.mxu0 0.0
    %3630 = vmatpush1.msra.mxu0 0.0
    %3631 = vmatprep.subr.mxu0 0.0
    %3632 = vmatpush1.msra.mxu0 0.0
    %3633 = vmatprep.subr.mxu0 0.0
    %3634 = vmatpush1.msra.mxu0 0.0
    %3635 = vmatprep.subr.mxu0 0.0
    %3636 = vmatpush1.msra.mxu0 0.0
    %3637 = vmatprep.subr.mxu0 0.0
    %3638 = vmatpush1.msra.mxu0 0.0
    %3639 = vmatprep.subr.mxu0 0.0
    %3640 = vmatpush1.msra.mxu0 0.0
    %3641 = vmatprep.subr.mxu0 0.0
    %3642 = vmatpush1.msra.mxu0 0.0
    %3643 = vmatprep.subr.mxu0 0.0
    %3644 = vmatpush1.msra.mxu0 0.0
    %3645 = vmatprep.subr.mxu0 0.0
    %3646 = vmatpush1.msra.mxu0 0.0
    %3647 = vmatprep.subr.mxu0 0.0
    %3648 = vmatpush1.msra.mxu0 0.0
    %3649 = vmatprep.subr.mxu0 0.0
    %3650 = vmatpush1.msra.mxu0 0.0
    %3651 = vmatprep.subr.mxu0 0.0
    %3652 = vmatpush1.msra.mxu0 0.0
    %3653 = vmatprep.subr.mxu0 0.0
    %3654 = vmatpush1.msra.mxu0 0.0
    %3655 = vmatprep.mubr.f32.mxu0 0.0
    %3656 = vmatmul.mubr.f32.gmra.mrb[0].mxu0 %v3587
    %v3657 = vpop.f32.mrb[0].mxu0
    %v3658 = vadd.f32 0.0, %v3657
    %v3659 = vpop.f32.mrb[0].mxu0
    %3660 = vdwg.mxu0
    %v3661 = vrot.slane %v3094, 3
    %3662 = vrot.lane.b32.xlu0 %v2701, 40
    %v3663 = vpop.permute.xlu0 %3662
    %v3664 = vsel %vm1196, %v3661, 0
    %v3666 = vsel %vm445, %v3663, 0
    %3668 = vmatprep.subr.mxu0 0.0
    %3669 = vmatpush1.msra.mxu0 %v3666
    %3670 = vmatprep.subr.mxu0 0.0
    %3671 = vmatpush1.msra.mxu0 0.0
    %3672 = vmatprep.subr.mxu0 0.0
    %3673 = vmatpush1.msra.mxu0 0.0
    %3674 = vmatprep.subr.mxu0 0.0
    %3675 = vmatpush1.msra.mxu0 0.0
    %3676 = vmatprep.subr.mxu0 0.0
    %3677 = vmatpush1.msra.mxu0 0.0
    %3678 = vmatprep.subr.mxu0 0.0
    %3679 = vmatpush1.msra.mxu0 0.0
    %3680 = vmatprep.subr.mxu0 0.0
    %3681 = vmatpush1.msra.mxu0 0.0
    %3682 = vmatprep.subr.mxu0 0.0
    %3683 = vmatpush1.msra.mxu0 0.0
    %3684 = vmatprep.subr.mxu0 0.0
    %3685 = vmatpush1.msra.mxu0 0.0
    %3686 = vmatprep.subr.mxu0 0.0
    %3687 = vmatpush1.msra.mxu0 0.0
    %3688 = vmatprep.subr.mxu0 0.0
    %3689 = vmatpush1.msra.mxu0 0.0
    %3690 = vmatprep.subr.mxu0 0.0
    %3691 = vmatpush1.msra.mxu0 0.0
    %3692 = vmatprep.subr.mxu0 0.0
    %3693 = vmatpush1.msra.mxu0 0.0
    %3694 = vmatprep.subr.mxu0 0.0
    %3695 = vmatpush1.msra.mxu0 0.0
    %3696 = vmatprep.subr.mxu0 0.0
    %3697 = vmatpush1.msra.mxu0 0.0
    %3698 = vmatprep.subr.mxu0 0.0
    %3699 = vmatpush1.msra.mxu0 0.0
    %3700 = vmatprep.subr.mxu0 0.0
    %3701 = vmatpush1.msra.mxu0 0.0
    %3702 = vmatprep.subr.mxu0 0.0
    %3703 = vmatpush1.msra.mxu0 0.0
    %3704 = vmatprep.subr.mxu0 0.0
    %3705 = vmatpush1.msra.mxu0 0.0
    %3706 = vmatprep.subr.mxu0 0.0
    %3707 = vmatpush1.msra.mxu0 0.0
    %3708 = vmatprep.subr.mxu0 0.0
    %3709 = vmatpush1.msra.mxu0 0.0
    %3710 = vmatprep.subr.mxu0 0.0
    %3711 = vmatpush1.msra.mxu0 0.0
    %3712 = vmatprep.subr.mxu0 0.0
    %3713 = vmatpush1.msra.mxu0 0.0
    %3714 = vmatprep.subr.mxu0 0.0
    %3715 = vmatpush1.msra.mxu0 0.0
    %3716 = vmatprep.subr.mxu0 0.0
    %3717 = vmatpush1.msra.mxu0 0.0
    %3718 = vmatprep.subr.mxu0 0.0
    %3719 = vmatpush1.msra.mxu0 0.0
    %3720 = vmatprep.subr.mxu0 0.0
    %3721 = vmatpush1.msra.mxu0 0.0
    %3722 = vmatprep.subr.mxu0 0.0
    %3723 = vmatpush1.msra.mxu0 0.0
    %3724 = vmatprep.subr.mxu0 0.0
    %3725 = vmatpush1.msra.mxu0 0.0
    %3726 = vmatprep.subr.mxu0 0.0
    %3727 = vmatpush1.msra.mxu0 0.0
    %3728 = vmatprep.subr.mxu0 0.0
    %3729 = vmatpush1.msra.mxu0 0.0
    %3730 = vmatprep.subr.mxu0 0.0
    %3731 = vmatpush1.msra.mxu0 0.0
    %3732 = vmatprep.mubr.f32.mxu0 0.0
    %3733 = vmatmul.mubr.f32.gmra.mrb[0].mxu0 %v3664
    %v3734 = vpop.f32.mrb[0].mxu0
    %v3735 = vadd.f32 0.0, %v3734
    %v3736 = vpop.f32.mrb[0].mxu0
    %3737 = vdwg.mxu0
    %3739 = vrot.lane.b32.xlu0 %v3578, 8
    %v3740 = vpop.permute.xlu0 %3739
    %3743 = vrot.lane.b32.xlu0 %v3658, 16
    %v3744 = vpop.permute.xlu0 %3743
    %3747 = vrot.lane.b32.xlu0 %v3735, 24
    %v3748 = vpop.permute.xlu0 %3747
    %v3750 = vsel %vm542, %v3501, %v3740
    %v3751 = vsel %vm1579, %v3750, %v3744
    %v3752 = vsel %vm1581, %v3751, %v3748
    %v3754 = vrot.slane %v3752, 3
    %v3756 = vsel %vm445, %v3423, %v3754
    %s3757 = scalar_lea.vmem %s10, 32
    %v3758 = vld [vmem:[%s3757] sm:$0xff]
    %v3759 = vld [vmem:[%s3757 + $0x8] sm:$0xff]
    %v3760 = vld [vmem:[%s3757 + $0x10] sm:$0xff]
    %v3761 = vld [vmem:[%s3757 + $0x18] sm:$0xff]
    %s3762 = scalar_lea.vmem %s11, 1
    %v3763 = vld [vmem:[%s3762] sm:$0x1]
    %v3765 = vlaneseq
    %v3766 = vshrl.u32 %v3765, 7
    %v3767 = vsub.s32 0, %v3766
    %v3768 = vrot.slane %v3763, %v3767
    %v3771 = vsel %vm458, %v3756, 0
    %v3773 = vsel %vm458, %v3754, 0
    %3775 = vmatprep.subr.mxu0 0.0
    %3776 = vmatpush1.msra.mxu0 %v3758
    %3777 = vmatprep.subr.mxu0 0.0
    %3778 = vmatpush1.msra.mxu0 %v3759
    %3779 = vmatprep.subr.mxu0 0.0
    %3780 = vmatpush1.msra.mxu0 %v3760
    %3781 = vmatprep.subr.mxu0 0.0
    %3782 = vmatpush1.msra.mxu0 %v3761
    %3783 = vmatprep.subr.mxu0 0.0
    %3784 = vmatpush1.msra.mxu0 0.0
    %3785 = vmatprep.subr.mxu0 0.0
    %3786 = vmatpush1.msra.mxu0 0.0
    %3787 = vmatprep.subr.mxu0 0.0
    %3788 = vmatpush1.msra.mxu0 0.0
    %3789 = vmatprep.subr.mxu0 0.0
    %3790 = vmatpush1.msra.mxu0 0.0
    %3791 = vmatprep.subr.mxu0 0.0
    %3792 = vmatpush1.msra.mxu0 0.0
    %3793 = vmatprep.subr.mxu0 0.0
    %3794 = vmatpush1.msra.mxu0 0.0
    %3795 = vmatprep.subr.mxu0 0.0
    %3796 = vmatpush1.msra.mxu0 0.0
    %3797 = vmatprep.subr.mxu0 0.0
    %3798 = vmatpush1.msra.mxu0 0.0
    %3799 = vmatprep.subr.mxu0 0.0
    %3800 = vmatpush1.msra.mxu0 0.0
    %3801 = vmatprep.subr.mxu0 0.0
    %3802 = vmatpush1.msra.mxu0 0.0
    %3803 = vmatprep.subr.mxu0 0.0
    %3804 = vmatpush1.msra.mxu0 0.0
    %3805 = vmatprep.subr.mxu0 0.0
    %3806 = vmatpush1.msra.mxu0 0.0
    %3807 = vmatprep.subr.mxu0 0.0
    %3808 = vmatpush1.msra.mxu0 0.0
    %3809 = vmatprep.subr.mxu0 0.0
    %3810 = vmatpush1.msra.mxu0 0.0
    %3811 = vmatprep.subr.mxu0 0.0
    %3812 = vmatpush1.msra.mxu0 0.0
    %3813 = vmatprep.subr.mxu0 0.0
    %3814 = vmatpush1.msra.mxu0 0.0
    %3815 = vmatprep.subr.mxu0 0.0
    %3816 = vmatpush1.msra.mxu0 0.0
    %3817 = vmatprep.subr.mxu0 0.0
    %3818 = vmatpush1.msra.mxu0 0.0
    %3819 = vmatprep.subr.mxu0 0.0
    %3820 = vmatpush1.msra.mxu0 0.0
    %3821 = vmatprep.subr.mxu0 0.0
    %3822 = vmatpush1.msra.mxu0 0.0
    %3823 = vmatprep.subr.mxu0 0.0
    %3824 = vmatpush1.msra.mxu0 0.0
    %3825 = vmatprep.subr.mxu0 0.0
    %3826 = vmatpush1.msra.mxu0 0.0
    %3827 = vmatprep.subr.mxu0 0.0
    %3828 = vmatpush1.msra.mxu0 0.0
    %3829 = vmatprep.subr.mxu0 0.0
    %3830 = vmatpush1.msra.mxu0 0.0
    %3831 = vmatprep.subr.mxu0 0.0
    %3832 = vmatpush1.msra.mxu0 0.0
    %3833 = vmatprep.subr.mxu0 0.0
    %3834 = vmatpush1.msra.mxu0 0.0
    %3835 = vmatprep.subr.mxu0 0.0
    %3836 = vmatpush1.msra.mxu0 0.0
    %3837 = vmatprep.subr.mxu0 0.0
    %3838 = vmatpush1.msra.mxu0 0.0
    %3839 = vmatprep.mubr.f32.mxu0 0.0
    %3840 = vmatmul.mubr.f32.gmra.mrb[0].mxu0 %v3771
    %v3841 = vpop.f32.mrb[0].mxu0
    %v3842 = vadd.f32 %v3768, %v3841
    %v3843 = vpop.f32.mrb[0].mxu0
    %3844 = vmatprep.mubr.f32.mxu0 0.0
    %3845 = vmatmul.mubr.f32.gmra.mrb[0].mxu0 %v3773
    %v3846 = vpop.f32.mrb[0].mxu0
    %v3847 = vadd.f32 %v3768, %v3846
    %v3848 = vpop.f32.mrb[0].mxu0
    %3849 = vdwg.mxu0
    %v3850 = vadd.f32 %v2291, %v3842
    %v3851 = vadd.f32 %v2292, %v3847
    %s3852 = scalar_lea.vmem %s12, 1
    %v3853 = vld [vmem:[%s3852] sm:$0x1]
    %s3854 = scalar_lea.vmem %s13, 1
    %v3855 = vld [vmem:[%s3854] sm:$0x1]
    %v3856 = vsel %vm458, %v3850, 0.0
    %3857 = vadd.xlane.f32.xlu0 %v3856
    %v3858 = vpop.xlane.xlu0 %3857
    %v3859 = vsel %vm2014, %v3851, 0.0
    %3860 = vadd.xlane.f32.xlu0 %v3859
    %v3861 = vpop.xlane.xlu0 %3860
    %v3862 = vmul.f32 %v3858, %v2018
    %v3863 = vmul.f32 %v3861, %v2018
    %v3864 = vsub.f32 %v3850, %v3862
    %v3865 = vsub.f32 %v3851, %v3863
    %v3866 = vmul.f32 %v3864, %v3864
    %v3867 = vmul.f32 %v3865, %v3865
    %v3868 = vsel %vm458, %v3866, 0.0
    %3869 = vadd.xlane.f32.xlu0 %v3868
    %v3870 = vpop.xlane.xlu0 %3869
    %v3871 = vsel %vm2014, %v3867, 0.0
    %3872 = vadd.xlane.f32.xlu0 %v3871
    %v3873 = vpop.xlane.xlu0 %3872
    %v3874 = vmul.f32 %v3870, %v2018
    %v3875 = vmul.f32 %v3873, %v2018
    %v3876 = vadd.f32 %v3874, 1e-05
    %v3877 = vadd.f32 %v3875, 1e-05
    %v3878 = vrsqrt.pop %v3876
    %v3879 = vrsqrt.pop %v3877
    %v3880 = vmul.f32 %v3864, %v3878
    %v3881 = vmul.f32 %v3865, %v3879
    %v3883 = vlaneseq
    %v3884 = vshrl.u32 %v3883, 7
    %v3885 = vsub.s32 0, %v3884
    %v3886 = vrot.slane %v3853, %v3885
    %v3888 = vmul.f32 %v3880, %v3886
    %v3889 = vmul.f32 %v3881, %v3886
    %v3891 = vlaneseq
    %v3892 = vshrl.u32 %v3891, 7
    %v3893 = vsub.s32 0, %v3892
    %v3894 = vrot.slane %v3855, %v3893
    %v3896 = vadd.f32 %v3888, %v3894
    %v3897 = vadd.f32 %v3889, %v3894
    %s3898 = scalar_lea.vmem %s14, 32
    %v3899 = vld [vmem:[%s3898] sm:$0xff]
    %v3900 = vld [vmem:[%s3898 + $0x8] sm:$0xff]
    %v3901 = vld [vmem:[%s3898 + $0x10] sm:$0xff]
    %v3902 = vld [vmem:[%s3898 + $0x18] sm:$0xff]
    %s3903 = scalar_lea.vmem %s15, 1
    %v3904 = vld [vmem:[%s3903] sm:$0x1]
    %v3906 = vlaneseq
    %v3907 = vshrl.u32 %v3906, 7
    %v3908 = vsub.s32 0, %v3907
    %v3909 = vrot.slane %v3904, %v3908
    %v3912 = vsel %vm458, %v3896, 0
    %v3915 = vsel %vm458, %v3897, 0
    %3917 = vmatprep.subr.mxu0 0.0
    %3918 = vmatpush1.msra.mxu0 %v3899
    %3919 = vmatprep.subr.mxu0 0.0
    %3920 = vmatpush1.msra.mxu0 %v3900
    %3921 = vmatprep.subr.mxu0 0.0
    %3922 = vmatpush1.msra.mxu0 %v3901
    %3923 = vmatprep.subr.mxu0 0.0
    %3924 = vmatpush1.msra.mxu0 %v3902
    %3925 = vmatprep.subr.mxu0 0.0
    %3926 = vmatpush1.msra.mxu0 0.0
    %3927 = vmatprep.subr.mxu0 0.0
    %3928 = vmatpush1.msra.mxu0 0.0
    %3929 = vmatprep.subr.mxu0 0.0
    %3930 = vmatpush1.msra.mxu0 0.0
    %3931 = vmatprep.subr.mxu0 0.0
    %3932 = vmatpush1.msra.mxu0 0.0
    %3933 = vmatprep.subr.mxu0 0.0
    %3934 = vmatpush1.msra.mxu0 0.0
    %3935 = vmatprep.subr.mxu0 0.0
    %3936 = vmatpush1.msra.mxu0 0.0
    %3937 = vmatprep.subr.mxu0 0.0
    %3938 = vmatpush1.msra.mxu0 0.0
    %3939 = vmatprep.subr.mxu0 0.0
    %3940 = vmatpush1.msra.mxu0 0.0
    %3941 = vmatprep.subr.mxu0 0.0
    %3942 = vmatpush1.msra.mxu0 0.0
    %3943 = vmatprep.subr.mxu0 0.0
    %3944 = vmatpush1.msra.mxu0 0.0
    %3945 = vmatprep.subr.mxu0 0.0
    %3946 = vmatpush1.msra.mxu0 0.0
    %3947 = vmatprep.subr.mxu0 0.0
    %3948 = vmatpush1.msra.mxu0 0.0
    %3949 = vmatprep.subr.mxu0 0.0
    %3950 = vmatpush1.msra.mxu0 0.0
    %3951 = vmatprep.subr.mxu0 0.0
    %3952 = vmatpush1.msra.mxu0 0.0
    %3953 = vmatprep.subr.mxu0 0.0
    %3954 = vmatpush1.msra.mxu0 0.0
    %3955 = vmatprep.subr.mxu0 0.0
    %3956 = vmatpush1.msra.mxu0 0.0
    %3957 = vmatprep.subr.mxu0 0.0
    %3958 = vmatpush1.msra.mxu0 0.0
    %3959 = vmatprep.subr.mxu0 0.0
    %3960 = vmatpush1.msra.mxu0 0.0
    %3961 = vmatprep.subr.mxu0 0.0
    %3962 = vmatpush1.msra.mxu0 0.0
    %3963 = vmatprep.subr.mxu0 0.0
    %3964 = vmatpush1.msra.mxu0 0.0
    %3965 = vmatprep.subr.mxu0 0.0
    %3966 = vmatpush1.msra.mxu0 0.0
    %3967 = vmatprep.subr.mxu0 0.0
    %3968 = vmatpush1.msra.mxu0 0.0
    %3969 = vmatprep.subr.mxu0 0.0
    %3970 = vmatpush1.msra.mxu0 0.0
    %3971 = vmatprep.subr.mxu0 0.0
    %3972 = vmatpush1.msra.mxu0 0.0
    %3973 = vmatprep.subr.mxu0 0.0
    %3974 = vmatpush1.msra.mxu0 0.0
    %3975 = vmatprep.subr.mxu0 0.0
    %3976 = vmatpush1.msra.mxu0 0.0
    %3977 = vmatprep.subr.mxu0 0.0
    %3978 = vmatpush1.msra.mxu0 0.0
    %3979 = vmatprep.subr.mxu0 0.0
    %3980 = vmatpush1.msra.mxu0 0.0
    %3981 = vmatprep.mubr.f32.mxu0 0.0
    %3982 = vmatmul.mubr.f32.gmra.mrb[0].mxu0 %v3912
    %v3983 = vpop.f32.mrb[0].mxu0
    %v3984 = vadd.f32 %v3909, %v3983
    %v3985 = vpop.f32.mrb[0].mxu0
    %3986 = vmatprep.mubr.f32.mxu0 0.0
    %3987 = vmatmul.mubr.f32.gmra.mrb[0].mxu0 %v3915
    %v3988 = vpop.f32.mrb[0].mxu0
    %v3989 = vadd.f32 %v3909, %v3988
    %v3990 = vpop.f32.mrb[0].mxu0
    %3991 = vdwg.mxu0
    %v3992 = vmax.f32 %v3984, 0.0
    %v3993 = vmax.f32 %v3989, 0.0
    %s3994 = scalar_lea.vmem %s16, 128
    %v3995 = vld [vmem:[%s3994] sm:$0xff]
    %v3996 = vld [vmem:[%s3994 + $0x8] sm:$0xff]
    %v3997 = vld [vmem:[%s3994 + $0x10] sm:$0xff]
    %v3998 = vld [vmem:[%s3994 + $0x18] sm:$0xff]
    %v3999 = vld [vmem:[%s3994 + $0x20] sm:$0xff]
    %v4000 = vld [vmem:[%s3994 + $0x28] sm:$0xff]
    %v4001 = vld [vmem:[%s3994 + $0x30] sm:$0xff]
    %v4002 = vld [vmem:[%s3994 + $0x38] sm:$0xff]
    %v4003 = vld [vmem:[%s3994 + $0x40] sm:$0xff]
    %v4004 = vld [vmem:[%s3994 + $0x48] sm:$0xff]
    %v4005 = vld [vmem:[%s3994 + $0x50] sm:$0xff]
    %v4006 = vld [vmem:[%s3994 + $0x58] sm:$0xff]
    %v4007 = vld [vmem:[%s3994 + $0x60] sm:$0xff]
    %v4008 = vld [vmem:[%s3994 + $0x68] sm:$0xff]
    %v4009 = vld [vmem:[%s3994 + $0x70] sm:$0xff]
    %v4010 = vld [vmem:[%s3994 + $0x78] sm:$0xff]
    %s4011 = scalar_lea.vmem %s17, 1
    %v4012 = vld [vmem:[%s4011] sm:$0x1]
    %v4014 = vlaneseq
    %v4015 = vshrl.u32 %v4014, 7
    %v4016 = vsub.s32 0, %v4015
    %v4017 = vrot.slane %v4012, %v4016
    %4019 = vmatprep.subr.mxu0 0.0
    %4020 = vmatpush1.msra.mxu0 %v3995
    %4021 = vmatprep.subr.mxu0 0.0
    %4022 = vmatpush1.msra.mxu0 %v3996
    %4023 = vmatprep.subr.mxu0 0.0
    %4024 = vmatpush1.msra.mxu0 %v3997
    %4025 = vmatprep.subr.mxu0 0.0
    %4026 = vmatpush1.msra.mxu0 %v3998
    %4027 = vmatprep.subr.mxu0 0.0
    %4028 = vmatpush1.msra.mxu0 %v3999
    %4029 = vmatprep.subr.mxu0 0.0
    %4030 = vmatpush1.msra.mxu0 %v4000
    %4031 = vmatprep.subr.mxu0 0.0
    %4032 = vmatpush1.msra.mxu0 %v4001
    %4033 = vmatprep.subr.mxu0 0.0
    %4034 = vmatpush1.msra.mxu0 %v4002
    %4035 = vmatprep.subr.mxu0 0.0
    %4036 = vmatpush1.msra.mxu0 %v4003
    %4037 = vmatprep.subr.mxu0 0.0
    %4038 = vmatpush1.msra.mxu0 %v4004
    %4039 = vmatprep.subr.mxu0 0.0
    %4040 = vmatpush1.msra.mxu0 %v4005
    %4041 = vmatprep.subr.mxu0 0.0
    %4042 = vmatpush1.msra.mxu0 %v4006
    %4043 = vmatprep.subr.mxu0 0.0
    %4044 = vmatpush1.msra.mxu0 %v4007
    %4045 = vmatprep.subr.mxu0 0.0
    %4046 = vmatpush1.msra.mxu0 %v4008
    %4047 = vmatprep.subr.mxu0 0.0
    %4048 = vmatpush1.msra.mxu0 %v4009
    %4049 = vmatprep.subr.mxu0 0.0
    %4050 = vmatpush1.msra.mxu0 %v4010
    %4051 = vmatprep.subr.mxu0 0.0
    %4052 = vmatpush1.msra.mxu0 0.0
    %4053 = vmatprep.subr.mxu0 0.0
    %4054 = vmatpush1.msra.mxu0 0.0
    %4055 = vmatprep.subr.mxu0 0.0
    %4056 = vmatpush1.msra.mxu0 0.0
    %4057 = vmatprep.subr.mxu0 0.0
    %4058 = vmatpush1.msra.mxu0 0.0
    %4059 = vmatprep.subr.mxu0 0.0
    %4060 = vmatpush1.msra.mxu0 0.0
    %4061 = vmatprep.subr.mxu0 0.0
    %4062 = vmatpush1.msra.mxu0 0.0
    %4063 = vmatprep.subr.mxu0 0.0
    %4064 = vmatpush1.msra.mxu0 0.0
    %4065 = vmatprep.subr.mxu0 0.0
    %4066 = vmatpush1.msra.mxu0 0.0
    %4067 = vmatprep.subr.mxu0 0.0
    %4068 = vmatpush1.msra.mxu0 0.0
    %4069 = vmatprep.subr.mxu0 0.0
    %4070 = vmatpush1.msra.mxu0 0.0
    %4071 = vmatprep.subr.mxu0 0.0
    %4072 = vmatpush1.msra.mxu0 0.0
    %4073 = vmatprep.subr.mxu0 0.0
    %4074 = vmatpush1.msra.mxu0 0.0
    %4075 = vmatprep.subr.mxu0 0.0
    %4076 = vmatpush1.msra.mxu0 0.0
    %4077 = vmatprep.subr.mxu0 0.0
    %4078 = vmatpush1.msra.mxu0 0.0
    %4079 = vmatprep.subr.mxu0 0.0
    %4080 = vmatpush1.msra.mxu0 0.0
    %4081 = vmatprep.subr.mxu0 0.0
    %4082 = vmatpush1.msra.mxu0 0.0
    %4083 = vmatprep.mubr.f32.mxu0 0.0
    %4084 = vmatmul.mubr.f32.gmra.mrb[0].mxu0 %v3992
    %v4085 = vpop.f32.mrb[0].mxu0
    %v4086 = vadd.f32 %v4017, %v4085
    %v4087 = vpop.f32.mrb[0].mxu0
    %4088 = vmatprep.mubr.f32.mxu0 0.0
    %4089 = vmatmul.mubr.f32.gmra.mrb[0].mxu0 %v3993
    %v4090 = vpop.f32.mrb[0].mxu0
    %v4091 = vadd.f32 %v4017, %v4090
    %v4092 = vpop.f32.mrb[0].mxu0
    %4093 = vdwg.mxu0
    %v4094 = vadd.f32 %v3896, %v4086
    %v4095 = vadd.f32 %v3897, %v4091
    %s4096 = scalar_lea.vmem %s18, 1
    %v4097 = vld [vmem:[%s4096] sm:$0x1]
    %s4098 = scalar_lea.vmem %s19, 1
    %v4099 = vld [vmem:[%s4098] sm:$0x1]
    %v4100 = vsel %vm458, %v4094, 0.0
    %4101 = vadd.xlane.f32.xlu0 %v4100
    %v4102 = vpop.xlane.xlu0 %4101
    %v4103 = vsel %vm2014, %v4095, 0.0
    %4104 = vadd.xlane.f32.xlu0 %v4103
    %v4105 = vpop.xlane.xlu0 %4104
    %v4106 = vmul.f32 %v4102, %v2018
    %v4107 = vmul.f32 %v4105, %v2018
    %v4108 = vsub.f32 %v4094, %v4106
    %v4109 = vsub.f32 %v4095, %v4107
    %v4110 = vmul.f32 %v4108, %v4108
    %v4111 = vmul.f32 %v4109, %v4109
    %v4112 = vsel %vm458, %v4110, 0.0
    %4113 = vadd.xlane.f32.xlu0 %v4112
    %v4114 = vpop.xlane.xlu0 %4113
    %v4115 = vsel %vm2014, %v4111, 0.0
    %4116 = vadd.xlane.f32.xlu0 %v4115
    %v4117 = vpop.xlane.xlu0 %4116
    %v4118 = vmul.f32 %v4114, %v2018
    %v4119 = vmul.f32 %v4117, %v2018
    %v4120 = vadd.f32 %v4118, 1e-05
    %v4121 = vadd.f32 %v4119, 1e-05
    %v4122 = vrsqrt.pop %v4120
    %v4123 = vrsqrt.pop %v4121
    %v4124 = vmul.f32 %v4108, %v4122
    %v4125 = vmul.f32 %v4109, %v4123
    %v4127 = vlaneseq
    %v4128 = vshrl.u32 %v4127, 7
    %v4129 = vsub.s32 0, %v4128
    %v4130 = vrot.slane %v4097, %v4129
    %v4132 = vmul.f32 %v4124, %v4130
    %v4133 = vmul.f32 %v4125, %v4130
    %v4135 = vlaneseq
    %v4136 = vshrl.u32 %v4135, 7
    %v4137 = vsub.s32 0, %v4136
    %v4138 = vrot.slane %v4099, %v4137
    %v4140 = vadd.f32 %v4132, %v4138
    %v4141 = vadd.f32 %v4133, %v4138
    %vm4142 = vcmask 258048
    %v4143 = vsel %vm4142, %v4140, 0.0
    %v4144 = vrot.slane %v4143, 4
    %v4145 = vadd.f32 %v4143, %v4144
    %v4146 = vrot.slane %v4145, 2
    %v4147 = vadd.f32 %v4145, %v4146
    %v4148 = vrot.slane %v4147, 1
    %v4149 = vadd.f32 %v4147, %v4148
    %v4150 = vrcp.pop 5.0
    %v4151 = vmul.f32 %v4149, %v4150
    %v4154 = vrot.slane %v4140, 5
    %v4155 = vrot.slane %v4141, 5
    %v4156 = vsel %vm273, %v4154, %v4155
    %v4158 = vsel %vm4142, %v4156, 0.0
    %v4159 = vrot.slane %v4158, 4
    %v4160 = vadd.f32 %v4158, %v4159
    %v4161 = vrot.slane %v4160, 2
    %v4162 = vadd.f32 %v4160, %v4161
    %v4163 = vrot.slane %v4162, 1
    %v4164 = vadd.f32 %v4162, %v4163
    %v4165 = vmul.f32 %v4164, %v4150
    %v4166 = vsel %vm1192, %v4151, %v4165
    %v4167 = vld [vmem:[%s20] sm:$0xff]
    %v4168 = vld [vmem:[%s20 + $0x8] sm:$0xff]
    %v4169 = vld [vmem:[%s20 + $0x10] sm:$0xff]
    %v4170 = vld [vmem:[%s20 + $0x18] sm:$0xff]
    %v4171 = vld [vmem:[%s21] sm:$0x1]
    %v4173 = vlaneseq
    %v4174 = vshrl.u32 %v4173, 7
    %v4175 = vsub.s32 0, %v4174
    %v4176 = vrot.slane %v4171, %v4175
    %v4179 = vsel %vm458, %v4166, 0
    %4181 = vmatprep.subr.mxu0 0.0
    %4182 = vmatpush1.msra.mxu0 %v4167
    %4183 = vmatprep.subr.mxu0 0.0
    %4184 = vmatpush1.msra.mxu0 %v4168
    %4185 = vmatprep.subr.mxu0 0.0
    %4186 = vmatpush1.msra.mxu0 %v4169
    %4187 = vmatprep.subr.mxu0 0.0
    %4188 = vmatpush1.msra.mxu0 %v4170
    %4189 = vmatprep.subr.mxu0 0.0
    %4190 = vmatpush1.msra.mxu0 0.0
    %4191 = vmatprep.subr.mxu0 0.0
    %4192 = vmatpush1.msra.mxu0 0.0
    %4193 = vmatprep.subr.mxu0 0.0
    %4194 = vmatpush1.msra.mxu0 0.0
    %4195 = vmatprep.subr.mxu0 0.0
    %4196 = vmatpush1.msra.mxu0 0.0
    %4197 = vmatprep.subr.mxu0 0.0
    %4198 = vmatpush1.msra.mxu0 0.0
    %4199 = vmatprep.subr.mxu0 0.0
    %4200 = vmatpush1.msra.mxu0 0.0
    %4201 = vmatprep.subr.mxu0 0.0
    %4202 = vmatpush1.msra.mxu0 0.0
    %4203 = vmatprep.subr.mxu0 0.0
    %4204 = vmatpush1.msra.mxu0 0.0
    %4205 = vmatprep.subr.mxu0 0.0
    %4206 = vmatpush1.msra.mxu0 0.0
    %4207 = vmatprep.subr.mxu0 0.0
    %4208 = vmatpush1.msra.mxu0 0.0
    %4209 = vmatprep.subr.mxu0 0.0
    %4210 = vmatpush1.msra.mxu0 0.0
    %4211 = vmatprep.subr.mxu0 0.0
    %4212 = vmatpush1.msra.mxu0 0.0
    %4213 = vmatprep.subr.mxu0 0.0
    %4214 = vmatpush1.msra.mxu0 0.0
    %4215 = vmatprep.subr.mxu0 0.0
    %4216 = vmatpush1.msra.mxu0 0.0
    %4217 = vmatprep.subr.mxu0 0.0
    %4218 = vmatpush1.msra.mxu0 0.0
    %4219 = vmatprep.subr.mxu0 0.0
    %4220 = vmatpush1.msra.mxu0 0.0
    %4221 = vmatprep.subr.mxu0 0.0
    %4222 = vmatpush1.msra.mxu0 0.0
    %4223 = vmatprep.subr.mxu0 0.0
    %4224 = vmatpush1.msra.mxu0 0.0
    %4225 = vmatprep.subr.mxu0 0.0
    %4226 = vmatpush1.msra.mxu0 0.0
    %4227 = vmatprep.subr.mxu0 0.0
    %4228 = vmatpush1.msra.mxu0 0.0
    %4229 = vmatprep.subr.mxu0 0.0
    %4230 = vmatpush1.msra.mxu0 0.0
    %4231 = vmatprep.subr.mxu0 0.0
    %4232 = vmatpush1.msra.mxu0 0.0
    %4233 = vmatprep.subr.mxu0 0.0
    %4234 = vmatpush1.msra.mxu0 0.0
    %4235 = vmatprep.subr.mxu0 0.0
    %4236 = vmatpush1.msra.mxu0 0.0
    %4237 = vmatprep.subr.mxu0 0.0
    %4238 = vmatpush1.msra.mxu0 0.0
    %4239 = vmatprep.subr.mxu0 0.0
    %4240 = vmatpush1.msra.mxu0 0.0
    %4241 = vmatprep.subr.mxu0 0.0
    %4242 = vmatpush1.msra.mxu0 0.0
    %4243 = vmatprep.subr.mxu0 0.0
    %4244 = vmatpush1.msra.mxu0 0.0
    %4245 = vmatprep.mubr.f32.mxu0 0.0
    %4246 = vmatmul.mubr.f32.gmra.mrb[0].mxu0 %v4179
    %v4247 = vpop.f32.mrb[0].mxu0
    %v4248 = vadd.f32 %v4176, %v4247
    %v4249 = vpop.f32.mrb[0].mxu0
    %4250 = vdwg.mxu0
    %vm4251 = vcmask 9216
    %4252 = vst.msk [vmem:[#allocation4] sm:$0x3] %vm4251, %v4248
    // Predicated region
    $region86: #{tpu_custom_call.1} parent=1 // pred_check
      _
    $region87: #{tpu_custom_call.1} parent=1 // pred_check_branch
      %4254 = sbr.rel (0) target = $region89
    $region88: #{tpu_custom_call.1} parent=1 // pred_region
      %s4256 = ssub.s32 32, 32
      %4257 = vsyncadd [#allocation5], %s4256
      %s4259 = sshll.u32 [#allocation4], 4
      %s4260 = int_to_ptr.vmem [resolvable:$true] %s4259
      %4262 = dma.vmem_to_hbm [thread:$0]  %s4260, 32, %s22, [#allocation5]
    $region89: #{tpu_custom_call.1} parent=1 // pred_fallthru
      _
    // Predicated region
    $region90: #{tpu_custom_call.1} parent=1 // pred_check
      _
    $region91: #{tpu_custom_call.1} parent=1 // pred_check_branch
      %4264 = sbr.rel (0) target = $region93
    $region92: #{tpu_custom_call.1} parent=1 // pred_region
      %4265 = dma.done [#allocation5], 32
    $region93: #{tpu_custom_call.1} parent=1 // pred_fallthru
      _
    %4266 = vsyncpa [#allocation5], 1

</llo_original>
